<compile_context>
chip_gen: v6e
topology: v6e:2x2x1
jax: 0.10.0
libtpu: 0.0.40
codegen_flags: <defaults>
</compile_context>

<pallas_src>
import functools

import jax
import jax.numpy as jnp
import numpy as np
from jax.experimental import pallas as pl
from jax.experimental.pallas import tpu as pltpu

# (name, num_classes) taken from category_encodings sizes
HEAD_SPECS = [
    ("length", 3),          # 기장
    ("color", 20),          # 색상
    ("sleeve_length", 5),   # 소매기장
    ("material", 25),       # 소재
    ("print", 14),          # 프린트
    ("neckline", 12),       # 넥라인
    ("fit", 6),             # 핏
]
NUM_HEADS = len(HEAD_SPECS)

C1 = 512          # Head(512) input channels (backbone feature channels)
C_HID = 1280      # Classify hidden width c_
C2_PAD = 128      # classes padded to a full lane (max c2 = 25); padding lanes
                  # are masked via -1e30 entries in the linear bias.
BN_EPS = 1e-3     # ultralytics Conv uses BatchNorm2d(eps=0.001)


def _classify_head_kernel(x_ref, wc_ref, bc_ref, wl_ref, bl_ref, out_ref,
                          *, batch, hw):
    """Grid = (head h,).  One fused Classify head per grid step.

    x_ref   : (B*HW, C1)          bf16 feature map (same block every step, VMEM-resident)
    wc_ref  : (1, C1, C_HID)      bf16 1x1-conv weight with BN folded in
    bc_ref  : (1, 1, C_HID)       f32 folded BN bias
    wl_ref  : (1, C_HID, C2_PAD)  bf16 linear weight (padded classes, 1/HW folded in)
    bl_ref  : (1, 1, C2_PAD)      f32 linear bias; padding lanes are -1e30
    out_ref : (1, B, C2_PAD)      f32 softmax probabilities (padding lanes ~ 0)
    """
    # 1x1 conv (+ folded BN) as a channel matmul, then SiLU.
    # bf16 x bf16 -> f32 accumulate on the MXU; SiLU stays f32 (v5e-safe).
    x = x_ref[...]                                              # (B*HW, C1) bf16
    z = jnp.dot(x, wc_ref[0], preferred_element_type=jnp.float32) + bc_ref[0]
    z = z * jax.nn.sigmoid(z)                                   # SiLU, f32

    # AdaptiveAvgPool2d(1): sum over spatial positions; the 1/HW mean scale is
    # folded into the linear weight (init_params).
    pooled = z.reshape(batch, hw, C_HID).sum(axis=1)            # (B, C_HID) f32

    # Linear head + masked softmax (padding lanes: bias -1e30 -> exp underflows to 0).
    logits = jnp.dot(pooled.astype(jnp.bfloat16), wl_ref[0],
                     preferred_element_type=jnp.float32) + bl_ref[0]   # (B, C2_PAD)
    m = jnp.max(logits, axis=-1, keepdims=True)
    e = jnp.exp(logits - m)
    inv = pl.reciprocal(jnp.sum(e, axis=-1, keepdims=True), approx=True)
    out_ref[0] = e * inv


def run_classify_heads(x_flat, batch, hw, wc, bc, wl, bl):
    """x_flat: (B*HW, C1) bf16.  Returns (NUM_HEADS, B, C2_PAD) f32 softmax."""
    bhw = batch * hw
    kernel = functools.partial(_classify_head_kernel, batch=batch, hw=hw)

    flops = 2 * bhw * C1 * C_HID * NUM_HEADS + 2 * batch * C_HID * C2_PAD * NUM_HEADS
    transcendentals = bhw * C_HID * NUM_HEADS + batch * C2_PAD * NUM_HEADS
    bytes_accessed = (
        sum(int(np.prod(a.shape)) * a.dtype.itemsize for a in (x_flat, wc, bc, wl, bl))
        + NUM_HEADS * batch * C2_PAD * 4
    )

    return pl.pallas_call(
        kernel,
        out_shape=jax.ShapeDtypeStruct((NUM_HEADS, batch, C2_PAD), jnp.float32),
        grid_spec=pltpu.PrefetchScalarGridSpec(
            num_scalar_prefetch=0,
            grid=(NUM_HEADS,),
            in_specs=[
                # x: shared block, constant index_map -> stays VMEM-resident.
                pl.BlockSpec((bhw, C1), lambda h: (0, 0)),
                pl.BlockSpec((1, C1, C_HID), lambda h: (h, 0, 0)),      # conv/BN weight
                pl.BlockSpec((1, 1, C_HID), lambda h: (h, 0, 0)),       # conv/BN bias
                pl.BlockSpec((1, C_HID, C2_PAD), lambda h: (h, 0, 0)),  # linear weight
                pl.BlockSpec((1, 1, C2_PAD), lambda h: (h, 0, 0)),      # linear bias (masked)
            ],
            out_specs=pl.BlockSpec((1, batch, C2_PAD), lambda h: (h, 0, 0)),
        ),
        compiler_params=pltpu.CompilerParams(
            dimension_semantics=("parallel",)),
        cost_estimate=pl.CostEstimate(
            flops=flops,
            transcendentals=transcendentals,
            bytes_accessed=bytes_accessed),
    )(x_flat, wc, bc, wl, bl)


def init_params(key, hw):
    """Deterministic synthetic parameters for the 7 shared Classify heads.

    BN is folded into the conv weight/bias in f32 BEFORE the bf16 cast, and the
    AdaptiveAvgPool 1/hw scale is folded into the linear weight in f32 BEFORE
    its bf16 cast.  Weights (wc, wl) are stored in bf16; biases stay f32.
    Linear-bias padding lanes are set to -1e30 (must stay f32) so the in-kernel
    softmax masks them to ~0.
    """
    wcs, bcs, wls, bls = [], [], [], []
    keys = jax.random.split(key, NUM_HEADS * 7)
    for i, (_, c2) in enumerate(HEAD_SPECS):
        k = keys[i * 7:(i + 1) * 7]
        # Conv2d(c1, 1280, k=1, bias=False) weight (o, i, 1, 1) -> (o, i)
        w_conv = jax.random.normal(k[0], (C_HID, C1), jnp.float32) / np.sqrt(C1)
        # BatchNorm2d(1280) params + running stats, folded into the conv.
        gamma = jax.random.uniform(k[1], (C_HID,), jnp.float32, 0.5, 1.5)
        beta = jax.random.normal(k[2], (C_HID,), jnp.float32) * 0.1
        rmean = jax.random.normal(k[3], (C_HID,), jnp.float32) * 0.1
        rvar = jax.random.uniform(k[4], (C_HID,), jnp.float32, 0.5, 1.5)
        scale = gamma / jnp.sqrt(rvar + BN_EPS)
        wc = (w_conv * scale[:, None]).T.astype(jnp.bfloat16)      # (C1, C_HID) bf16
        bc = (beta - rmean * scale)[None, :]                       # (1, C_HID)  f32
        # Linear(1280, c2), padded to C2_PAD lanes, 1/hw pooling scale folded
        # in (f32), padding masked via the f32 bias.
        w_lin = jax.random.normal(k[5], (c2, C_HID), jnp.float32) / np.sqrt(C_HID)
        b_lin = jax.random.normal(k[6], (c2,), jnp.float32) * 0.01
        wl = (jnp.zeros((C_HID, C2_PAD), jnp.float32)
              .at[:, :c2].set(w_lin.T * (1.0 / hw))
              .astype(jnp.bfloat16))                               # (C_HID, C2_PAD) bf16
        bl = jnp.full((1, C2_PAD), -1e30, jnp.float32).at[:, :c2].set(b_lin)
        wcs.append(wc); bcs.append(bc); wls.append(wl); bls.append(bl)
    return (jnp.stack(wcs), jnp.stack(bcs), jnp.stack(wls), jnp.stack(bls))


def yolo_multiclass_head_forward(x_nchw, params):
    """Head(512).forward on a backbone feature map given in PyTorch NCHW."""
    B, C, H, W = x_nchw.shape
    x_flat = (jnp.transpose(x_nchw, (0, 2, 3, 1))
              .reshape(B * H * W, C).astype(jnp.bfloat16))
    out = run_classify_heads(x_flat, B, H * W, *params)        # (7, B, C2_PAD)
    per_head = {name: out[i, :, :c2] for i, (name, c2) in enumerate(HEAD_SPECS)}
    full = ["length", "color", "sleeve_length", "material", "print", "neckline", "fit"]
    bottom = ["length", "color", "material", "print", "fit"]
    return {
        "outer": {k: per_head[k] for k in full},
        "top": {k: per_head[k] for k in full},
        "bottom": {k: per_head[k] for k in bottom},
        "onepiece": {k: per_head[k] for k in full},
    }


def _reference(x_flat_bf16, batch, hw, wc, bc, wl, bl):
    """Pure-JAX reference (same bf16 weights/activations, f32 accumulation).

    Note: the 1/hw AdaptiveAvgPool scale is folded into wl, so the pool here is
    a plain spatial sum.
    """
    outs = []
    for h in range(NUM_HEADS):
        z = jnp.dot(x_flat_bf16, wc[h], preferred_element_type=jnp.float32) + bc[h]
        z = z * jax.nn.sigmoid(z)
        pooled = z.reshape(batch, hw, C_HID).sum(axis=1)
        logits = jnp.dot(pooled.astype(jnp.bfloat16), wl[h],
                         preferred_element_type=jnp.float32) + bl[h]
        outs.append(jax.nn.softmax(logits, axis=-1))
    return jnp.stack(outs)


if __name__ == "__main__":
    key = jax.random.PRNGKey(0)
    kx, kp = jax.random.split(key)

    # Backbone feature map (what the first 11 YOLO11s layers would produce):
    # batch=2, channels=512, spatial=8x8 (small stand-in for 20x20).
    B, H, W = 2, 8, 8
    x = jax.random.normal(kx, (B, C1, H, W), jnp.float32)
    params = init_params(kp, H * W)

    out = yolo_multiclass_head_forward(x, params)
    out = jax.block_until_ready(out)

    # Correctness check of the Pallas hot path against a pure-JAX reference
    # using the same bf16 weights/activation casts (f32 accumulation).
    hw = H * W
    x_flat = jnp.transpose(x, (0, 2, 3, 1)).reshape(B * hw, C1).astype(jnp.bfloat16)
    got = jax.block_until_ready(run_classify_heads(x_flat, B, hw, *params))
    ref = _reference(x_flat, B, hw, *params)
    np.testing.assert_allclose(np.asarray(got), np.asarray(ref), rtol=1e-2, atol=2e-3)

    # Each head's output rows must be (approximately) valid softmax distributions
    # (pl.reciprocal(approx=True) -> rows sum to 1 within ~1e-2).
    for name, c2 in HEAD_SPECS:
        probs = out["outer"][name]
        assert probs.shape == (B, c2)
        np.testing.assert_allclose(np.asarray(probs.sum(axis=-1)), 1.0, rtol=1e-2)

    print("KERNEL_OK")
</pallas_src>

<mosaic_0001>
module attributes {stable_mosaic.version = 11 : i64} {
  func.func @_classify_head_kernel(%arg0: i32, %arg1: memref<128x512xbf16, #tpu.memory_space<vmem>>, %arg2: memref<1x512x1280xbf16, #tpu.memory_space<vmem>>, %arg3: memref<1x1x1280xf32, #tpu.memory_space<vmem>>, %arg4: memref<1x1280x128xbf16, #tpu.memory_space<vmem>>, %arg5: memref<1x1x128xf32, #tpu.memory_space<vmem>>, %arg6: memref<1x2x128xf32, #tpu.memory_space<vmem>>) attributes {dimension_semantics = [#tpu.dimension_semantics<parallel>], iteration_bounds = array<i64: 7>, scalar_prefetch = 0 : i64, scratch_operands = 0 : i64, tpu.core_type = #tpu.core_type<tc>, window_params = [{pipeline_mode = #tpu.pipeline_mode<synchronous>, transform_indices = @transform_0, window_bounds = array<i64: 128, 512>}, {transform_indices = @transform_1, window_bounds = array<i64: 1, 512, 1280>}, {transform_indices = @transform_2, window_bounds = array<i64: 1, 1, 1280>}, {transform_indices = @transform_3, window_bounds = array<i64: 1, 1280, 128>}, {transform_indices = @transform_4, window_bounds = array<i64: 1, 1, 128>}, {transform_indices = @transform_5, window_bounds = array<i64: 1, 2, 128>}]} {
    %c0 = arith.constant 0 : index
    %c0_0 = arith.constant 0 : index
    %0 = vector.load %arg1[%c0, %c0_0] : memref<128x512xbf16, #tpu.memory_space<vmem>>, vector<128x512xbf16>
    %c0_1 = arith.constant 0 : index
    %c0_2 = arith.constant 0 : index
    %c0_3 = arith.constant 0 : index
    %1 = vector.load %arg2[%c0_1, %c0_2, %c0_3] : memref<1x512x1280xbf16, #tpu.memory_space<vmem>>, vector<1x512x1280xbf16>
    %2 = vector.shape_cast %1 : vector<1x512x1280xbf16> to vector<512x1280xbf16>
    %cst = arith.constant dense<0.000000e+00> : vector<128x1280xf32>
    %3 = tpu.matmul %0, %2, %cst {dimension_numbers = #tpu.dot_dimension_numbers<[1], [0], [0], [1], [0, 0, 1, 1], [], []>} : vector<128x512xbf16>, vector<512x1280xbf16>, vector<128x1280xf32> -> vector<128x1280xf32>
    %c0_4 = arith.constant 0 : index
    %c0_5 = arith.constant 0 : index
    %c0_6 = arith.constant 0 : index
    %4 = vector.load %arg3[%c0_4, %c0_5, %c0_6] : memref<1x1x1280xf32, #tpu.memory_space<vmem>>, vector<1x1x1280xf32>
    %5 = vector.shape_cast %4 : vector<1x1x1280xf32> to vector<1x1280xf32>
    %6 = vector.broadcast %5 : vector<1x1280xf32> to vector<128x1280xf32>
    %7 = arith.addf %3, %6 : vector<128x1280xf32>
    %8 = arith.negf %7 : vector<128x1280xf32>
    %9 = math.exp %8 : vector<128x1280xf32>
    %cst_7 = arith.constant 1.000000e+00 : f32
    %10 = vector.broadcast %cst_7 : f32 to vector<128x1280xf32>
    %11 = arith.addf %10, %9 : vector<128x1280xf32>
    %12 = arith.divf %10, %11 : vector<128x1280xf32>
    %13 = arith.mulf %7, %12 : vector<128x1280xf32>
    %14 = vector.shape_cast %13 : vector<128x1280xf32> to vector<2x64x1280xf32>
    %cst_8 = arith.constant dense<0.000000e+00> : vector<2x1280xf32>
    %15 = vector.multi_reduction <add>, %14, %cst_8 [1] : vector<2x64x1280xf32> to vector<2x1280xf32>
    %16 = arith.truncf %15 : vector<2x1280xf32> to vector<2x1280xbf16>
    %c0_9 = arith.constant 0 : index
    %c0_10 = arith.constant 0 : index
    %c0_11 = arith.constant 0 : index
    %17 = vector.load %arg4[%c0_9, %c0_10, %c0_11] : memref<1x1280x128xbf16, #tpu.memory_space<vmem>>, vector<1x1280x128xbf16>
    %18 = vector.shape_cast %17 : vector<1x1280x128xbf16> to vector<1280x128xbf16>
    %cst_12 = arith.constant dense<0.000000e+00> : vector<2x128xf32>
    %19 = tpu.matmul %16, %18, %cst_12 {dimension_numbers = #tpu.dot_dimension_numbers<[1], [0], [0], [1], [0, 0, 1, 1], [], []>} : vector<2x1280xbf16>, vector<1280x128xbf16>, vector<2x128xf32> -> vector<2x128xf32>
    %c0_13 = arith.constant 0 : index
    %c0_14 = arith.constant 0 : index
    %c0_15 = arith.constant 0 : index
    %20 = vector.load %arg5[%c0_13, %c0_14, %c0_15] : memref<1x1x128xf32, #tpu.memory_space<vmem>>, vector<1x1x128xf32>
    %21 = vector.shape_cast %20 : vector<1x1x128xf32> to vector<1x128xf32>
    %22 = vector.broadcast %21 : vector<1x128xf32> to vector<2x128xf32>
    %23 = arith.addf %19, %22 : vector<2x128xf32>
    %cst_16 = arith.constant dense<0xFF800000> : vector<2xf32>
    %24 = vector.multi_reduction <maximumf>, %23, %cst_16 [1] : vector<2x128xf32> to vector<2xf32>
    %25 = vector.shape_cast %24 : vector<2xf32> to vector<2x1xf32>
    %26 = vector.broadcast %25 : vector<2x1xf32> to vector<2x128xf32>
    %27 = arith.subf %23, %26 : vector<2x128xf32>
    %28 = math.exp %27 : vector<2x128xf32>
    %cst_17 = arith.constant dense<0.000000e+00> : vector<2xf32>
    %29 = vector.multi_reduction <add>, %28, %cst_17 [1] : vector<2x128xf32> to vector<2xf32>
    %30 = vector.shape_cast %29 : vector<2xf32> to vector<2x1xf32>
    %31 = tpu.reciprocal %30 {approx = true} : vector<2x1xf32> -> vector<2x1xf32>
    %32 = vector.broadcast %31 : vector<2x1xf32> to vector<2x128xf32>
    %33 = arith.mulf %28, %32 : vector<2x128xf32>
    %c0_18 = arith.constant 0 : index
    %c0_19 = arith.constant 0 : index
    %c0_20 = arith.constant 0 : index
    %34 = vector.load %arg6[%c0_18, %c0_19, %c0_20] : memref<1x2x128xf32, #tpu.memory_space<vmem>>, vector<1x2x128xf32>
    %35 = vector.shape_cast %34 : vector<1x2x128xf32> to vector<2x128xf32>
    %36 = vector.shape_cast %33 : vector<2x128xf32> to vector<1x2x128xf32>
    tpu.vector_store %arg6[%c0_18, %c0_19, %c0_20], %36 {strides = array<i32>} : memref<1x2x128xf32, #tpu.memory_space<vmem>>, vector<1x2x128xf32>,
    return
  }
  func.func @transform_0(%arg0: i32) -> (i32, i32) {
    %c0_i32 = arith.constant 0 : i32
    %c0_i32_0 = arith.constant 0 : i32
    %c0_i32_1 = arith.constant 0 : i32
    return %c0_i32, %c0_i32_0 : i32, i32
  }
  func.func @transform_1(%arg0: i32) -> (i32, i32, i32) {
    %c0_i32 = arith.constant 0 : i32
    %c0_i32_0 = arith.constant 0 : i32
    %c0_i32_1 = arith.constant 0 : i32
    return %arg0, %c0_i32, %c0_i32_0 : i32, i32, i32
  }
  func.func @transform_2(%arg0: i32) -> (i32, i32, i32) {
    %c0_i32 = arith.constant 0 : i32
    %c0_i32_0 = arith.constant 0 : i32
    %c0_i32_1 = arith.constant 0 : i32
    return %arg0, %c0_i32, %c0_i32_0 : i32, i32, i32
  }
  func.func @transform_3(%arg0: i32) -> (i32, i32, i32) {
    %c0_i32 = arith.constant 0 : i32
    %c0_i32_0 = arith.constant 0 : i32
    %c0_i32_1 = arith.constant 0 : i32
    return %arg0, %c0_i32, %c0_i32_0 : i32, i32, i32
  }
  func.func @transform_4(%arg0: i32) -> (i32, i32, i32) {
    %c0_i32 = arith.constant 0 : i32
    %c0_i32_0 = arith.constant 0 : i32
    %c0_i32_1 = arith.constant 0 : i32
    return %arg0, %c0_i32, %c0_i32_0 : i32, i32, i32
  }
  func.func @transform_5(%arg0: i32) -> (i32, i32, i32) {
    %c0_i32 = arith.constant 0 : i32
    %c0_i32_0 = arith.constant 0 : i32
    %c0_i32_1 = arith.constant 0 : i32
    return %arg0, %c0_i32, %c0_i32_0 : i32, i32, i32
  }
}

</mosaic_0001>

<llo_original>
// kernel: tpu_custom_call.1
$region0: #{tpu_custom_call.1}
  #allocation0 [shape = 'u32[]', space=smem, size = 0x4, offset = 0x4, fixed_abs, tag = 'smem constant byte address 0x4 - core index']
  #allocation1 [shape = 'u32[144,128]{1,0:T(1,128)}', space=vmem, size = 0x12000, scoped, tag = 'internal scratch']
  %s0 = inlined_call_operand.hbm [shape: bf16[128,512], index: 0, kind: input, shape index: {}]
  %s1 = inlined_call_operand.hbm [shape: bf16[7,512,1280], index: 1, kind: input, shape index: {}]
  %s2 = inlined_call_operand.hbm [shape: f32[7,1,1280], index: 2, kind: input, shape index: {}]
  %s3 = inlined_call_operand.hbm [shape: bf16[7,1280,128], index: 3, kind: input, shape index: {}]
  %s4 = inlined_call_operand.hbm [shape: f32[7,1,128], index: 4, kind: input, shape index: {}]
  %s5 = inlined_call_operand.hbm [shape: f32[7,2,128], index: 5, kind: output, shape index: {}]
  %s6 = sld [smem:[#allocation0]]
  $region73: #{tpu_custom_call.1} parent=0
    _
  %s8 = ssub.s32 1, %s6
  %s9 = scalar_select 0, %s8, %s6
  $region1: #{tpu_custom_call.1} parent=0
    #allocation2 [shape = 'u8[131072]{0}', space=vmem, size = 0x20000, scoped, tag = 'input window, operand 0, single buffered']
    #allocation3 [shape = 's32[2]{0}', space=sflag, size = 0x8, scoped, tag = 'scoped memory for tpu_custom_call.1']
    #allocation4 [shape = 's32[2]{0}', space=sflag, size = 0x8, scoped, tag = 'scoped memory for tpu_custom_call.1']
    #allocation5 [shape = 'u8[2621440]{0}', space=vmem, size = 0x280000, scoped, tag = 'input window, operand 1']
    #allocation6 [shape = 's32[2]{0}', space=sflag, size = 0x8, scoped, tag = 'scoped memory for tpu_custom_call.1']
    #allocation7 [shape = 'u8[10240]{0}', space=vmem, size = 0x2800, scoped, tag = 'input window, operand 2']
    #allocation8 [shape = 'u8[655360]{0}', space=vmem, size = 0xa0000, scoped, tag = 'input window, operand 3']
    #allocation9 [shape = 's32[2]{0}', space=sflag, size = 0x8, scoped, tag = 'scoped memory for tpu_custom_call.1']
    #allocation10 [shape = 'u8[1024]{0}', space=vmem, size = 0x400, scoped, tag = 'input window, operand 4']
    #allocation11 [shape = 'u8[2048]{0}', space=vmem, size = 0x800, scoped, tag = 'output window, operand 0']
    %10 = vsyncpa [#allocation3], 0
    %11 = vsyncpa [#allocation6], 0
    %s12 = scalar_lea.sflag [#allocation6], 1
    %13 = vsyncpa %s12, 0
    %14 = vsyncpa [#allocation9], 0
    %s15 = scalar_lea.sflag [#allocation9], 1
    %16 = vsyncpa %s15, 0
    %17 = vsyncpa [#allocation4], 0
    %s18 = scalar_lea.sflag [#allocation4], 1
    %19 = vsyncpa %s18, 0
    loop: start=0, step=1, limit=9
    $region2: #{tpu_custom_call.1} parent=1 // loop_pre_header
      _
    $region3: #{tpu_custom_call.1} parent=1 // loop_header
      %s21 = sphi 0, %s25
      %p22 = scmp.ge.s32.totalorder %s21, 9
      %s29 = sphi 0, %s29
      %s31 = sphi 0, %s29
      %s32 = sphi 0, %s31
      %s46 = sphi 0, %s32
      %s52 = sphi 0, %s54
      %s55 = sphi 0, %s52
      %s56 = sphi 0, %s55
      %s72 = sphi 0, %s56
      %s78 = sphi 0, %s80
      %s81 = sphi 0, %s78
      %s82 = sphi 0, %s81
      %s98 = sphi 0, %s82
      %s104 = sphi 0, %s106
      %s107 = sphi 0, %s104
      %s108 = sphi 0, %s107
      %s124 = sphi 0, %s108
      %s130 = sphi 0, %s132
      %s133 = sphi 0, %s130
      %s134 = sphi 0, %s133
      %s150 = sphi 0, %s134
      %s156 = sphi 0, %s158
      %s159 = sphi 0, %s156
      %s160 = sphi 0, %s159
      %s176 = sphi 0, %s160
    $region4: #{tpu_custom_call.1} parent=1 // loop_header_branch
      %24 = sbr.rel (%p22) target = $region8
    $region5: #{tpu_custom_call.1} parent=1 // loop_body
      %s26 = ssub.s32 %s21, 1
      %s27 = ssub.s32 %s21, 2
      %s28 = sadd.s32 %s21, 1
      %s30 = sadd.s32 %s29, 1
      %p33 = scmp.eq.s32.totalorder %s21, 6
      %p34 = scmp.ne.s32.totalorder %s29, %s31
      %p35 = scmp.eq.s32.totalorder %s21, 0
      %p36 = por %p34, %p35
      %p37 = scmp.ne.s32.totalorder %s29, %s31
      %p38 = scmp.eq.s32.totalorder %s26, 6
      %p39 = por %p37, %p38
      %p40 = scmp.ne.s32.totalorder %s31, %s32
      %p41 = scmp.eq.s32.totalorder %s26, 0
      %p42 = por %p40, %p41
      %p43 = scmp.ne.s32.totalorder %s31, %s32
      %p44 = scmp.eq.s32.totalorder %s27, 6
      %p45 = por %p43, %p44
      %p47 = scmp.ne.s32.totalorder %s32, %s46
      %p48 = scmp.eq.s32.totalorder %s27, 0
      %p49 = por %p47, %p48
      %s50 = ssub.s32 %s21, %s28
      %p51 = scmp.eq.s32.totalorder %s50, 0
      %s53 = sadd.s32 %s52, 1
      %s54 = scalar_select %p51, %s52, %s53
      %p57 = pneg %p51
      %p58 = scmp.eq.s32.totalorder %s21, 6
      %p59 = por %p57, %p58
      %p60 = scmp.ne.s32.totalorder %s52, %s55
      %p61 = scmp.eq.s32.totalorder %s21, 0
      %p62 = por %p60, %p61
      %p63 = scmp.ne.s32.totalorder %s52, %s55
      %p64 = scmp.eq.s32.totalorder %s26, 6
      %p65 = por %p63, %p64
      %p66 = scmp.ne.s32.totalorder %s55, %s56
      %p67 = scmp.eq.s32.totalorder %s26, 0
      %p68 = por %p66, %p67
      %p69 = scmp.ne.s32.totalorder %s55, %s56
      %p70 = scmp.eq.s32.totalorder %s27, 6
      %p71 = por %p69, %p70
      %p73 = scmp.ne.s32.totalorder %s56, %s72
      %p74 = scmp.eq.s32.totalorder %s27, 0
      %p75 = por %p73, %p74
      %s76 = ssub.s32 %s21, %s28
      %p77 = scmp.eq.s32.totalorder %s76, 0
      %s79 = sadd.s32 %s78, 1
      %s80 = scalar_select %p77, %s78, %s79
      %p83 = pneg %p77
      %p84 = scmp.eq.s32.totalorder %s21, 6
      %p85 = por %p83, %p84
      %p86 = scmp.ne.s32.totalorder %s78, %s81
      %p87 = scmp.eq.s32.totalorder %s21, 0
      %p88 = por %p86, %p87
      %p89 = scmp.ne.s32.totalorder %s78, %s81
      %p90 = scmp.eq.s32.totalorder %s26, 6
      %p91 = por %p89, %p90
      %p92 = scmp.ne.s32.totalorder %s81, %s82
      %p93 = scmp.eq.s32.totalorder %s26, 0
      %p94 = por %p92, %p93
      %p95 = scmp.ne.s32.totalorder %s81, %s82
      %p96 = scmp.eq.s32.totalorder %s27, 6
      %p97 = por %p95, %p96
      %p99 = scmp.ne.s32.totalorder %s82, %s98
      %p100 = scmp.eq.s32.totalorder %s27, 0
      %p101 = por %p99, %p100
      %s102 = ssub.s32 %s21, %s28
      %p103 = scmp.eq.s32.totalorder %s102, 0
      %s105 = sadd.s32 %s104, 1
      %s106 = scalar_select %p103, %s104, %s105
      %p109 = pneg %p103
      %p110 = scmp.eq.s32.totalorder %s21, 6
      %p111 = por %p109, %p110
      %p112 = scmp.ne.s32.totalorder %s104, %s107
      %p113 = scmp.eq.s32.totalorder %s21, 0
      %p114 = por %p112, %p113
      %p115 = scmp.ne.s32.totalorder %s104, %s107
      %p116 = scmp.eq.s32.totalorder %s26, 6
      %p117 = por %p115, %p116
      %p118 = scmp.ne.s32.totalorder %s107, %s108
      %p119 = scmp.eq.s32.totalorder %s26, 0
      %p120 = por %p118, %p119
      %p121 = scmp.ne.s32.totalorder %s107, %s108
      %p122 = scmp.eq.s32.totalorder %s27, 6
      %p123 = por %p121, %p122
      %p125 = scmp.ne.s32.totalorder %s108, %s124
      %p126 = scmp.eq.s32.totalorder %s27, 0
      %p127 = por %p125, %p126
      %s128 = ssub.s32 %s21, %s28
      %p129 = scmp.eq.s32.totalorder %s128, 0
      %s131 = sadd.s32 %s130, 1
      %s132 = scalar_select %p129, %s130, %s131
      %p135 = pneg %p129
      %p136 = scmp.eq.s32.totalorder %s21, 6
      %p137 = por %p135, %p136
      %p138 = scmp.ne.s32.totalorder %s130, %s133
      %p139 = scmp.eq.s32.totalorder %s21, 0
      %p140 = por %p138, %p139
      %p141 = scmp.ne.s32.totalorder %s130, %s133
      %p142 = scmp.eq.s32.totalorder %s26, 6
      %p143 = por %p141, %p142
      %p144 = scmp.ne.s32.totalorder %s133, %s134
      %p145 = scmp.eq.s32.totalorder %s26, 0
      %p146 = por %p144, %p145
      %p147 = scmp.ne.s32.totalorder %s133, %s134
      %p148 = scmp.eq.s32.totalorder %s27, 6
      %p149 = por %p147, %p148
      %p151 = scmp.ne.s32.totalorder %s134, %s150
      %p152 = scmp.eq.s32.totalorder %s27, 0
      %p153 = por %p151, %p152
      %s154 = ssub.s32 %s21, %s28
      %p155 = scmp.eq.s32.totalorder %s154, 0
      %s157 = sadd.s32 %s156, 1
      %s158 = scalar_select %p155, %s156, %s157
      %p161 = pneg %p155
      %p162 = scmp.eq.s32.totalorder %s21, 6
      %p163 = por %p161, %p162
      %p164 = scmp.ne.s32.totalorder %s156, %s159
      %p165 = scmp.eq.s32.totalorder %s21, 0
      %p166 = por %p164, %p165
      %p167 = scmp.ne.s32.totalorder %s156, %s159
      %p168 = scmp.eq.s32.totalorder %s26, 6
      %p169 = por %p167, %p168
      %p170 = scmp.ne.s32.totalorder %s159, %s160
      %p171 = scmp.eq.s32.totalorder %s26, 0
      %p172 = por %p170, %p171
      %p173 = scmp.ne.s32.totalorder %s159, %s160
      %p174 = scmp.eq.s32.totalorder %s27, 6
      %p175 = por %p173, %p174
      %p177 = scmp.ne.s32.totalorder %s160, %s176
      %p178 = scmp.eq.s32.totalorder %s27, 0
      %p179 = por %p177, %p178
      %p180 = scmp.le.s32.totalorder 1, %s21
      %p181 = scmp.lt.s32.totalorder %s21, 8
      %p182 = pnand %p180, %p181
      %p183 = pneg %p182
      // Predicated region
      $region9: #{tpu_custom_call.1} parent=5 // pred_check
        _
      $region10: #{tpu_custom_call.1} parent=5 // pred_check_branch
        %185 = sbr.rel (%p182) target = $region12
      $region11: #{tpu_custom_call.1} parent=5 // pred_region
        %s186 = ssub.s32 %s21, 1
        // Predicated region
        $region13: #{tpu_custom_call.1} parent=11 // pred_check
          %p187 = pneg %p42
        $region14: #{tpu_custom_call.1} parent=11 // pred_check_branch
          %189 = sbr.rel (%p187) target = $region16
        $region15: #{tpu_custom_call.1} parent=11 // pred_region
          %s191 = ssub.s32 4096, 4096
          %192 = vsyncadd [#allocation3], %s191
          %s193 = sshll.u32 [#allocation2], 4
          %s194 = int_to_ptr.vmem [resolvable:$true] %s193
          %199 = dma.hbm_to_vmem [thread:$0]  %s0, 4096, %s194, [#allocation3], 256, 256, 16
        $region16: #{tpu_custom_call.1} parent=11 // pred_fallthru
          _
      $region12: #{tpu_custom_call.1} parent=5 // pred_fallthru
        _
      %p200 = scmp.lt.s32.totalorder %s21, 7
      // Predicated region
      $region17: #{tpu_custom_call.1} parent=5 // pred_check
        %p201 = pneg %p200
      $region18: #{tpu_custom_call.1} parent=5 // pred_check_branch
        %203 = sbr.rel (%p201) target = $region20
      $region19: #{tpu_custom_call.1} parent=5 // pred_region
        // Predicated region
        $region21: #{tpu_custom_call.1} parent=19 // pred_check
          %p204 = pneg %p62
        $region22: #{tpu_custom_call.1} parent=19 // pred_check_branch
          %206 = sbr.rel (%p204) target = $region24
        $region23: #{tpu_custom_call.1} parent=19 // pred_region
          %s207 = sand.u32 %s21, 1
          %s208 = scalar_lea.sflag [#allocation6], %s207
          %s209 = sand.u32 %s52, 1
          %s210 = smul.addr %s209, 2560
          %s211 = scalar_lea.vmem [#allocation5], %s210
          %s213 = ssub.s32 40960, 40960
          %214 = vsyncadd %s208, %s213
          %s215 = smul.addr %s21, 640
          %s216 = smul.addr %s215, 64
          %s217 = scalar_lea.hbm %s1, %s216
          %s218 = sshll.u32 %s211, 4
          %s219 = int_to_ptr.vmem [resolvable:$true] %s218
          %224 = dma.hbm_to_vmem [thread:$0]  %s217, 40960, %s219, %s208, 640, 640, 40
        $region24: #{tpu_custom_call.1} parent=19 // pred_fallthru
          _
        // Predicated region
        $region25: #{tpu_custom_call.1} parent=19 // pred_check
          %p225 = pneg %p88
        $region26: #{tpu_custom_call.1} parent=19 // pred_check_branch
          %227 = sbr.rel (%p225) target = $region28
        $region27: #{tpu_custom_call.1} parent=19 // pred_region
          %s228 = sand.u32 %s21, 1
          %s229 = scalar_lea.sflag [#allocation6], %s228
          %s230 = sand.u32 %s78, 1
          %s231 = smul.addr %s230, 10
          %s232 = scalar_lea.vmem [#allocation7], %s231
          %s234 = ssub.s32 160, 160
          %235 = vsyncadd %s229, %s234
          %s236 = smul.addr %s21, 10
          %s237 = smul.addr %s236, 16
          %s238 = scalar_lea.hbm %s2, %s237
          %s240 = sshll.u32 %s232, 4
          %s241 = int_to_ptr.vmem [resolvable:$true] %s240
          %243 = dma.hbm_to_vmem [thread:$0]  %s238, 160, %s241, %s229
        $region28: #{tpu_custom_call.1} parent=19 // pred_fallthru
          _
        // Predicated region
        $region29: #{tpu_custom_call.1} parent=19 // pred_check
          %p244 = pneg %p114
        $region30: #{tpu_custom_call.1} parent=19 // pred_check_branch
          %246 = sbr.rel (%p244) target = $region32
        $region31: #{tpu_custom_call.1} parent=19 // pred_region
          %s247 = sand.u32 %s21, 1
          %s248 = scalar_lea.sflag [#allocation9], %s247
          %s249 = sand.u32 %s104, 1
          %s250 = smul.addr %s249, 640
          %s251 = scalar_lea.vmem [#allocation8], %s250
          %s253 = ssub.s32 10240, 10240
          %254 = vsyncadd %s248, %s253
          %s255 = smul.addr %s21, 160
          %s256 = smul.addr %s255, 64
          %s257 = scalar_lea.hbm %s3, %s256
          %s258 = sshll.u32 %s251, 4
          %s259 = int_to_ptr.vmem [resolvable:$true] %s258
          %264 = dma.hbm_to_vmem [thread:$0]  %s257, 10240, %s259, %s248, 64, 64, 4
        $region32: #{tpu_custom_call.1} parent=19 // pred_fallthru
          _
        // Predicated region
        $region33: #{tpu_custom_call.1} parent=19 // pred_check
          %p265 = pneg %p140
        $region34: #{tpu_custom_call.1} parent=19 // pred_check_branch
          %267 = sbr.rel (%p265) target = $region36
        $region35: #{tpu_custom_call.1} parent=19 // pred_region
          %s268 = sand.u32 %s21, 1
          %s269 = scalar_lea.sflag [#allocation9], %s268
          %s270 = sand.u32 %s130, 1
          %s271 = scalar_lea.vmem [#allocation10], %s270
          %s273 = ssub.s32 16, 16
          %274 = vsyncadd %s269, %s273
          %s275 = smul.addr %s21, 16
          %s276 = scalar_lea.hbm %s4, %s275
          %s278 = sshll.u32 %s271, 4
          %s279 = int_to_ptr.vmem [resolvable:$true] %s278
          %281 = dma.hbm_to_vmem [thread:$0]  %s276, 16, %s279, %s269
        $region36: #{tpu_custom_call.1} parent=19 // pred_fallthru
          _
      $region20: #{tpu_custom_call.1} parent=5 // pred_fallthru
        _
      %p282 = scmp.le.s32.totalorder 1, %s21
      %p283 = scmp.lt.s32.totalorder %s21, 8
      %p284 = pnand %p282, %p283
      %p285 = pneg %p284
      // Predicated region
      $region37: #{tpu_custom_call.1} parent=5 // pred_check
        _
      $region38: #{tpu_custom_call.1} parent=5 // pred_check_branch
        %287 = sbr.rel (%p284) target = $region40
      $region39: #{tpu_custom_call.1} parent=5 // pred_region
        %s288 = ssub.s32 %s21, 1
        // Predicated region
        $region41: #{tpu_custom_call.1} parent=39 // pred_check
          %p289 = pneg %p42
        $region42: #{tpu_custom_call.1} parent=39 // pred_check_branch
          %291 = sbr.rel (%p289) target = $region44
        $region43: #{tpu_custom_call.1} parent=39 // pred_region
          %292 = dma.done [#allocation3], 4096
        $region44: #{tpu_custom_call.1} parent=39 // pred_fallthru
          _
        %s293 = sand.u32 %s26, 1
        %s294 = scalar_lea.sflag [#allocation6], %s293
        %s295 = sand.u32 %s55, 1
        %s296 = smul.addr %s295, 2560
        %s297 = scalar_lea.vmem [#allocation5], %s296
        // Predicated region
        $region45: #{tpu_custom_call.1} parent=39 // pred_check
          %p298 = pneg %p68
        $region46: #{tpu_custom_call.1} parent=39 // pred_check_branch
          %300 = sbr.rel (%p298) target = $region48
        $region47: #{tpu_custom_call.1} parent=39 // pred_region
          %301 = dma.done %s294, 40960
        $region48: #{tpu_custom_call.1} parent=39 // pred_fallthru
          _
        %s302 = sand.u32 %s26, 1
        %s303 = scalar_lea.sflag [#allocation6], %s302
        %s304 = sand.u32 %s81, 1
        %s305 = smul.addr %s304, 10
        %s306 = scalar_lea.vmem [#allocation7], %s305
        // Predicated region
        $region49: #{tpu_custom_call.1} parent=39 // pred_check
          %p307 = pneg %p94
        $region50: #{tpu_custom_call.1} parent=39 // pred_check_branch
          %309 = sbr.rel (%p307) target = $region52
        $region51: #{tpu_custom_call.1} parent=39 // pred_region
          %310 = dma.done %s303, 160
        $region52: #{tpu_custom_call.1} parent=39 // pred_fallthru
          _
        %s311 = sand.u32 %s26, 1
        %s312 = scalar_lea.sflag [#allocation9], %s311
        %s313 = sand.u32 %s107, 1
        %s314 = smul.addr %s313, 640
        %s315 = scalar_lea.vmem [#allocation8], %s314
        // Predicated region
        $region53: #{tpu_custom_call.1} parent=39 // pred_check
          %p316 = pneg %p120
        $region54: #{tpu_custom_call.1} parent=39 // pred_check_branch
          %318 = sbr.rel (%p316) target = $region56
        $region55: #{tpu_custom_call.1} parent=39 // pred_region
          %319 = dma.done %s312, 10240
        $region56: #{tpu_custom_call.1} parent=39 // pred_fallthru
          _
        %s320 = sand.u32 %s26, 1
        %s321 = scalar_lea.sflag [#allocation9], %s320
        %s322 = sand.u32 %s133, 1
        %s323 = scalar_lea.vmem [#allocation10], %s322
        // Predicated region
        $region57: #{tpu_custom_call.1} parent=39 // pred_check
          %p324 = pneg %p146
        $region58: #{tpu_custom_call.1} parent=39 // pred_check_branch
          %326 = sbr.rel (%p324) target = $region60
        $region59: #{tpu_custom_call.1} parent=39 // pred_region
          %327 = dma.done %s321, 16
        $region60: #{tpu_custom_call.1} parent=39 // pred_fallthru
          _
        %p328 = pneg %p42
        %p329 = pneg %p39
        %s330 = sand.u32 %s26, 1
        %s331 = scalar_lea.sflag [#allocation6], %s330
        %s332 = sand.u32 %s55, 1
        %s333 = smul.addr %s332, 2560
        %s334 = scalar_lea.vmem [#allocation5], %s333
        %p335 = pneg %p68
        %p336 = pneg %p65
        %s337 = sand.u32 %s26, 1
        %s338 = scalar_lea.sflag [#allocation6], %s337
        %s339 = sand.u32 %s81, 1
        %s340 = smul.addr %s339, 10
        %s341 = scalar_lea.vmem [#allocation7], %s340
        %p342 = pneg %p94
        %p343 = pneg %p91
        %s344 = sand.u32 %s26, 1
        %s345 = scalar_lea.sflag [#allocation9], %s344
        %s346 = sand.u32 %s107, 1
        %s347 = smul.addr %s346, 640
        %s348 = scalar_lea.vmem [#allocation8], %s347
        %p349 = pneg %p120
        %p350 = pneg %p117
        %s351 = sand.u32 %s26, 1
        %s352 = scalar_lea.sflag [#allocation9], %s351
        %s353 = sand.u32 %s133, 1
        %s354 = scalar_lea.vmem [#allocation10], %s353
        %p355 = pneg %p146
        %p356 = pneg %p143
        %p357 = pneg %p172
        %p358 = pneg %p169
        %s359 = sand.u32 %s159, 1
        %s360 = scalar_lea.sflag [#allocation4], %s359
        %s361 = sand.u32 %s159, 1
        %s362 = smul.addr %s361, 2
        %s363 = scalar_lea.vmem [#allocation11], %s362
        %v365 = vld [vmem:[#allocation2] sm:$0xff]
        %v366 = vld [vmem:[#allocation2 + $0x8] sm:$0xff]
        %v367 = vld [vmem:[#allocation2 + $0x10] sm:$0xff]
        %v368 = vld [vmem:[#allocation2 + $0x18] sm:$0xff]
        %v369 = vld [vmem:[#allocation2 + $0x20] sm:$0xff]
        %v370 = vld [vmem:[#allocation2 + $0x28] sm:$0xff]
        %v371 = vld [vmem:[#allocation2 + $0x30] sm:$0xff]
        %v372 = vld [vmem:[#allocation2 + $0x38] sm:$0xff]
        %v373 = vld [vmem:[#allocation2 + $0x40] sm:$0xff]
        %v374 = vld [vmem:[#allocation2 + $0x48] sm:$0xff]
        %v375 = vld [vmem:[#allocation2 + $0x50] sm:$0xff]
        %v376 = vld [vmem:[#allocation2 + $0x58] sm:$0xff]
        %v377 = vld [vmem:[#allocation2 + $0x60] sm:$0xff]
        %v378 = vld [vmem:[#allocation2 + $0x68] sm:$0xff]
        %v379 = vld [vmem:[#allocation2 + $0x70] sm:$0xff]
        %v380 = vld [vmem:[#allocation2 + $0x78] sm:$0xff]
        %v381 = vld [vmem:[#allocation2 + $0x80] sm:$0xff]
        %v382 = vld [vmem:[#allocation2 + $0x88] sm:$0xff]
        %v383 = vld [vmem:[#allocation2 + $0x90] sm:$0xff]
        %v384 = vld [vmem:[#allocation2 + $0x98] sm:$0xff]
        %v385 = vld [vmem:[#allocation2 + $0xa0] sm:$0xff]
        %v386 = vld [vmem:[#allocation2 + $0xa8] sm:$0xff]
        %v387 = vld [vmem:[#allocation2 + $0xb0] sm:$0xff]
        %v388 = vld [vmem:[#allocation2 + $0xb8] sm:$0xff]
        %v389 = vld [vmem:[#allocation2 + $0xc0] sm:$0xff]
        %v390 = vld [vmem:[#allocation2 + $0xc8] sm:$0xff]
        %v391 = vld [vmem:[#allocation2 + $0xd0] sm:$0xff]
        %v392 = vld [vmem:[#allocation2 + $0xd8] sm:$0xff]
        %v393 = vld [vmem:[#allocation2 + $0xe0] sm:$0xff]
        %v394 = vld [vmem:[#allocation2 + $0xe8] sm:$0xff]
        %v395 = vld [vmem:[#allocation2 + $0xf0] sm:$0xff]
        %v396 = vld [vmem:[#allocation2 + $0xf8] sm:$0xff]
        %v397 = vld [vmem:[%s297] sm:$0xff]
        %v398 = vld [vmem:[%s297 + $0x8] sm:$0xff]
        %v399 = vld [vmem:[%s297 + $0x10] sm:$0xff]
        %v400 = vld [vmem:[%s297 + $0x18] sm:$0xff]
        %v401 = vld [vmem:[%s297 + $0x20] sm:$0xff]
        %v402 = vld [vmem:[%s297 + $0x28] sm:$0xff]
        %v403 = vld [vmem:[%s297 + $0x30] sm:$0xff]
        %v404 = vld [vmem:[%s297 + $0x38] sm:$0xff]
        %v405 = vld [vmem:[%s297 + $0x40] sm:$0xff]
        %v406 = vld [vmem:[%s297 + $0x48] sm:$0xff]
        %v407 = vld [vmem:[%s297 + $0x50] sm:$0xff]
        %v408 = vld [vmem:[%s297 + $0x58] sm:$0xff]
        %v409 = vld [vmem:[%s297 + $0x60] sm:$0xff]
        %v410 = vld [vmem:[%s297 + $0x68] sm:$0xff]
        %v411 = vld [vmem:[%s297 + $0x70] sm:$0xff]
        %v412 = vld [vmem:[%s297 + $0x78] sm:$0xff]
        %v413 = vld [vmem:[%s297 + $0x80] sm:$0xff]
        %v414 = vld [vmem:[%s297 + $0x88] sm:$0xff]
        %v415 = vld [vmem:[%s297 + $0x90] sm:$0xff]
        %v416 = vld [vmem:[%s297 + $0x98] sm:$0xff]
        %v417 = vld [vmem:[%s297 + $0xa0] sm:$0xff]
        %v418 = vld [vmem:[%s297 + $0xa8] sm:$0xff]
        %v419 = vld [vmem:[%s297 + $0xb0] sm:$0xff]
        %v420 = vld [vmem:[%s297 + $0xb8] sm:$0xff]
        %v421 = vld [vmem:[%s297 + $0xc0] sm:$0xff]
        %v422 = vld [vmem:[%s297 + $0xc8] sm:$0xff]
        %v423 = vld [vmem:[%s297 + $0xd0] sm:$0xff]
        %v424 = vld [vmem:[%s297 + $0xd8] sm:$0xff]
        %v425 = vld [vmem:[%s297 + $0xe0] sm:$0xff]
        %v426 = vld [vmem:[%s297 + $0xe8] sm:$0xff]
        %v427 = vld [vmem:[%s297 + $0xf0] sm:$0xff]
        %v428 = vld [vmem:[%s297 + $0xf8] sm:$0xff]
        %v429 = vld [vmem:[%s297 + $0x100] sm:$0xff]
        %v430 = vld [vmem:[%s297 + $0x108] sm:$0xff]
        %v431 = vld [vmem:[%s297 + $0x110] sm:$0xff]
        %v432 = vld [vmem:[%s297 + $0x118] sm:$0xff]
        %v433 = vld [vmem:[%s297 + $0x120] sm:$0xff]
        %v434 = vld [vmem:[%s297 + $0x128] sm:$0xff]
        %v435 = vld [vmem:[%s297 + $0x130] sm:$0xff]
        %v436 = vld [vmem:[%s297 + $0x138] sm:$0xff]
        %v437 = vld [vmem:[%s297 + $0x140] sm:$0xff]
        %v438 = vld [vmem:[%s297 + $0x148] sm:$0xff]
        %v439 = vld [vmem:[%s297 + $0x150] sm:$0xff]
        %v440 = vld [vmem:[%s297 + $0x158] sm:$0xff]
        %v441 = vld [vmem:[%s297 + $0x160] sm:$0xff]
        %v442 = vld [vmem:[%s297 + $0x168] sm:$0xff]
        %v443 = vld [vmem:[%s297 + $0x170] sm:$0xff]
        %v444 = vld [vmem:[%s297 + $0x178] sm:$0xff]
        %v445 = vld [vmem:[%s297 + $0x180] sm:$0xff]
        %v446 = vld [vmem:[%s297 + $0x188] sm:$0xff]
        %v447 = vld [vmem:[%s297 + $0x190] sm:$0xff]
        %v448 = vld [vmem:[%s297 + $0x198] sm:$0xff]
        %v449 = vld [vmem:[%s297 + $0x1a0] sm:$0xff]
        %v450 = vld [vmem:[%s297 + $0x1a8] sm:$0xff]
        %v451 = vld [vmem:[%s297 + $0x1b0] sm:$0xff]
        %v452 = vld [vmem:[%s297 + $0x1b8] sm:$0xff]
        %v453 = vld [vmem:[%s297 + $0x1c0] sm:$0xff]
        %v454 = vld [vmem:[%s297 + $0x1c8] sm:$0xff]
        %v455 = vld [vmem:[%s297 + $0x1d0] sm:$0xff]
        %v456 = vld [vmem:[%s297 + $0x1d8] sm:$0xff]
        %v457 = vld [vmem:[%s297 + $0x1e0] sm:$0xff]
        %v458 = vld [vmem:[%s297 + $0x1e8] sm:$0xff]
        %v459 = vld [vmem:[%s297 + $0x1f0] sm:$0xff]
        %v460 = vld [vmem:[%s297 + $0x1f8] sm:$0xff]
        %v461 = vld [vmem:[%s297 + $0x200] sm:$0xff]
        %v462 = vld [vmem:[%s297 + $0x208] sm:$0xff]
        %v463 = vld [vmem:[%s297 + $0x210] sm:$0xff]
        %v464 = vld [vmem:[%s297 + $0x218] sm:$0xff]
        %v465 = vld [vmem:[%s297 + $0x220] sm:$0xff]
        %v466 = vld [vmem:[%s297 + $0x228] sm:$0xff]
        %v467 = vld [vmem:[%s297 + $0x230] sm:$0xff]
        %v468 = vld [vmem:[%s297 + $0x238] sm:$0xff]
        %v469 = vld [vmem:[%s297 + $0x240] sm:$0xff]
        %v470 = vld [vmem:[%s297 + $0x248] sm:$0xff]
        %v471 = vld [vmem:[%s297 + $0x250] sm:$0xff]
        %v472 = vld [vmem:[%s297 + $0x258] sm:$0xff]
        %v473 = vld [vmem:[%s297 + $0x260] sm:$0xff]
        %v474 = vld [vmem:[%s297 + $0x268] sm:$0xff]
        %v475 = vld [vmem:[%s297 + $0x270] sm:$0xff]
        %v476 = vld [vmem:[%s297 + $0x278] sm:$0xff]
        %v477 = vld [vmem:[%s297 + $0x280] sm:$0xff]
        %v478 = vld [vmem:[%s297 + $0x288] sm:$0xff]
        %v479 = vld [vmem:[%s297 + $0x290] sm:$0xff]
        %v480 = vld [vmem:[%s297 + $0x298] sm:$0xff]
        %v481 = vld [vmem:[%s297 + $0x2a0] sm:$0xff]
        %v482 = vld [vmem:[%s297 + $0x2a8] sm:$0xff]
        %v483 = vld [vmem:[%s297 + $0x2b0] sm:$0xff]
        %v484 = vld [vmem:[%s297 + $0x2b8] sm:$0xff]
        %v485 = vld [vmem:[%s297 + $0x2c0] sm:$0xff]
        %v486 = vld [vmem:[%s297 + $0x2c8] sm:$0xff]
        %v487 = vld [vmem:[%s297 + $0x2d0] sm:$0xff]
        %v488 = vld [vmem:[%s297 + $0x2d8] sm:$0xff]
        %v489 = vld [vmem:[%s297 + $0x2e0] sm:$0xff]
        %v490 = vld [vmem:[%s297 + $0x2e8] sm:$0xff]
        %v491 = vld [vmem:[%s297 + $0x2f0] sm:$0xff]
        %v492 = vld [vmem:[%s297 + $0x2f8] sm:$0xff]
        %v493 = vld [vmem:[%s297 + $0x300] sm:$0xff]
        %v494 = vld [vmem:[%s297 + $0x308] sm:$0xff]
        %v495 = vld [vmem:[%s297 + $0x310] sm:$0xff]
        %v496 = vld [vmem:[%s297 + $0x318] sm:$0xff]
        %v497 = vld [vmem:[%s297 + $0x320] sm:$0xff]
        %v498 = vld [vmem:[%s297 + $0x328] sm:$0xff]
        %v499 = vld [vmem:[%s297 + $0x330] sm:$0xff]
        %v500 = vld [vmem:[%s297 + $0x338] sm:$0xff]
        %v501 = vld [vmem:[%s297 + $0x340] sm:$0xff]
        %v502 = vld [vmem:[%s297 + $0x348] sm:$0xff]
        %v503 = vld [vmem:[%s297 + $0x350] sm:$0xff]
        %v504 = vld [vmem:[%s297 + $0x358] sm:$0xff]
        %v505 = vld [vmem:[%s297 + $0x360] sm:$0xff]
        %v506 = vld [vmem:[%s297 + $0x368] sm:$0xff]
        %v507 = vld [vmem:[%s297 + $0x370] sm:$0xff]
        %v508 = vld [vmem:[%s297 + $0x378] sm:$0xff]
        %v509 = vld [vmem:[%s297 + $0x380] sm:$0xff]
        %v510 = vld [vmem:[%s297 + $0x388] sm:$0xff]
        %v511 = vld [vmem:[%s297 + $0x390] sm:$0xff]
        %v512 = vld [vmem:[%s297 + $0x398] sm:$0xff]
        %v513 = vld [vmem:[%s297 + $0x3a0] sm:$0xff]
        %v514 = vld [vmem:[%s297 + $0x3a8] sm:$0xff]
        %v515 = vld [vmem:[%s297 + $0x3b0] sm:$0xff]
        %v516 = vld [vmem:[%s297 + $0x3b8] sm:$0xff]
        %v517 = vld [vmem:[%s297 + $0x3c0] sm:$0xff]
        %v518 = vld [vmem:[%s297 + $0x3c8] sm:$0xff]
        %v519 = vld [vmem:[%s297 + $0x3d0] sm:$0xff]
        %v520 = vld [vmem:[%s297 + $0x3d8] sm:$0xff]
        %v521 = vld [vmem:[%s297 + $0x3e0] sm:$0xff]
        %v522 = vld [vmem:[%s297 + $0x3e8] sm:$0xff]
        %v523 = vld [vmem:[%s297 + $0x3f0] sm:$0xff]
        %v524 = vld [vmem:[%s297 + $0x3f8] sm:$0xff]
        %v525 = vld [vmem:[%s297 + $0x400] sm:$0xff]
        %v526 = vld [vmem:[%s297 + $0x408] sm:$0xff]
        %v527 = vld [vmem:[%s297 + $0x410] sm:$0xff]
        %v528 = vld [vmem:[%s297 + $0x418] sm:$0xff]
        %v529 = vld [vmem:[%s297 + $0x420] sm:$0xff]
        %v530 = vld [vmem:[%s297 + $0x428] sm:$0xff]
        %v531 = vld [vmem:[%s297 + $0x430] sm:$0xff]
        %v532 = vld [vmem:[%s297 + $0x438] sm:$0xff]
        %v533 = vld [vmem:[%s297 + $0x440] sm:$0xff]
        %v534 = vld [vmem:[%s297 + $0x448] sm:$0xff]
        %v535 = vld [vmem:[%s297 + $0x450] sm:$0xff]
        %v536 = vld [vmem:[%s297 + $0x458] sm:$0xff]
        %v537 = vld [vmem:[%s297 + $0x460] sm:$0xff]
        %v538 = vld [vmem:[%s297 + $0x468] sm:$0xff]
        %v539 = vld [vmem:[%s297 + $0x470] sm:$0xff]
        %v540 = vld [vmem:[%s297 + $0x478] sm:$0xff]
        %v541 = vld [vmem:[%s297 + $0x480] sm:$0xff]
        %v542 = vld [vmem:[%s297 + $0x488] sm:$0xff]
        %v543 = vld [vmem:[%s297 + $0x490] sm:$0xff]
        %v544 = vld [vmem:[%s297 + $0x498] sm:$0xff]
        %v545 = vld [vmem:[%s297 + $0x4a0] sm:$0xff]
        %v546 = vld [vmem:[%s297 + $0x4a8] sm:$0xff]
        %v547 = vld [vmem:[%s297 + $0x4b0] sm:$0xff]
        %v548 = vld [vmem:[%s297 + $0x4b8] sm:$0xff]
        %v549 = vld [vmem:[%s297 + $0x4c0] sm:$0xff]
        %v550 = vld [vmem:[%s297 + $0x4c8] sm:$0xff]
        %v551 = vld [vmem:[%s297 + $0x4d0] sm:$0xff]
        %v552 = vld [vmem:[%s297 + $0x4d8] sm:$0xff]
        %v553 = vld [vmem:[%s297 + $0x4e0] sm:$0xff]
        %v554 = vld [vmem:[%s297 + $0x4e8] sm:$0xff]
        %v555 = vld [vmem:[%s297 + $0x4f0] sm:$0xff]
        %v556 = vld [vmem:[%s297 + $0x4f8] sm:$0xff]
        %v557 = vld [vmem:[%s297 + $0x500] sm:$0xff]
        %v558 = vld [vmem:[%s297 + $0x508] sm:$0xff]
        %v559 = vld [vmem:[%s297 + $0x510] sm:$0xff]
        %v560 = vld [vmem:[%s297 + $0x518] sm:$0xff]
        %v561 = vld [vmem:[%s297 + $0x520] sm:$0xff]
        %v562 = vld [vmem:[%s297 + $0x528] sm:$0xff]
        %v563 = vld [vmem:[%s297 + $0x530] sm:$0xff]
        %v564 = vld [vmem:[%s297 + $0x538] sm:$0xff]
        %v565 = vld [vmem:[%s297 + $0x540] sm:$0xff]
        %v566 = vld [vmem:[%s297 + $0x548] sm:$0xff]
        %v567 = vld [vmem:[%s297 + $0x550] sm:$0xff]
        %v568 = vld [vmem:[%s297 + $0x558] sm:$0xff]
        %v569 = vld [vmem:[%s297 + $0x560] sm:$0xff]
        %v570 = vld [vmem:[%s297 + $0x568] sm:$0xff]
        %v571 = vld [vmem:[%s297 + $0x570] sm:$0xff]
        %v572 = vld [vmem:[%s297 + $0x578] sm:$0xff]
        %v573 = vld [vmem:[%s297 + $0x580] sm:$0xff]
        %v574 = vld [vmem:[%s297 + $0x588] sm:$0xff]
        %v575 = vld [vmem:[%s297 + $0x590] sm:$0xff]
        %v576 = vld [vmem:[%s297 + $0x598] sm:$0xff]
        %v577 = vld [vmem:[%s297 + $0x5a0] sm:$0xff]
        %v578 = vld [vmem:[%s297 + $0x5a8] sm:$0xff]
        %v579 = vld [vmem:[%s297 + $0x5b0] sm:$0xff]
        %v580 = vld [vmem:[%s297 + $0x5b8] sm:$0xff]
        %v581 = vld [vmem:[%s297 + $0x5c0] sm:$0xff]
        %v582 = vld [vmem:[%s297 + $0x5c8] sm:$0xff]
        %v583 = vld [vmem:[%s297 + $0x5d0] sm:$0xff]
        %v584 = vld [vmem:[%s297 + $0x5d8] sm:$0xff]
        %v585 = vld [vmem:[%s297 + $0x5e0] sm:$0xff]
        %v586 = vld [vmem:[%s297 + $0x5e8] sm:$0xff]
        %v587 = vld [vmem:[%s297 + $0x5f0] sm:$0xff]
        %v588 = vld [vmem:[%s297 + $0x5f8] sm:$0xff]
        %v589 = vld [vmem:[%s297 + $0x600] sm:$0xff]
        %v590 = vld [vmem:[%s297 + $0x608] sm:$0xff]
        %v591 = vld [vmem:[%s297 + $0x610] sm:$0xff]
        %v592 = vld [vmem:[%s297 + $0x618] sm:$0xff]
        %v593 = vld [vmem:[%s297 + $0x620] sm:$0xff]
        %v594 = vld [vmem:[%s297 + $0x628] sm:$0xff]
        %v595 = vld [vmem:[%s297 + $0x630] sm:$0xff]
        %v596 = vld [vmem:[%s297 + $0x638] sm:$0xff]
        %v597 = vld [vmem:[%s297 + $0x640] sm:$0xff]
        %v598 = vld [vmem:[%s297 + $0x648] sm:$0xff]
        %v599 = vld [vmem:[%s297 + $0x650] sm:$0xff]
        %v600 = vld [vmem:[%s297 + $0x658] sm:$0xff]
        %v601 = vld [vmem:[%s297 + $0x660] sm:$0xff]
        %v602 = vld [vmem:[%s297 + $0x668] sm:$0xff]
        %v603 = vld [vmem:[%s297 + $0x670] sm:$0xff]
        %v604 = vld [vmem:[%s297 + $0x678] sm:$0xff]
        %v605 = vld [vmem:[%s297 + $0x680] sm:$0xff]
        %v606 = vld [vmem:[%s297 + $0x688] sm:$0xff]
        %v607 = vld [vmem:[%s297 + $0x690] sm:$0xff]
        %v608 = vld [vmem:[%s297 + $0x698] sm:$0xff]
        %v609 = vld [vmem:[%s297 + $0x6a0] sm:$0xff]
        %v610 = vld [vmem:[%s297 + $0x6a8] sm:$0xff]
        %v611 = vld [vmem:[%s297 + $0x6b0] sm:$0xff]
        %v612 = vld [vmem:[%s297 + $0x6b8] sm:$0xff]
        %v613 = vld [vmem:[%s297 + $0x6c0] sm:$0xff]
        %v614 = vld [vmem:[%s297 + $0x6c8] sm:$0xff]
        %v615 = vld [vmem:[%s297 + $0x6d0] sm:$0xff]
        %v616 = vld [vmem:[%s297 + $0x6d8] sm:$0xff]
        %v617 = vld [vmem:[%s297 + $0x6e0] sm:$0xff]
        %v618 = vld [vmem:[%s297 + $0x6e8] sm:$0xff]
        %v619 = vld [vmem:[%s297 + $0x6f0] sm:$0xff]
        %v620 = vld [vmem:[%s297 + $0x6f8] sm:$0xff]
        %v621 = vld [vmem:[%s297 + $0x700] sm:$0xff]
        %v622 = vld [vmem:[%s297 + $0x708] sm:$0xff]
        %v623 = vld [vmem:[%s297 + $0x710] sm:$0xff]
        %v624 = vld [vmem:[%s297 + $0x718] sm:$0xff]
        %v625 = vld [vmem:[%s297 + $0x720] sm:$0xff]
        %v626 = vld [vmem:[%s297 + $0x728] sm:$0xff]
        %v627 = vld [vmem:[%s297 + $0x730] sm:$0xff]
        %v628 = vld [vmem:[%s297 + $0x738] sm:$0xff]
        %v629 = vld [vmem:[%s297 + $0x740] sm:$0xff]
        %v630 = vld [vmem:[%s297 + $0x748] sm:$0xff]
        %v631 = vld [vmem:[%s297 + $0x750] sm:$0xff]
        %v632 = vld [vmem:[%s297 + $0x758] sm:$0xff]
        %v633 = vld [vmem:[%s297 + $0x760] sm:$0xff]
        %v634 = vld [vmem:[%s297 + $0x768] sm:$0xff]
        %v635 = vld [vmem:[%s297 + $0x770] sm:$0xff]
        %v636 = vld [vmem:[%s297 + $0x778] sm:$0xff]
        %v637 = vld [vmem:[%s297 + $0x780] sm:$0xff]
        %v638 = vld [vmem:[%s297 + $0x788] sm:$0xff]
        %v639 = vld [vmem:[%s297 + $0x790] sm:$0xff]
        %v640 = vld [vmem:[%s297 + $0x798] sm:$0xff]
        %v641 = vld [vmem:[%s297 + $0x7a0] sm:$0xff]
        %v642 = vld [vmem:[%s297 + $0x7a8] sm:$0xff]
        %v643 = vld [vmem:[%s297 + $0x7b0] sm:$0xff]
        %v644 = vld [vmem:[%s297 + $0x7b8] sm:$0xff]
        %v645 = vld [vmem:[%s297 + $0x7c0] sm:$0xff]
        %v646 = vld [vmem:[%s297 + $0x7c8] sm:$0xff]
        %v647 = vld [vmem:[%s297 + $0x7d0] sm:$0xff]
        %v648 = vld [vmem:[%s297 + $0x7d8] sm:$0xff]
        %v649 = vld [vmem:[%s297 + $0x7e0] sm:$0xff]
        %v650 = vld [vmem:[%s297 + $0x7e8] sm:$0xff]
        %v651 = vld [vmem:[%s297 + $0x7f0] sm:$0xff]
        %v652 = vld [vmem:[%s297 + $0x7f8] sm:$0xff]
        %v653 = vld [vmem:[%s297 + $0x800] sm:$0xff]
        %v654 = vld [vmem:[%s297 + $0x808] sm:$0xff]
        %v655 = vld [vmem:[%s297 + $0x810] sm:$0xff]
        %v656 = vld [vmem:[%s297 + $0x818] sm:$0xff]
        %v657 = vld [vmem:[%s297 + $0x820] sm:$0xff]
        %v658 = vld [vmem:[%s297 + $0x828] sm:$0xff]
        %v659 = vld [vmem:[%s297 + $0x830] sm:$0xff]
        %v660 = vld [vmem:[%s297 + $0x838] sm:$0xff]
        %v661 = vld [vmem:[%s297 + $0x840] sm:$0xff]
        %v662 = vld [vmem:[%s297 + $0x848] sm:$0xff]
        %v663 = vld [vmem:[%s297 + $0x850] sm:$0xff]
        %v664 = vld [vmem:[%s297 + $0x858] sm:$0xff]
        %v665 = vld [vmem:[%s297 + $0x860] sm:$0xff]
        %v666 = vld [vmem:[%s297 + $0x868] sm:$0xff]
        %v667 = vld [vmem:[%s297 + $0x870] sm:$0xff]
        %v668 = vld [vmem:[%s297 + $0x878] sm:$0xff]
        %v669 = vld [vmem:[%s297 + $0x880] sm:$0xff]
        %v670 = vld [vmem:[%s297 + $0x888] sm:$0xff]
        %v671 = vld [vmem:[%s297 + $0x890] sm:$0xff]
        %v672 = vld [vmem:[%s297 + $0x898] sm:$0xff]
        %v673 = vld [vmem:[%s297 + $0x8a0] sm:$0xff]
        %v674 = vld [vmem:[%s297 + $0x8a8] sm:$0xff]
        %v675 = vld [vmem:[%s297 + $0x8b0] sm:$0xff]
        %v676 = vld [vmem:[%s297 + $0x8b8] sm:$0xff]
        %v677 = vld [vmem:[%s297 + $0x8c0] sm:$0xff]
        %v678 = vld [vmem:[%s297 + $0x8c8] sm:$0xff]
        %v679 = vld [vmem:[%s297 + $0x8d0] sm:$0xff]
        %v680 = vld [vmem:[%s297 + $0x8d8] sm:$0xff]
        %v681 = vld [vmem:[%s297 + $0x8e0] sm:$0xff]
        %v682 = vld [vmem:[%s297 + $0x8e8] sm:$0xff]
        %v683 = vld [vmem:[%s297 + $0x8f0] sm:$0xff]
        %v684 = vld [vmem:[%s297 + $0x8f8] sm:$0xff]
        %v685 = vld [vmem:[%s297 + $0x900] sm:$0xff]
        %v686 = vld [vmem:[%s297 + $0x908] sm:$0xff]
        %v687 = vld [vmem:[%s297 + $0x910] sm:$0xff]
        %v688 = vld [vmem:[%s297 + $0x918] sm:$0xff]
        %v689 = vld [vmem:[%s297 + $0x920] sm:$0xff]
        %v690 = vld [vmem:[%s297 + $0x928] sm:$0xff]
        %v691 = vld [vmem:[%s297 + $0x930] sm:$0xff]
        %v692 = vld [vmem:[%s297 + $0x938] sm:$0xff]
        %v693 = vld [vmem:[%s297 + $0x940] sm:$0xff]
        %v694 = vld [vmem:[%s297 + $0x948] sm:$0xff]
        %v695 = vld [vmem:[%s297 + $0x950] sm:$0xff]
        %v696 = vld [vmem:[%s297 + $0x958] sm:$0xff]
        %v697 = vld [vmem:[%s297 + $0x960] sm:$0xff]
        %v698 = vld [vmem:[%s297 + $0x968] sm:$0xff]
        %v699 = vld [vmem:[%s297 + $0x970] sm:$0xff]
        %v700 = vld [vmem:[%s297 + $0x978] sm:$0xff]
        %v701 = vld [vmem:[%s297 + $0x980] sm:$0xff]
        %v702 = vld [vmem:[%s297 + $0x988] sm:$0xff]
        %v703 = vld [vmem:[%s297 + $0x990] sm:$0xff]
        %v704 = vld [vmem:[%s297 + $0x998] sm:$0xff]
        %v705 = vld [vmem:[%s297 + $0x9a0] sm:$0xff]
        %v706 = vld [vmem:[%s297 + $0x9a8] sm:$0xff]
        %v707 = vld [vmem:[%s297 + $0x9b0] sm:$0xff]
        %v708 = vld [vmem:[%s297 + $0x9b8] sm:$0xff]
        %v709 = vld [vmem:[%s297 + $0x9c0] sm:$0xff]
        %v710 = vld [vmem:[%s297 + $0x9c8] sm:$0xff]
        %v711 = vld [vmem:[%s297 + $0x9d0] sm:$0xff]
        %v712 = vld [vmem:[%s297 + $0x9d8] sm:$0xff]
        %v713 = vld [vmem:[%s297 + $0x9e0] sm:$0xff]
        %v714 = vld [vmem:[%s297 + $0x9e8] sm:$0xff]
        %v715 = vld [vmem:[%s297 + $0x9f0] sm:$0xff]
        %v716 = vld [vmem:[%s297 + $0x9f8] sm:$0xff]
        %v717 = vld [vmem:[%s306] sm:$0xff]
        %v718 = vld [vmem:[%s306 + $0x8] sm:$0x3]
        %v721 = vlaneseq
        %v722 = vshrl.u32 %v721, 7
        %v723 = vsub.s32 0, %v722
        %v724 = vrot.slane %v717, %v723
        %v725 = vlaneseq
        %v726 = vshrl.u32 %v725, 7
        %v727 = vsub.s32 1, %v726
        %v728 = vrot.slane %v717, %v727
        %v729 = vlaneseq
        %v730 = vshrl.u32 %v729, 7
        %v731 = vsub.s32 2, %v730
        %v732 = vrot.slane %v717, %v731
        %v733 = vlaneseq
        %v734 = vshrl.u32 %v733, 7
        %v735 = vsub.s32 3, %v734
        %v736 = vrot.slane %v717, %v735
        %v737 = vlaneseq
        %v738 = vshrl.u32 %v737, 7
        %v739 = vsub.s32 4, %v738
        %v740 = vrot.slane %v717, %v739
        %v741 = vlaneseq
        %v742 = vshrl.u32 %v741, 7
        %v743 = vsub.s32 5, %v742
        %v744 = vrot.slane %v717, %v743
        %v745 = vlaneseq
        %v746 = vshrl.u32 %v745, 7
        %v747 = vsub.s32 6, %v746
        %v748 = vrot.slane %v717, %v747
        %v749 = vlaneseq
        %v750 = vshrl.u32 %v749, 7
        %v751 = vsub.s32 7, %v750
        %v752 = vrot.slane %v717, %v751
        %v753 = vlaneseq
        %v754 = vshrl.u32 %v753, 7
        %v755 = vsub.s32 0, %v754
        %v756 = vrot.slane %v718, %v755
        %v757 = vlaneseq
        %v758 = vshrl.u32 %v757, 7
        %v759 = vsub.s32 1, %v758
        %v760 = vrot.slane %v718, %v759
        %v803 = vunpack.c.l.b16 %v365
        %v804 = vunpack.c.h.b16 %v365
        %v805 = vunpack.c.l.b16 %v366
        %v806 = vunpack.c.h.b16 %v366
        %v807 = vunpack.c.l.b16 %v367
        %v808 = vunpack.c.h.b16 %v367
        %v809 = vunpack.c.l.b16 %v368
        %v810 = vunpack.c.h.b16 %v368
        %v811 = vunpack.c.l.b16 %v369
        %v812 = vunpack.c.h.b16 %v369
        %v813 = vunpack.c.l.b16 %v370
        %v814 = vunpack.c.h.b16 %v370
        %v815 = vunpack.c.l.b16 %v371
        %v816 = vunpack.c.h.b16 %v371
        %v817 = vunpack.c.l.b16 %v372
        %v818 = vunpack.c.h.b16 %v372
        %v819 = vunpack.c.l.b16 %v373
        %v820 = vunpack.c.h.b16 %v373
        %v821 = vunpack.c.l.b16 %v374
        %v822 = vunpack.c.h.b16 %v374
        %v823 = vunpack.c.l.b16 %v375
        %v824 = vunpack.c.h.b16 %v375
        %v825 = vunpack.c.l.b16 %v376
        %v826 = vunpack.c.h.b16 %v376
        %v827 = vunpack.c.l.b16 %v377
        %v828 = vunpack.c.h.b16 %v377
        %v829 = vunpack.c.l.b16 %v378
        %v830 = vunpack.c.h.b16 %v378
        %v831 = vunpack.c.l.b16 %v379
        %v832 = vunpack.c.h.b16 %v379
        %v833 = vunpack.c.l.b16 %v380
        %v834 = vunpack.c.h.b16 %v380
        %v835 = vunpack.c.l.b16 %v381
        %v836 = vunpack.c.h.b16 %v381
        %v837 = vunpack.c.l.b16 %v382
        %v838 = vunpack.c.h.b16 %v382
        %v839 = vunpack.c.l.b16 %v383
        %v840 = vunpack.c.h.b16 %v383
        %v841 = vunpack.c.l.b16 %v384
        %v842 = vunpack.c.h.b16 %v384
        %v843 = vunpack.c.l.b16 %v385
        %v844 = vunpack.c.h.b16 %v385
        %v845 = vunpack.c.l.b16 %v386
        %v846 = vunpack.c.h.b16 %v386
        %v847 = vunpack.c.l.b16 %v387
        %v848 = vunpack.c.h.b16 %v387
        %v849 = vunpack.c.l.b16 %v388
        %v850 = vunpack.c.h.b16 %v388
        %v851 = vunpack.c.l.b16 %v389
        %v852 = vunpack.c.h.b16 %v389
        %v853 = vunpack.c.l.b16 %v390
        %v854 = vunpack.c.h.b16 %v390
        %v855 = vunpack.c.l.b16 %v391
        %v856 = vunpack.c.h.b16 %v391
        %v857 = vunpack.c.l.b16 %v392
        %v858 = vunpack.c.h.b16 %v392
        %v859 = vunpack.c.l.b16 %v393
        %v860 = vunpack.c.h.b16 %v393
        %v861 = vunpack.c.l.b16 %v394
        %v862 = vunpack.c.h.b16 %v394
        %v863 = vunpack.c.l.b16 %v395
        %v864 = vunpack.c.h.b16 %v395
        %v865 = vunpack.c.l.b16 %v396
        %v866 = vunpack.c.h.b16 %v396
        %v867 = vpack.c.b16 %v807, %v803
        %v868 = vpack.c.b16 %v808, %v804
        %v869 = vpack.c.b16 %v809, %v805
        %v870 = vpack.c.b16 %v810, %v806
        %v871 = vpack.c.b16 %v815, %v811
        %v872 = vpack.c.b16 %v816, %v812
        %v873 = vpack.c.b16 %v817, %v813
        %v874 = vpack.c.b16 %v818, %v814
        %v875 = vpack.c.b16 %v823, %v819
        %v876 = vpack.c.b16 %v824, %v820
        %v877 = vpack.c.b16 %v825, %v821
        %v878 = vpack.c.b16 %v826, %v822
        %v879 = vpack.c.b16 %v831, %v827
        %v880 = vpack.c.b16 %v832, %v828
        %v881 = vpack.c.b16 %v833, %v829
        %v882 = vpack.c.b16 %v834, %v830
        %v883 = vpack.c.b16 %v839, %v835
        %v884 = vpack.c.b16 %v840, %v836
        %v885 = vpack.c.b16 %v841, %v837
        %v886 = vpack.c.b16 %v842, %v838
        %v887 = vpack.c.b16 %v847, %v843
        %v888 = vpack.c.b16 %v848, %v844
        %v889 = vpack.c.b16 %v849, %v845
        %v890 = vpack.c.b16 %v850, %v846
        %v891 = vpack.c.b16 %v855, %v851
        %v892 = vpack.c.b16 %v856, %v852
        %v893 = vpack.c.b16 %v857, %v853
        %v894 = vpack.c.b16 %v858, %v854
        %v895 = vpack.c.b16 %v863, %v859
        %v896 = vpack.c.b16 %v864, %v860
        %v897 = vpack.c.b16 %v865, %v861
        %v898 = vpack.c.b16 %v866, %v862
        %v1251 = vunpack.c.l.b16 %v397
        %v1252 = vunpack.c.h.b16 %v397
        %v1253 = vunpack.c.l.b16 %v398
        %v1254 = vunpack.c.h.b16 %v398
        %v1255 = vunpack.c.l.b16 %v399
        %v1256 = vunpack.c.h.b16 %v399
        %v1257 = vunpack.c.l.b16 %v400
        %v1258 = vunpack.c.h.b16 %v400
        %v1259 = vunpack.c.l.b16 %v401
        %v1260 = vunpack.c.h.b16 %v401
        %v1261 = vunpack.c.l.b16 %v402
        %v1262 = vunpack.c.h.b16 %v402
        %v1263 = vunpack.c.l.b16 %v403
        %v1264 = vunpack.c.h.b16 %v403
        %v1265 = vunpack.c.l.b16 %v404
        %v1266 = vunpack.c.h.b16 %v404
        %v1267 = vunpack.c.l.b16 %v405
        %v1268 = vunpack.c.h.b16 %v405
        %v1269 = vunpack.c.l.b16 %v406
        %v1270 = vunpack.c.h.b16 %v406
        %v1271 = vunpack.c.l.b16 %v407
        %v1272 = vunpack.c.h.b16 %v407
        %v1273 = vunpack.c.l.b16 %v408
        %v1274 = vunpack.c.h.b16 %v408
        %v1275 = vunpack.c.l.b16 %v409
        %v1276 = vunpack.c.h.b16 %v409
        %v1277 = vunpack.c.l.b16 %v410
        %v1278 = vunpack.c.h.b16 %v410
        %v1279 = vunpack.c.l.b16 %v411
        %v1280 = vunpack.c.h.b16 %v411
        %v1281 = vunpack.c.l.b16 %v412
        %v1282 = vunpack.c.h.b16 %v412
        %v1283 = vunpack.c.l.b16 %v413
        %v1284 = vunpack.c.h.b16 %v413
        %v1285 = vunpack.c.l.b16 %v414
        %v1286 = vunpack.c.h.b16 %v414
        %v1287 = vunpack.c.l.b16 %v415
        %v1288 = vunpack.c.h.b16 %v415
        %v1289 = vunpack.c.l.b16 %v416
        %v1290 = vunpack.c.h.b16 %v416
        %v1291 = vunpack.c.l.b16 %v417
        %v1292 = vunpack.c.h.b16 %v417
        %v1293 = vunpack.c.l.b16 %v418
        %v1294 = vunpack.c.h.b16 %v418
        %v1295 = vunpack.c.l.b16 %v419
        %v1296 = vunpack.c.h.b16 %v419
        %v1297 = vunpack.c.l.b16 %v420
        %v1298 = vunpack.c.h.b16 %v420
        %v1299 = vunpack.c.l.b16 %v421
        %v1300 = vunpack.c.h.b16 %v421
        %v1301 = vunpack.c.l.b16 %v422
        %v1302 = vunpack.c.h.b16 %v422
        %v1303 = vunpack.c.l.b16 %v423
        %v1304 = vunpack.c.h.b16 %v423
        %v1305 = vunpack.c.l.b16 %v424
        %v1306 = vunpack.c.h.b16 %v424
        %v1307 = vunpack.c.l.b16 %v425
        %v1308 = vunpack.c.h.b16 %v425
        %v1309 = vunpack.c.l.b16 %v426
        %v1310 = vunpack.c.h.b16 %v426
        %v1311 = vunpack.c.l.b16 %v427
        %v1312 = vunpack.c.h.b16 %v427
        %v1313 = vunpack.c.l.b16 %v428
        %v1314 = vunpack.c.h.b16 %v428
        %v1315 = vunpack.c.l.b16 %v429
        %v1316 = vunpack.c.h.b16 %v429
        %v1317 = vunpack.c.l.b16 %v430
        %v1318 = vunpack.c.h.b16 %v430
        %v1319 = vunpack.c.l.b16 %v431
        %v1320 = vunpack.c.h.b16 %v431
        %v1321 = vunpack.c.l.b16 %v432
        %v1322 = vunpack.c.h.b16 %v432
        %v1323 = vunpack.c.l.b16 %v433
        %v1324 = vunpack.c.h.b16 %v433
        %v1325 = vunpack.c.l.b16 %v434
        %v1326 = vunpack.c.h.b16 %v434
        %v1327 = vunpack.c.l.b16 %v435
        %v1328 = vunpack.c.h.b16 %v435
        %v1329 = vunpack.c.l.b16 %v436
        %v1330 = vunpack.c.h.b16 %v436
        %v1331 = vunpack.c.l.b16 %v437
        %v1332 = vunpack.c.h.b16 %v437
        %v1333 = vunpack.c.l.b16 %v438
        %v1334 = vunpack.c.h.b16 %v438
        %v1335 = vunpack.c.l.b16 %v439
        %v1336 = vunpack.c.h.b16 %v439
        %v1337 = vunpack.c.l.b16 %v440
        %v1338 = vunpack.c.h.b16 %v440
        %v1339 = vunpack.c.l.b16 %v441
        %v1340 = vunpack.c.h.b16 %v441
        %v1341 = vunpack.c.l.b16 %v442
        %v1342 = vunpack.c.h.b16 %v442
        %v1343 = vunpack.c.l.b16 %v443
        %v1344 = vunpack.c.h.b16 %v443
        %v1345 = vunpack.c.l.b16 %v444
        %v1346 = vunpack.c.h.b16 %v444
        %v1347 = vunpack.c.l.b16 %v445
        %v1348 = vunpack.c.h.b16 %v445
        %v1349 = vunpack.c.l.b16 %v446
        %v1350 = vunpack.c.h.b16 %v446
        %v1351 = vunpack.c.l.b16 %v447
        %v1352 = vunpack.c.h.b16 %v447
        %v1353 = vunpack.c.l.b16 %v448
        %v1354 = vunpack.c.h.b16 %v448
        %v1355 = vunpack.c.l.b16 %v449
        %v1356 = vunpack.c.h.b16 %v449
        %v1357 = vunpack.c.l.b16 %v450
        %v1358 = vunpack.c.h.b16 %v450
        %v1359 = vunpack.c.l.b16 %v451
        %v1360 = vunpack.c.h.b16 %v451
        %v1361 = vunpack.c.l.b16 %v452
        %v1362 = vunpack.c.h.b16 %v452
        %v1363 = vunpack.c.l.b16 %v453
        %v1364 = vunpack.c.h.b16 %v453
        %v1365 = vunpack.c.l.b16 %v454
        %v1366 = vunpack.c.h.b16 %v454
        %v1367 = vunpack.c.l.b16 %v455
        %v1368 = vunpack.c.h.b16 %v455
        %v1369 = vunpack.c.l.b16 %v456
        %v1370 = vunpack.c.h.b16 %v456
        %v1371 = vunpack.c.l.b16 %v457
        %v1372 = vunpack.c.h.b16 %v457
        %v1373 = vunpack.c.l.b16 %v458
        %v1374 = vunpack.c.h.b16 %v458
        %v1375 = vunpack.c.l.b16 %v459
        %v1376 = vunpack.c.h.b16 %v459
        %v1377 = vunpack.c.l.b16 %v460
        %v1378 = vunpack.c.h.b16 %v460
        %v1379 = vunpack.c.l.b16 %v461
        %v1380 = vunpack.c.h.b16 %v461
        %v1381 = vunpack.c.l.b16 %v462
        %v1382 = vunpack.c.h.b16 %v462
        %v1383 = vunpack.c.l.b16 %v463
        %v1384 = vunpack.c.h.b16 %v463
        %v1385 = vunpack.c.l.b16 %v464
        %v1386 = vunpack.c.h.b16 %v464
        %v1387 = vunpack.c.l.b16 %v465
        %v1388 = vunpack.c.h.b16 %v465
        %v1389 = vunpack.c.l.b16 %v466
        %v1390 = vunpack.c.h.b16 %v466
        %v1391 = vunpack.c.l.b16 %v467
        %v1392 = vunpack.c.h.b16 %v467
        %v1393 = vunpack.c.l.b16 %v468
        %v1394 = vunpack.c.h.b16 %v468
        %v1395 = vunpack.c.l.b16 %v469
        %v1396 = vunpack.c.h.b16 %v469
        %v1397 = vunpack.c.l.b16 %v470
        %v1398 = vunpack.c.h.b16 %v470
        %v1399 = vunpack.c.l.b16 %v471
        %v1400 = vunpack.c.h.b16 %v471
        %v1401 = vunpack.c.l.b16 %v472
        %v1402 = vunpack.c.h.b16 %v472
        %v1403 = vunpack.c.l.b16 %v473
        %v1404 = vunpack.c.h.b16 %v473
        %v1405 = vunpack.c.l.b16 %v474
        %v1406 = vunpack.c.h.b16 %v474
        %v1407 = vunpack.c.l.b16 %v475
        %v1408 = vunpack.c.h.b16 %v475
        %v1409 = vunpack.c.l.b16 %v476
        %v1410 = vunpack.c.h.b16 %v476
        %v1411 = vunpack.c.l.b16 %v477
        %v1412 = vunpack.c.h.b16 %v477
        %v1413 = vunpack.c.l.b16 %v478
        %v1414 = vunpack.c.h.b16 %v478
        %v1415 = vunpack.c.l.b16 %v479
        %v1416 = vunpack.c.h.b16 %v479
        %v1417 = vunpack.c.l.b16 %v480
        %v1418 = vunpack.c.h.b16 %v480
        %v1419 = vunpack.c.l.b16 %v481
        %v1420 = vunpack.c.h.b16 %v481
        %v1421 = vunpack.c.l.b16 %v482
        %v1422 = vunpack.c.h.b16 %v482
        %v1423 = vunpack.c.l.b16 %v483
        %v1424 = vunpack.c.h.b16 %v483
        %v1425 = vunpack.c.l.b16 %v484
        %v1426 = vunpack.c.h.b16 %v484
        %v1427 = vunpack.c.l.b16 %v485
        %v1428 = vunpack.c.h.b16 %v485
        %v1429 = vunpack.c.l.b16 %v486
        %v1430 = vunpack.c.h.b16 %v486
        %v1431 = vunpack.c.l.b16 %v487
        %v1432 = vunpack.c.h.b16 %v487
        %v1433 = vunpack.c.l.b16 %v488
        %v1434 = vunpack.c.h.b16 %v488
        %v1435 = vunpack.c.l.b16 %v489
        %v1436 = vunpack.c.h.b16 %v489
        %v1437 = vunpack.c.l.b16 %v490
        %v1438 = vunpack.c.h.b16 %v490
        %v1439 = vunpack.c.l.b16 %v491
        %v1440 = vunpack.c.h.b16 %v491
        %v1441 = vunpack.c.l.b16 %v492
        %v1442 = vunpack.c.h.b16 %v492
        %v1443 = vunpack.c.l.b16 %v493
        %v1444 = vunpack.c.h.b16 %v493
        %v1445 = vunpack.c.l.b16 %v494
        %v1446 = vunpack.c.h.b16 %v494
        %v1447 = vunpack.c.l.b16 %v495
        %v1448 = vunpack.c.h.b16 %v495
        %v1449 = vunpack.c.l.b16 %v496
        %v1450 = vunpack.c.h.b16 %v496
        %v1451 = vunpack.c.l.b16 %v497
        %v1452 = vunpack.c.h.b16 %v497
        %v1453 = vunpack.c.l.b16 %v498
        %v1454 = vunpack.c.h.b16 %v498
        %v1455 = vunpack.c.l.b16 %v499
        %v1456 = vunpack.c.h.b16 %v499
        %v1457 = vunpack.c.l.b16 %v500
        %v1458 = vunpack.c.h.b16 %v500
        %v1459 = vunpack.c.l.b16 %v501
        %v1460 = vunpack.c.h.b16 %v501
        %v1461 = vunpack.c.l.b16 %v502
        %v1462 = vunpack.c.h.b16 %v502
        %v1463 = vunpack.c.l.b16 %v503
        %v1464 = vunpack.c.h.b16 %v503
        %v1465 = vunpack.c.l.b16 %v504
        %v1466 = vunpack.c.h.b16 %v504
        %v1467 = vunpack.c.l.b16 %v505
        %v1468 = vunpack.c.h.b16 %v505
        %v1469 = vunpack.c.l.b16 %v506
        %v1470 = vunpack.c.h.b16 %v506
        %v1471 = vunpack.c.l.b16 %v507
        %v1472 = vunpack.c.h.b16 %v507
        %v1473 = vunpack.c.l.b16 %v508
        %v1474 = vunpack.c.h.b16 %v508
        %v1475 = vunpack.c.l.b16 %v509
        %v1476 = vunpack.c.h.b16 %v509
        %v1477 = vunpack.c.l.b16 %v510
        %v1478 = vunpack.c.h.b16 %v510
        %v1479 = vunpack.c.l.b16 %v511
        %v1480 = vunpack.c.h.b16 %v511
        %v1481 = vunpack.c.l.b16 %v512
        %v1482 = vunpack.c.h.b16 %v512
        %v1483 = vunpack.c.l.b16 %v513
        %v1484 = vunpack.c.h.b16 %v513
        %v1485 = vunpack.c.l.b16 %v514
        %v1486 = vunpack.c.h.b16 %v514
        %v1487 = vunpack.c.l.b16 %v515
        %v1488 = vunpack.c.h.b16 %v515
        %v1489 = vunpack.c.l.b16 %v516
        %v1490 = vunpack.c.h.b16 %v516
        %v1491 = vunpack.c.l.b16 %v517
        %v1492 = vunpack.c.h.b16 %v517
        %v1493 = vunpack.c.l.b16 %v518
        %v1494 = vunpack.c.h.b16 %v518
        %v1495 = vunpack.c.l.b16 %v519
        %v1496 = vunpack.c.h.b16 %v519
        %v1497 = vunpack.c.l.b16 %v520
        %v1498 = vunpack.c.h.b16 %v520
        %v1499 = vunpack.c.l.b16 %v521
        %v1500 = vunpack.c.h.b16 %v521
        %v1501 = vunpack.c.l.b16 %v522
        %v1502 = vunpack.c.h.b16 %v522
        %v1503 = vunpack.c.l.b16 %v523
        %v1504 = vunpack.c.h.b16 %v523
        %v1505 = vunpack.c.l.b16 %v524
        %v1506 = vunpack.c.h.b16 %v524
        %v1507 = vunpack.c.l.b16 %v525
        %v1508 = vunpack.c.h.b16 %v525
        %v1509 = vunpack.c.l.b16 %v526
        %v1510 = vunpack.c.h.b16 %v526
        %v1511 = vunpack.c.l.b16 %v527
        %v1512 = vunpack.c.h.b16 %v527
        %v1513 = vunpack.c.l.b16 %v528
        %v1514 = vunpack.c.h.b16 %v528
        %v1515 = vunpack.c.l.b16 %v529
        %v1516 = vunpack.c.h.b16 %v529
        %v1517 = vunpack.c.l.b16 %v530
        %v1518 = vunpack.c.h.b16 %v530
        %v1519 = vunpack.c.l.b16 %v531
        %v1520 = vunpack.c.h.b16 %v531
        %v1521 = vunpack.c.l.b16 %v532
        %v1522 = vunpack.c.h.b16 %v532
        %v1523 = vunpack.c.l.b16 %v533
        %v1524 = vunpack.c.h.b16 %v533
        %v1525 = vunpack.c.l.b16 %v534
        %v1526 = vunpack.c.h.b16 %v534
        %v1527 = vunpack.c.l.b16 %v535
        %v1528 = vunpack.c.h.b16 %v535
        %v1529 = vunpack.c.l.b16 %v536
        %v1530 = vunpack.c.h.b16 %v536
        %v1531 = vunpack.c.l.b16 %v537
        %v1532 = vunpack.c.h.b16 %v537
        %v1533 = vunpack.c.l.b16 %v538
        %v1534 = vunpack.c.h.b16 %v538
        %v1535 = vunpack.c.l.b16 %v539
        %v1536 = vunpack.c.h.b16 %v539
        %v1537 = vunpack.c.l.b16 %v540
        %v1538 = vunpack.c.h.b16 %v540
        %v1539 = vunpack.c.l.b16 %v541
        %v1540 = vunpack.c.h.b16 %v541
        %v1541 = vunpack.c.l.b16 %v542
        %v1542 = vunpack.c.h.b16 %v542
        %v1543 = vunpack.c.l.b16 %v543
        %v1544 = vunpack.c.h.b16 %v543
        %v1545 = vunpack.c.l.b16 %v544
        %v1546 = vunpack.c.h.b16 %v544
        %v1547 = vunpack.c.l.b16 %v545
        %v1548 = vunpack.c.h.b16 %v545
        %v1549 = vunpack.c.l.b16 %v546
        %v1550 = vunpack.c.h.b16 %v546
        %v1551 = vunpack.c.l.b16 %v547
        %v1552 = vunpack.c.h.b16 %v547
        %v1553 = vunpack.c.l.b16 %v548
        %v1554 = vunpack.c.h.b16 %v548
        %v1555 = vunpack.c.l.b16 %v549
        %v1556 = vunpack.c.h.b16 %v549
        %v1557 = vunpack.c.l.b16 %v550
        %v1558 = vunpack.c.h.b16 %v550
        %v1559 = vunpack.c.l.b16 %v551
        %v1560 = vunpack.c.h.b16 %v551
        %v1561 = vunpack.c.l.b16 %v552
        %v1562 = vunpack.c.h.b16 %v552
        %v1563 = vunpack.c.l.b16 %v553
        %v1564 = vunpack.c.h.b16 %v553
        %v1565 = vunpack.c.l.b16 %v554
        %v1566 = vunpack.c.h.b16 %v554
        %v1567 = vunpack.c.l.b16 %v555
        %v1568 = vunpack.c.h.b16 %v555
        %v1569 = vunpack.c.l.b16 %v556
        %v1570 = vunpack.c.h.b16 %v556
        %v1571 = vunpack.c.l.b16 %v557
        %v1572 = vunpack.c.h.b16 %v557
        %v1573 = vunpack.c.l.b16 %v558
        %v1574 = vunpack.c.h.b16 %v558
        %v1575 = vunpack.c.l.b16 %v559
        %v1576 = vunpack.c.h.b16 %v559
        %v1577 = vunpack.c.l.b16 %v560
        %v1578 = vunpack.c.h.b16 %v560
        %v1579 = vunpack.c.l.b16 %v561
        %v1580 = vunpack.c.h.b16 %v561
        %v1581 = vunpack.c.l.b16 %v562
        %v1582 = vunpack.c.h.b16 %v562
        %v1583 = vunpack.c.l.b16 %v563
        %v1584 = vunpack.c.h.b16 %v563
        %v1585 = vunpack.c.l.b16 %v564
        %v1586 = vunpack.c.h.b16 %v564
        %v1587 = vunpack.c.l.b16 %v565
        %v1588 = vunpack.c.h.b16 %v565
        %v1589 = vunpack.c.l.b16 %v566
        %v1590 = vunpack.c.h.b16 %v566
        %v1591 = vunpack.c.l.b16 %v567
        %v1592 = vunpack.c.h.b16 %v567
        %v1593 = vunpack.c.l.b16 %v568
        %v1594 = vunpack.c.h.b16 %v568
        %v1595 = vunpack.c.l.b16 %v569
        %v1596 = vunpack.c.h.b16 %v569
        %v1597 = vunpack.c.l.b16 %v570
        %v1598 = vunpack.c.h.b16 %v570
        %v1599 = vunpack.c.l.b16 %v571
        %v1600 = vunpack.c.h.b16 %v571
        %v1601 = vunpack.c.l.b16 %v572
        %v1602 = vunpack.c.h.b16 %v572
        %v1603 = vunpack.c.l.b16 %v573
        %v1604 = vunpack.c.h.b16 %v573
        %v1605 = vunpack.c.l.b16 %v574
        %v1606 = vunpack.c.h.b16 %v574
        %v1607 = vunpack.c.l.b16 %v575
        %v1608 = vunpack.c.h.b16 %v575
        %v1609 = vunpack.c.l.b16 %v576
        %v1610 = vunpack.c.h.b16 %v576
        %v1611 = vunpack.c.l.b16 %v577
        %v1612 = vunpack.c.h.b16 %v577
        %v1613 = vunpack.c.l.b16 %v578
        %v1614 = vunpack.c.h.b16 %v578
        %v1615 = vunpack.c.l.b16 %v579
        %v1616 = vunpack.c.h.b16 %v579
        %v1617 = vunpack.c.l.b16 %v580
        %v1618 = vunpack.c.h.b16 %v580
        %v1619 = vunpack.c.l.b16 %v581
        %v1620 = vunpack.c.h.b16 %v581
        %v1621 = vunpack.c.l.b16 %v582
        %v1622 = vunpack.c.h.b16 %v582
        %v1623 = vunpack.c.l.b16 %v583
        %v1624 = vunpack.c.h.b16 %v583
        %v1625 = vunpack.c.l.b16 %v584
        %v1626 = vunpack.c.h.b16 %v584
        %v1627 = vunpack.c.l.b16 %v585
        %v1628 = vunpack.c.h.b16 %v585
        %v1629 = vunpack.c.l.b16 %v586
        %v1630 = vunpack.c.h.b16 %v586
        %v1631 = vunpack.c.l.b16 %v587
        %v1632 = vunpack.c.h.b16 %v587
        %v1633 = vunpack.c.l.b16 %v588
        %v1634 = vunpack.c.h.b16 %v588
        %v1635 = vunpack.c.l.b16 %v589
        %v1636 = vunpack.c.h.b16 %v589
        %v1637 = vunpack.c.l.b16 %v590
        %v1638 = vunpack.c.h.b16 %v590
        %v1639 = vunpack.c.l.b16 %v591
        %v1640 = vunpack.c.h.b16 %v591
        %v1641 = vunpack.c.l.b16 %v592
        %v1642 = vunpack.c.h.b16 %v592
        %v1643 = vunpack.c.l.b16 %v593
        %v1644 = vunpack.c.h.b16 %v593
        %v1645 = vunpack.c.l.b16 %v594
        %v1646 = vunpack.c.h.b16 %v594
        %v1647 = vunpack.c.l.b16 %v595
        %v1648 = vunpack.c.h.b16 %v595
        %v1649 = vunpack.c.l.b16 %v596
        %v1650 = vunpack.c.h.b16 %v596
        %v1651 = vunpack.c.l.b16 %v597
        %v1652 = vunpack.c.h.b16 %v597
        %v1653 = vunpack.c.l.b16 %v598
        %v1654 = vunpack.c.h.b16 %v598
        %v1655 = vunpack.c.l.b16 %v599
        %v1656 = vunpack.c.h.b16 %v599
        %v1657 = vunpack.c.l.b16 %v600
        %v1658 = vunpack.c.h.b16 %v600
        %v1659 = vunpack.c.l.b16 %v601
        %v1660 = vunpack.c.h.b16 %v601
        %v1661 = vunpack.c.l.b16 %v602
        %v1662 = vunpack.c.h.b16 %v602
        %v1663 = vunpack.c.l.b16 %v603
        %v1664 = vunpack.c.h.b16 %v603
        %v1665 = vunpack.c.l.b16 %v604
        %v1666 = vunpack.c.h.b16 %v604
        %v1667 = vunpack.c.l.b16 %v605
        %v1668 = vunpack.c.h.b16 %v605
        %v1669 = vunpack.c.l.b16 %v606
        %v1670 = vunpack.c.h.b16 %v606
        %v1671 = vunpack.c.l.b16 %v607
        %v1672 = vunpack.c.h.b16 %v607
        %v1673 = vunpack.c.l.b16 %v608
        %v1674 = vunpack.c.h.b16 %v608
        %v1675 = vunpack.c.l.b16 %v609
        %v1676 = vunpack.c.h.b16 %v609
        %v1677 = vunpack.c.l.b16 %v610
        %v1678 = vunpack.c.h.b16 %v610
        %v1679 = vunpack.c.l.b16 %v611
        %v1680 = vunpack.c.h.b16 %v611
        %v1681 = vunpack.c.l.b16 %v612
        %v1682 = vunpack.c.h.b16 %v612
        %v1683 = vunpack.c.l.b16 %v613
        %v1684 = vunpack.c.h.b16 %v613
        %v1685 = vunpack.c.l.b16 %v614
        %v1686 = vunpack.c.h.b16 %v614
        %v1687 = vunpack.c.l.b16 %v615
        %v1688 = vunpack.c.h.b16 %v615
        %v1689 = vunpack.c.l.b16 %v616
        %v1690 = vunpack.c.h.b16 %v616
        %v1691 = vunpack.c.l.b16 %v617
        %v1692 = vunpack.c.h.b16 %v617
        %v1693 = vunpack.c.l.b16 %v618
        %v1694 = vunpack.c.h.b16 %v618
        %v1695 = vunpack.c.l.b16 %v619
        %v1696 = vunpack.c.h.b16 %v619
        %v1697 = vunpack.c.l.b16 %v620
        %v1698 = vunpack.c.h.b16 %v620
        %v1699 = vunpack.c.l.b16 %v621
        %v1700 = vunpack.c.h.b16 %v621
        %v1701 = vunpack.c.l.b16 %v622
        %v1702 = vunpack.c.h.b16 %v622
        %v1703 = vunpack.c.l.b16 %v623
        %v1704 = vunpack.c.h.b16 %v623
        %v1705 = vunpack.c.l.b16 %v624
        %v1706 = vunpack.c.h.b16 %v624
        %v1707 = vunpack.c.l.b16 %v625
        %v1708 = vunpack.c.h.b16 %v625
        %v1709 = vunpack.c.l.b16 %v626
        %v1710 = vunpack.c.h.b16 %v626
        %v1711 = vunpack.c.l.b16 %v627
        %v1712 = vunpack.c.h.b16 %v627
        %v1713 = vunpack.c.l.b16 %v628
        %v1714 = vunpack.c.h.b16 %v628
        %v1715 = vunpack.c.l.b16 %v629
        %v1716 = vunpack.c.h.b16 %v629
        %v1717 = vunpack.c.l.b16 %v630
        %v1718 = vunpack.c.h.b16 %v630
        %v1719 = vunpack.c.l.b16 %v631
        %v1720 = vunpack.c.h.b16 %v631
        %v1721 = vunpack.c.l.b16 %v632
        %v1722 = vunpack.c.h.b16 %v632
        %v1723 = vunpack.c.l.b16 %v633
        %v1724 = vunpack.c.h.b16 %v633
        %v1725 = vunpack.c.l.b16 %v634
        %v1726 = vunpack.c.h.b16 %v634
        %v1727 = vunpack.c.l.b16 %v635
        %v1728 = vunpack.c.h.b16 %v635
        %v1729 = vunpack.c.l.b16 %v636
        %v1730 = vunpack.c.h.b16 %v636
        %v1731 = vunpack.c.l.b16 %v637
        %v1732 = vunpack.c.h.b16 %v637
        %v1733 = vunpack.c.l.b16 %v638
        %v1734 = vunpack.c.h.b16 %v638
        %v1735 = vunpack.c.l.b16 %v639
        %v1736 = vunpack.c.h.b16 %v639
        %v1737 = vunpack.c.l.b16 %v640
        %v1738 = vunpack.c.h.b16 %v640
        %v1739 = vunpack.c.l.b16 %v641
        %v1740 = vunpack.c.h.b16 %v641
        %v1741 = vunpack.c.l.b16 %v642
        %v1742 = vunpack.c.h.b16 %v642
        %v1743 = vunpack.c.l.b16 %v643
        %v1744 = vunpack.c.h.b16 %v643
        %v1745 = vunpack.c.l.b16 %v644
        %v1746 = vunpack.c.h.b16 %v644
        %v1747 = vunpack.c.l.b16 %v645
        %v1748 = vunpack.c.h.b16 %v645
        %v1749 = vunpack.c.l.b16 %v646
        %v1750 = vunpack.c.h.b16 %v646
        %v1751 = vunpack.c.l.b16 %v647
        %v1752 = vunpack.c.h.b16 %v647
        %v1753 = vunpack.c.l.b16 %v648
        %v1754 = vunpack.c.h.b16 %v648
        %v1755 = vunpack.c.l.b16 %v649
        %v1756 = vunpack.c.h.b16 %v649
        %v1757 = vunpack.c.l.b16 %v650
        %v1758 = vunpack.c.h.b16 %v650
        %v1759 = vunpack.c.l.b16 %v651
        %v1760 = vunpack.c.h.b16 %v651
        %v1761 = vunpack.c.l.b16 %v652
        %v1762 = vunpack.c.h.b16 %v652
        %v1763 = vunpack.c.l.b16 %v653
        %v1764 = vunpack.c.h.b16 %v653
        %v1765 = vunpack.c.l.b16 %v654
        %v1766 = vunpack.c.h.b16 %v654
        %v1767 = vunpack.c.l.b16 %v655
        %v1768 = vunpack.c.h.b16 %v655
        %v1769 = vunpack.c.l.b16 %v656
        %v1770 = vunpack.c.h.b16 %v656
        %v1771 = vunpack.c.l.b16 %v657
        %v1772 = vunpack.c.h.b16 %v657
        %v1773 = vunpack.c.l.b16 %v658
        %v1774 = vunpack.c.h.b16 %v658
        %v1775 = vunpack.c.l.b16 %v659
        %v1776 = vunpack.c.h.b16 %v659
        %v1777 = vunpack.c.l.b16 %v660
        %v1778 = vunpack.c.h.b16 %v660
        %v1779 = vunpack.c.l.b16 %v661
        %v1780 = vunpack.c.h.b16 %v661
        %v1781 = vunpack.c.l.b16 %v662
        %v1782 = vunpack.c.h.b16 %v662
        %v1783 = vunpack.c.l.b16 %v663
        %v1784 = vunpack.c.h.b16 %v663
        %v1785 = vunpack.c.l.b16 %v664
        %v1786 = vunpack.c.h.b16 %v664
        %v1787 = vunpack.c.l.b16 %v665
        %v1788 = vunpack.c.h.b16 %v665
        %v1789 = vunpack.c.l.b16 %v666
        %v1790 = vunpack.c.h.b16 %v666
        %v1791 = vunpack.c.l.b16 %v667
        %v1792 = vunpack.c.h.b16 %v667
        %v1793 = vunpack.c.l.b16 %v668
        %v1794 = vunpack.c.h.b16 %v668
        %v1795 = vunpack.c.l.b16 %v669
        %v1796 = vunpack.c.h.b16 %v669
        %v1797 = vunpack.c.l.b16 %v670
        %v1798 = vunpack.c.h.b16 %v670
        %v1799 = vunpack.c.l.b16 %v671
        %v1800 = vunpack.c.h.b16 %v671
        %v1801 = vunpack.c.l.b16 %v672
        %v1802 = vunpack.c.h.b16 %v672
        %v1803 = vunpack.c.l.b16 %v673
        %v1804 = vunpack.c.h.b16 %v673
        %v1805 = vunpack.c.l.b16 %v674
        %v1806 = vunpack.c.h.b16 %v674
        %v1807 = vunpack.c.l.b16 %v675
        %v1808 = vunpack.c.h.b16 %v675
        %v1809 = vunpack.c.l.b16 %v676
        %v1810 = vunpack.c.h.b16 %v676
        %v1811 = vunpack.c.l.b16 %v677
        %v1812 = vunpack.c.h.b16 %v677
        %v1813 = vunpack.c.l.b16 %v678
        %v1814 = vunpack.c.h.b16 %v678
        %v1815 = vunpack.c.l.b16 %v679
        %v1816 = vunpack.c.h.b16 %v679
        %v1817 = vunpack.c.l.b16 %v680
        %v1818 = vunpack.c.h.b16 %v680
        %v1819 = vunpack.c.l.b16 %v681
        %v1820 = vunpack.c.h.b16 %v681
        %v1821 = vunpack.c.l.b16 %v682
        %v1822 = vunpack.c.h.b16 %v682
        %v1823 = vunpack.c.l.b16 %v683
        %v1824 = vunpack.c.h.b16 %v683
        %v1825 = vunpack.c.l.b16 %v684
        %v1826 = vunpack.c.h.b16 %v684
        %v1827 = vunpack.c.l.b16 %v685
        %v1828 = vunpack.c.h.b16 %v685
        %v1829 = vunpack.c.l.b16 %v686
        %v1830 = vunpack.c.h.b16 %v686
        %v1831 = vunpack.c.l.b16 %v687
        %v1832 = vunpack.c.h.b16 %v687
        %v1833 = vunpack.c.l.b16 %v688
        %v1834 = vunpack.c.h.b16 %v688
        %v1835 = vunpack.c.l.b16 %v689
        %v1836 = vunpack.c.h.b16 %v689
        %v1837 = vunpack.c.l.b16 %v690
        %v1838 = vunpack.c.h.b16 %v690
        %v1839 = vunpack.c.l.b16 %v691
        %v1840 = vunpack.c.h.b16 %v691
        %v1841 = vunpack.c.l.b16 %v692
        %v1842 = vunpack.c.h.b16 %v692
        %v1843 = vunpack.c.l.b16 %v693
        %v1844 = vunpack.c.h.b16 %v693
        %v1845 = vunpack.c.l.b16 %v694
        %v1846 = vunpack.c.h.b16 %v694
        %v1847 = vunpack.c.l.b16 %v695
        %v1848 = vunpack.c.h.b16 %v695
        %v1849 = vunpack.c.l.b16 %v696
        %v1850 = vunpack.c.h.b16 %v696
        %v1851 = vunpack.c.l.b16 %v697
        %v1852 = vunpack.c.h.b16 %v697
        %v1853 = vunpack.c.l.b16 %v698
        %v1854 = vunpack.c.h.b16 %v698
        %v1855 = vunpack.c.l.b16 %v699
        %v1856 = vunpack.c.h.b16 %v699
        %v1857 = vunpack.c.l.b16 %v700
        %v1858 = vunpack.c.h.b16 %v700
        %v1859 = vunpack.c.l.b16 %v701
        %v1860 = vunpack.c.h.b16 %v701
        %v1861 = vunpack.c.l.b16 %v702
        %v1862 = vunpack.c.h.b16 %v702
        %v1863 = vunpack.c.l.b16 %v703
        %v1864 = vunpack.c.h.b16 %v703
        %v1865 = vunpack.c.l.b16 %v704
        %v1866 = vunpack.c.h.b16 %v704
        %v1867 = vunpack.c.l.b16 %v705
        %v1868 = vunpack.c.h.b16 %v705
        %v1869 = vunpack.c.l.b16 %v706
        %v1870 = vunpack.c.h.b16 %v706
        %v1871 = vunpack.c.l.b16 %v707
        %v1872 = vunpack.c.h.b16 %v707
        %v1873 = vunpack.c.l.b16 %v708
        %v1874 = vunpack.c.h.b16 %v708
        %v1875 = vunpack.c.l.b16 %v709
        %v1876 = vunpack.c.h.b16 %v709
        %v1877 = vunpack.c.l.b16 %v710
        %v1878 = vunpack.c.h.b16 %v710
        %v1879 = vunpack.c.l.b16 %v711
        %v1880 = vunpack.c.h.b16 %v711
        %v1881 = vunpack.c.l.b16 %v712
        %v1882 = vunpack.c.h.b16 %v712
        %v1883 = vunpack.c.l.b16 %v713
        %v1884 = vunpack.c.h.b16 %v713
        %v1885 = vunpack.c.l.b16 %v714
        %v1886 = vunpack.c.h.b16 %v714
        %v1887 = vunpack.c.l.b16 %v715
        %v1888 = vunpack.c.h.b16 %v715
        %v1889 = vunpack.c.l.b16 %v716
        %v1890 = vunpack.c.h.b16 %v716
        %v1891 = vpack.c.b16 %v1261, %v1251
        %v1892 = vpack.c.b16 %v1262, %v1252
        %v1893 = vpack.c.b16 %v1263, %v1253
        %v1894 = vpack.c.b16 %v1264, %v1254
        %v1895 = vpack.c.b16 %v1265, %v1255
        %v1896 = vpack.c.b16 %v1266, %v1256
        %v1897 = vpack.c.b16 %v1267, %v1257
        %v1898 = vpack.c.b16 %v1268, %v1258
        %v1899 = vpack.c.b16 %v1269, %v1259
        %v1900 = vpack.c.b16 %v1270, %v1260
        %v1901 = vpack.c.b16 %v1281, %v1271
        %v1902 = vpack.c.b16 %v1282, %v1272
        %v1903 = vpack.c.b16 %v1283, %v1273
        %v1904 = vpack.c.b16 %v1284, %v1274
        %v1905 = vpack.c.b16 %v1285, %v1275
        %v1906 = vpack.c.b16 %v1286, %v1276
        %v1907 = vpack.c.b16 %v1287, %v1277
        %v1908 = vpack.c.b16 %v1288, %v1278
        %v1909 = vpack.c.b16 %v1289, %v1279
        %v1910 = vpack.c.b16 %v1290, %v1280
        %v1911 = vpack.c.b16 %v1301, %v1291
        %v1912 = vpack.c.b16 %v1302, %v1292
        %v1913 = vpack.c.b16 %v1303, %v1293
        %v1914 = vpack.c.b16 %v1304, %v1294
        %v1915 = vpack.c.b16 %v1305, %v1295
        %v1916 = vpack.c.b16 %v1306, %v1296
        %v1917 = vpack.c.b16 %v1307, %v1297
        %v1918 = vpack.c.b16 %v1308, %v1298
        %v1919 = vpack.c.b16 %v1309, %v1299
        %v1920 = vpack.c.b16 %v1310, %v1300
        %v1921 = vpack.c.b16 %v1321, %v1311
        %v1922 = vpack.c.b16 %v1322, %v1312
        %v1923 = vpack.c.b16 %v1323, %v1313
        %v1924 = vpack.c.b16 %v1324, %v1314
        %v1925 = vpack.c.b16 %v1325, %v1315
        %v1926 = vpack.c.b16 %v1326, %v1316
        %v1927 = vpack.c.b16 %v1327, %v1317
        %v1928 = vpack.c.b16 %v1328, %v1318
        %v1929 = vpack.c.b16 %v1329, %v1319
        %v1930 = vpack.c.b16 %v1330, %v1320
        %v1931 = vpack.c.b16 %v1341, %v1331
        %v1932 = vpack.c.b16 %v1342, %v1332
        %v1933 = vpack.c.b16 %v1343, %v1333
        %v1934 = vpack.c.b16 %v1344, %v1334
        %v1935 = vpack.c.b16 %v1345, %v1335
        %v1936 = vpack.c.b16 %v1346, %v1336
        %v1937 = vpack.c.b16 %v1347, %v1337
        %v1938 = vpack.c.b16 %v1348, %v1338
        %v1939 = vpack.c.b16 %v1349, %v1339
        %v1940 = vpack.c.b16 %v1350, %v1340
        %v1941 = vpack.c.b16 %v1361, %v1351
        %v1942 = vpack.c.b16 %v1362, %v1352
        %v1943 = vpack.c.b16 %v1363, %v1353
        %v1944 = vpack.c.b16 %v1364, %v1354
        %v1945 = vpack.c.b16 %v1365, %v1355
        %v1946 = vpack.c.b16 %v1366, %v1356
        %v1947 = vpack.c.b16 %v1367, %v1357
        %v1948 = vpack.c.b16 %v1368, %v1358
        %v1949 = vpack.c.b16 %v1369, %v1359
        %v1950 = vpack.c.b16 %v1370, %v1360
        %v1951 = vpack.c.b16 %v1381, %v1371
        %v1952 = vpack.c.b16 %v1382, %v1372
        %v1953 = vpack.c.b16 %v1383, %v1373
        %v1954 = vpack.c.b16 %v1384, %v1374
        %v1955 = vpack.c.b16 %v1385, %v1375
        %v1956 = vpack.c.b16 %v1386, %v1376
        %v1957 = vpack.c.b16 %v1387, %v1377
        %v1958 = vpack.c.b16 %v1388, %v1378
        %v1959 = vpack.c.b16 %v1389, %v1379
        %v1960 = vpack.c.b16 %v1390, %v1380
        %v1961 = vpack.c.b16 %v1401, %v1391
        %v1962 = vpack.c.b16 %v1402, %v1392
        %v1963 = vpack.c.b16 %v1403, %v1393
        %v1964 = vpack.c.b16 %v1404, %v1394
        %v1965 = vpack.c.b16 %v1405, %v1395
        %v1966 = vpack.c.b16 %v1406, %v1396
        %v1967 = vpack.c.b16 %v1407, %v1397
        %v1968 = vpack.c.b16 %v1408, %v1398
        %v1969 = vpack.c.b16 %v1409, %v1399
        %v1970 = vpack.c.b16 %v1410, %v1400
        %v1971 = vpack.c.b16 %v1421, %v1411
        %v1972 = vpack.c.b16 %v1422, %v1412
        %v1973 = vpack.c.b16 %v1423, %v1413
        %v1974 = vpack.c.b16 %v1424, %v1414
        %v1975 = vpack.c.b16 %v1425, %v1415
        %v1976 = vpack.c.b16 %v1426, %v1416
        %v1977 = vpack.c.b16 %v1427, %v1417
        %v1978 = vpack.c.b16 %v1428, %v1418
        %v1979 = vpack.c.b16 %v1429, %v1419
        %v1980 = vpack.c.b16 %v1430, %v1420
        %v1981 = vpack.c.b16 %v1441, %v1431
        %v1982 = vpack.c.b16 %v1442, %v1432
        %v1983 = vpack.c.b16 %v1443, %v1433
        %v1984 = vpack.c.b16 %v1444, %v1434
        %v1985 = vpack.c.b16 %v1445, %v1435
        %v1986 = vpack.c.b16 %v1446, %v1436
        %v1987 = vpack.c.b16 %v1447, %v1437
        %v1988 = vpack.c.b16 %v1448, %v1438
        %v1989 = vpack.c.b16 %v1449, %v1439
        %v1990 = vpack.c.b16 %v1450, %v1440
        %v1991 = vpack.c.b16 %v1461, %v1451
        %v1992 = vpack.c.b16 %v1462, %v1452
        %v1993 = vpack.c.b16 %v1463, %v1453
        %v1994 = vpack.c.b16 %v1464, %v1454
        %v1995 = vpack.c.b16 %v1465, %v1455
        %v1996 = vpack.c.b16 %v1466, %v1456
        %v1997 = vpack.c.b16 %v1467, %v1457
        %v1998 = vpack.c.b16 %v1468, %v1458
        %v1999 = vpack.c.b16 %v1469, %v1459
        %v2000 = vpack.c.b16 %v1470, %v1460
        %v2001 = vpack.c.b16 %v1481, %v1471
        %v2002 = vpack.c.b16 %v1482, %v1472
        %v2003 = vpack.c.b16 %v1483, %v1473
        %v2004 = vpack.c.b16 %v1484, %v1474
        %v2005 = vpack.c.b16 %v1485, %v1475
        %v2006 = vpack.c.b16 %v1486, %v1476
        %v2007 = vpack.c.b16 %v1487, %v1477
        %v2008 = vpack.c.b16 %v1488, %v1478
        %v2009 = vpack.c.b16 %v1489, %v1479
        %v2010 = vpack.c.b16 %v1490, %v1480
        %v2011 = vpack.c.b16 %v1501, %v1491
        %v2012 = vpack.c.b16 %v1502, %v1492
        %v2013 = vpack.c.b16 %v1503, %v1493
        %v2014 = vpack.c.b16 %v1504, %v1494
        %v2015 = vpack.c.b16 %v1505, %v1495
        %v2016 = vpack.c.b16 %v1506, %v1496
        %v2017 = vpack.c.b16 %v1507, %v1497
        %v2018 = vpack.c.b16 %v1508, %v1498
        %v2019 = vpack.c.b16 %v1509, %v1499
        %v2020 = vpack.c.b16 %v1510, %v1500
        %v2021 = vpack.c.b16 %v1521, %v1511
        %v2022 = vpack.c.b16 %v1522, %v1512
        %v2023 = vpack.c.b16 %v1523, %v1513
        %v2024 = vpack.c.b16 %v1524, %v1514
        %v2025 = vpack.c.b16 %v1525, %v1515
        %v2026 = vpack.c.b16 %v1526, %v1516
        %v2027 = vpack.c.b16 %v1527, %v1517
        %v2028 = vpack.c.b16 %v1528, %v1518
        %v2029 = vpack.c.b16 %v1529, %v1519
        %v2030 = vpack.c.b16 %v1530, %v1520
        %v2031 = vpack.c.b16 %v1541, %v1531
        %v2032 = vpack.c.b16 %v1542, %v1532
        %v2033 = vpack.c.b16 %v1543, %v1533
        %v2034 = vpack.c.b16 %v1544, %v1534
        %v2035 = vpack.c.b16 %v1545, %v1535
        %v2036 = vpack.c.b16 %v1546, %v1536
        %v2037 = vpack.c.b16 %v1547, %v1537
        %v2038 = vpack.c.b16 %v1548, %v1538
        %v2039 = vpack.c.b16 %v1549, %v1539
        %v2040 = vpack.c.b16 %v1550, %v1540
        %v2041 = vpack.c.b16 %v1561, %v1551
        %v2042 = vpack.c.b16 %v1562, %v1552
        %v2043 = vpack.c.b16 %v1563, %v1553
        %v2044 = vpack.c.b16 %v1564, %v1554
        %v2045 = vpack.c.b16 %v1565, %v1555
        %v2046 = vpack.c.b16 %v1566, %v1556
        %v2047 = vpack.c.b16 %v1567, %v1557
        %v2048 = vpack.c.b16 %v1568, %v1558
        %v2049 = vpack.c.b16 %v1569, %v1559
        %v2050 = vpack.c.b16 %v1570, %v1560
        %v2051 = vpack.c.b16 %v1581, %v1571
        %v2052 = vpack.c.b16 %v1582, %v1572
        %v2053 = vpack.c.b16 %v1583, %v1573
        %v2054 = vpack.c.b16 %v1584, %v1574
        %v2055 = vpack.c.b16 %v1585, %v1575
        %v2056 = vpack.c.b16 %v1586, %v1576
        %v2057 = vpack.c.b16 %v1587, %v1577
        %v2058 = vpack.c.b16 %v1588, %v1578
        %v2059 = vpack.c.b16 %v1589, %v1579
        %v2060 = vpack.c.b16 %v1590, %v1580
        %v2061 = vpack.c.b16 %v1601, %v1591
        %v2062 = vpack.c.b16 %v1602, %v1592
        %v2063 = vpack.c.b16 %v1603, %v1593
        %v2064 = vpack.c.b16 %v1604, %v1594
        %v2065 = vpack.c.b16 %v1605, %v1595
        %v2066 = vpack.c.b16 %v1606, %v1596
        %v2067 = vpack.c.b16 %v1607, %v1597
        %v2068 = vpack.c.b16 %v1608, %v1598
        %v2069 = vpack.c.b16 %v1609, %v1599
        %v2070 = vpack.c.b16 %v1610, %v1600
        %v2071 = vpack.c.b16 %v1621, %v1611
        %v2072 = vpack.c.b16 %v1622, %v1612
        %v2073 = vpack.c.b16 %v1623, %v1613
        %v2074 = vpack.c.b16 %v1624, %v1614
        %v2075 = vpack.c.b16 %v1625, %v1615
        %v2076 = vpack.c.b16 %v1626, %v1616
        %v2077 = vpack.c.b16 %v1627, %v1617
        %v2078 = vpack.c.b16 %v1628, %v1618
        %v2079 = vpack.c.b16 %v1629, %v1619
        %v2080 = vpack.c.b16 %v1630, %v1620
        %v2081 = vpack.c.b16 %v1641, %v1631
        %v2082 = vpack.c.b16 %v1642, %v1632
        %v2083 = vpack.c.b16 %v1643, %v1633
        %v2084 = vpack.c.b16 %v1644, %v1634
        %v2085 = vpack.c.b16 %v1645, %v1635
        %v2086 = vpack.c.b16 %v1646, %v1636
        %v2087 = vpack.c.b16 %v1647, %v1637
        %v2088 = vpack.c.b16 %v1648, %v1638
        %v2089 = vpack.c.b16 %v1649, %v1639
        %v2090 = vpack.c.b16 %v1650, %v1640
        %v2091 = vpack.c.b16 %v1661, %v1651
        %v2092 = vpack.c.b16 %v1662, %v1652
        %v2093 = vpack.c.b16 %v1663, %v1653
        %v2094 = vpack.c.b16 %v1664, %v1654
        %v2095 = vpack.c.b16 %v1665, %v1655
        %v2096 = vpack.c.b16 %v1666, %v1656
        %v2097 = vpack.c.b16 %v1667, %v1657
        %v2098 = vpack.c.b16 %v1668, %v1658
        %v2099 = vpack.c.b16 %v1669, %v1659
        %v2100 = vpack.c.b16 %v1670, %v1660
        %v2101 = vpack.c.b16 %v1681, %v1671
        %v2102 = vpack.c.b16 %v1682, %v1672
        %v2103 = vpack.c.b16 %v1683, %v1673
        %v2104 = vpack.c.b16 %v1684, %v1674
        %v2105 = vpack.c.b16 %v1685, %v1675
        %v2106 = vpack.c.b16 %v1686, %v1676
        %v2107 = vpack.c.b16 %v1687, %v1677
        %v2108 = vpack.c.b16 %v1688, %v1678
        %v2109 = vpack.c.b16 %v1689, %v1679
        %v2110 = vpack.c.b16 %v1690, %v1680
        %v2111 = vpack.c.b16 %v1701, %v1691
        %v2112 = vpack.c.b16 %v1702, %v1692
        %v2113 = vpack.c.b16 %v1703, %v1693
        %v2114 = vpack.c.b16 %v1704, %v1694
        %v2115 = vpack.c.b16 %v1705, %v1695
        %v2116 = vpack.c.b16 %v1706, %v1696
        %v2117 = vpack.c.b16 %v1707, %v1697
        %v2118 = vpack.c.b16 %v1708, %v1698
        %v2119 = vpack.c.b16 %v1709, %v1699
        %v2120 = vpack.c.b16 %v1710, %v1700
        %v2121 = vpack.c.b16 %v1721, %v1711
        %v2122 = vpack.c.b16 %v1722, %v1712
        %v2123 = vpack.c.b16 %v1723, %v1713
        %v2124 = vpack.c.b16 %v1724, %v1714
        %v2125 = vpack.c.b16 %v1725, %v1715
        %v2126 = vpack.c.b16 %v1726, %v1716
        %v2127 = vpack.c.b16 %v1727, %v1717
        %v2128 = vpack.c.b16 %v1728, %v1718
        %v2129 = vpack.c.b16 %v1729, %v1719
        %v2130 = vpack.c.b16 %v1730, %v1720
        %v2131 = vpack.c.b16 %v1741, %v1731
        %v2132 = vpack.c.b16 %v1742, %v1732
        %v2133 = vpack.c.b16 %v1743, %v1733
        %v2134 = vpack.c.b16 %v1744, %v1734
        %v2135 = vpack.c.b16 %v1745, %v1735
        %v2136 = vpack.c.b16 %v1746, %v1736
        %v2137 = vpack.c.b16 %v1747, %v1737
        %v2138 = vpack.c.b16 %v1748, %v1738
        %v2139 = vpack.c.b16 %v1749, %v1739
        %v2140 = vpack.c.b16 %v1750, %v1740
        %v2141 = vpack.c.b16 %v1761, %v1751
        %v2142 = vpack.c.b16 %v1762, %v1752
        %v2143 = vpack.c.b16 %v1763, %v1753
        %v2144 = vpack.c.b16 %v1764, %v1754
        %v2145 = vpack.c.b16 %v1765, %v1755
        %v2146 = vpack.c.b16 %v1766, %v1756
        %v2147 = vpack.c.b16 %v1767, %v1757
        %v2148 = vpack.c.b16 %v1768, %v1758
        %v2149 = vpack.c.b16 %v1769, %v1759
        %v2150 = vpack.c.b16 %v1770, %v1760
        %v2151 = vpack.c.b16 %v1781, %v1771
        %v2152 = vpack.c.b16 %v1782, %v1772
        %v2153 = vpack.c.b16 %v1783, %v1773
        %v2154 = vpack.c.b16 %v1784, %v1774
        %v2155 = vpack.c.b16 %v1785, %v1775
        %v2156 = vpack.c.b16 %v1786, %v1776
        %v2157 = vpack.c.b16 %v1787, %v1777
        %v2158 = vpack.c.b16 %v1788, %v1778
        %v2159 = vpack.c.b16 %v1789, %v1779
        %v2160 = vpack.c.b16 %v1790, %v1780
        %v2161 = vpack.c.b16 %v1801, %v1791
        %v2162 = vpack.c.b16 %v1802, %v1792
        %v2163 = vpack.c.b16 %v1803, %v1793
        %v2164 = vpack.c.b16 %v1804, %v1794
        %v2165 = vpack.c.b16 %v1805, %v1795
        %v2166 = vpack.c.b16 %v1806, %v1796
        %v2167 = vpack.c.b16 %v1807, %v1797
        %v2168 = vpack.c.b16 %v1808, %v1798
        %v2169 = vpack.c.b16 %v1809, %v1799
        %v2170 = vpack.c.b16 %v1810, %v1800
        %v2171 = vpack.c.b16 %v1821, %v1811
        %v2172 = vpack.c.b16 %v1822, %v1812
        %v2173 = vpack.c.b16 %v1823, %v1813
        %v2174 = vpack.c.b16 %v1824, %v1814
        %v2175 = vpack.c.b16 %v1825, %v1815
        %v2176 = vpack.c.b16 %v1826, %v1816
        %v2177 = vpack.c.b16 %v1827, %v1817
        %v2178 = vpack.c.b16 %v1828, %v1818
        %v2179 = vpack.c.b16 %v1829, %v1819
        %v2180 = vpack.c.b16 %v1830, %v1820
        %v2181 = vpack.c.b16 %v1841, %v1831
        %v2182 = vpack.c.b16 %v1842, %v1832
        %v2183 = vpack.c.b16 %v1843, %v1833
        %v2184 = vpack.c.b16 %v1844, %v1834
        %v2185 = vpack.c.b16 %v1845, %v1835
        %v2186 = vpack.c.b16 %v1846, %v1836
        %v2187 = vpack.c.b16 %v1847, %v1837
        %v2188 = vpack.c.b16 %v1848, %v1838
        %v2189 = vpack.c.b16 %v1849, %v1839
        %v2190 = vpack.c.b16 %v1850, %v1840
        %v2191 = vpack.c.b16 %v1861, %v1851
        %v2192 = vpack.c.b16 %v1862, %v1852
        %v2193 = vpack.c.b16 %v1863, %v1853
        %v2194 = vpack.c.b16 %v1864, %v1854
        %v2195 = vpack.c.b16 %v1865, %v1855
        %v2196 = vpack.c.b16 %v1866, %v1856
        %v2197 = vpack.c.b16 %v1867, %v1857
        %v2198 = vpack.c.b16 %v1868, %v1858
        %v2199 = vpack.c.b16 %v1869, %v1859
        %v2200 = vpack.c.b16 %v1870, %v1860
        %v2201 = vpack.c.b16 %v1881, %v1871
        %v2202 = vpack.c.b16 %v1882, %v1872
        %v2203 = vpack.c.b16 %v1883, %v1873
        %v2204 = vpack.c.b16 %v1884, %v1874
        %v2205 = vpack.c.b16 %v1885, %v1875
        %v2206 = vpack.c.b16 %v1886, %v1876
        %v2207 = vpack.c.b16 %v1887, %v1877
        %v2208 = vpack.c.b16 %v1888, %v1878
        %v2209 = vpack.c.b16 %v1889, %v1879
        %v2210 = vpack.c.b16 %v1890, %v1880
        %2531 = vmatprep.subr.bf16.mxu0 %v1962
        %2532 = vmatpush1.bf16.msra.mxu0 %v1961
        %2533 = vmatprep.subr.bf16.mxu0 %v1952
        %2534 = vmatpush1.bf16.msra.mxu0 %v1951
        %2535 = vmatprep.subr.bf16.mxu0 %v1942
        %2536 = vmatpush1.bf16.msra.mxu0 %v1941
        %2537 = vmatprep.subr.bf16.mxu0 %v1932
        %2538 = vmatpush1.bf16.msra.mxu0 %v1931
        %2539 = vmatprep.subr.bf16.mxu0 %v1922
        %2540 = vmatpush1.bf16.msra.mxu0 %v1921
        %2541 = vmatprep.subr.bf16.mxu0 %v1912
        %2542 = vmatpush1.bf16.msra.mxu0 %v1911
        %2543 = vmatprep.subr.bf16.mxu0 %v1902
        %2544 = vmatpush1.bf16.msra.mxu0 %v1901
        %2545 = vmatprep.subr.bf16.mxu0 %v1892
        %2546 = vmatpush1.bf16.msra.mxu0 %v1891
        %2547 = vmatprep.subr.bf16.mxu0 %v2042
        %2548 = vmatpush2.bf16.msra.mxu0 %v2041
        %2549 = vmatprep.subr.bf16.mxu0 %v2032
        %2550 = vmatpush2.bf16.msra.mxu0 %v2031
        %2551 = vmatprep.subr.bf16.mxu0 %v2022
        %2552 = vmatpush2.bf16.msra.mxu0 %v2021
        %2553 = vmatprep.subr.bf16.mxu0 %v2012
        %2554 = vmatpush2.bf16.msra.mxu0 %v2011
        %2555 = vmatprep.subr.bf16.mxu0 %v2002
        %2556 = vmatpush2.bf16.msra.mxu0 %v2001
        %2557 = vmatprep.subr.bf16.mxu0 %v1992
        %2558 = vmatpush2.bf16.msra.mxu0 %v1991
        %2559 = vmatprep.subr.bf16.mxu0 %v1982
        %2560 = vmatpush2.bf16.msra.mxu0 %v1981
        %2561 = vmatprep.subr.bf16.mxu0 %v1972
        %2562 = vmatpush2.bf16.msra.mxu0 %v1971
        %2563 = vmatprep.mubr.bf16.mxu0 %v868
        %2564 = vmatmul.mubr.bf16.gmra.mxu0 %v867
        %v2565 = vpop.f32.mrf.mxu0
        %v2566 = vadd.f32 %v724, %v2565
        %v2567 = vpop.f32.mrf.mxu0
        %v2568 = vadd.f32 %v728, %v2567
        %v2569 = vpop.f32.mrf.mxu0
        %v2570 = vadd.f32 %v724, %v2569
        %v2571 = vpop.f32.mrf.mxu0
        %v2572 = vadd.f32 %v728, %v2571
        %2573 = vmatprep.mubr.bf16.mxu0 %v872
        %2574 = vmatmul.mubr.bf16.gmra.mxu0 %v871
        %v2575 = vpop.f32.mrf.mxu0
        %v2576 = vadd.f32 %v724, %v2575
        %v2577 = vpop.f32.mrf.mxu0
        %v2578 = vadd.f32 %v728, %v2577
        %v2579 = vpop.f32.mrf.mxu0
        %v2580 = vadd.f32 %v724, %v2579
        %v2581 = vpop.f32.mrf.mxu0
        %v2582 = vadd.f32 %v728, %v2581
        %2583 = vmatprep.mubr.bf16.mxu0 %v876
        %2584 = vmatmul.mubr.bf16.gmra.mxu0 %v875
        %v2585 = vpop.f32.mrf.mxu0
        %v2586 = vadd.f32 %v724, %v2585
        %v2587 = vpop.f32.mrf.mxu0
        %v2588 = vadd.f32 %v728, %v2587
        %v2589 = vpop.f32.mrf.mxu0
        %v2590 = vadd.f32 %v724, %v2589
        %v2591 = vpop.f32.mrf.mxu0
        %v2592 = vadd.f32 %v728, %v2591
        %2593 = vmatprep.mubr.bf16.mxu0 %v880
        %2594 = vmatmul.mubr.bf16.gmra.mxu0 %v879
        %v2595 = vpop.f32.mrf.mxu0
        %v2596 = vadd.f32 %v724, %v2595
        %v2597 = vpop.f32.mrf.mxu0
        %v2598 = vadd.f32 %v728, %v2597
        %v2599 = vpop.f32.mrf.mxu0
        %v2600 = vadd.f32 %v724, %v2599
        %v2601 = vpop.f32.mrf.mxu0
        %v2602 = vadd.f32 %v728, %v2601
        %2603 = vmatprep.mubr.bf16.mxu0 %v884
        %2604 = vmatmul.mubr.bf16.gmra.mxu0 %v883
        %v2605 = vpop.f32.mrf.mxu0
        %v2606 = vadd.f32 %v724, %v2605
        %v2607 = vpop.f32.mrf.mxu0
        %v2608 = vadd.f32 %v728, %v2607
        %v2609 = vpop.f32.mrf.mxu0
        %v2610 = vadd.f32 %v724, %v2609
        %v2611 = vpop.f32.mrf.mxu0
        %v2612 = vadd.f32 %v728, %v2611
        %2613 = vmatprep.mubr.bf16.mxu0 %v888
        %2614 = vmatmul.mubr.bf16.gmra.mxu0 %v887
        %v2615 = vpop.f32.mrf.mxu0
        %v2616 = vadd.f32 %v724, %v2615
        %v2617 = vpop.f32.mrf.mxu0
        %v2618 = vadd.f32 %v728, %v2617
        %v2619 = vpop.f32.mrf.mxu0
        %v2620 = vadd.f32 %v724, %v2619
        %v2621 = vpop.f32.mrf.mxu0
        %v2622 = vadd.f32 %v728, %v2621
        %2623 = vmatprep.mubr.bf16.mxu0 %v892
        %2624 = vmatmul.mubr.bf16.gmra.mxu0 %v891
        %v2625 = vpop.f32.mrf.mxu0
        %v2626 = vadd.f32 %v724, %v2625
        %v2627 = vpop.f32.mrf.mxu0
        %v2628 = vadd.f32 %v728, %v2627
        %v2629 = vpop.f32.mrf.mxu0
        %v2630 = vadd.f32 %v724, %v2629
        %v2631 = vpop.f32.mrf.mxu0
        %v2632 = vadd.f32 %v728, %v2631
        %2633 = vmatprep.mubr.bf16.mxu0 %v896
        %2634 = vmatmul.mubr.bf16.gmra.mxu0 %v895
        %v2635 = vpop.f32.mrf.mxu0
        %v2636 = vadd.f32 %v724, %v2635
        %v2637 = vpop.f32.mrf.mxu0
        %v2638 = vadd.f32 %v728, %v2637
        %v2639 = vpop.f32.mrf.mxu0
        %v2640 = vadd.f32 %v724, %v2639
        %v2641 = vpop.f32.mrf.mxu0
        %v2642 = vadd.f32 %v728, %v2641
        %2643 = vdwg.mxu0
        %2644 = vmatprep.subr.bf16.mxu0 %v2122
        %2645 = vmatpush1.bf16.msra.mxu0 %v2121
        %2646 = vmatprep.subr.bf16.mxu0 %v2112
        %2647 = vmatpush1.bf16.msra.mxu0 %v2111
        %2648 = vmatprep.subr.bf16.mxu0 %v2102
        %2649 = vmatpush1.bf16.msra.mxu0 %v2101
        %2650 = vmatprep.subr.bf16.mxu0 %v2092
        %2651 = vmatpush1.bf16.msra.mxu0 %v2091
        %2652 = vmatprep.subr.bf16.mxu0 %v2082
        %2653 = vmatpush1.bf16.msra.mxu0 %v2081
        %2654 = vmatprep.subr.bf16.mxu0 %v2072
        %2655 = vmatpush1.bf16.msra.mxu0 %v2071
        %2656 = vmatprep.subr.bf16.mxu0 %v2062
        %2657 = vmatpush1.bf16.msra.mxu0 %v2061
        %2658 = vmatprep.subr.bf16.mxu0 %v2052
        %2659 = vmatpush1.bf16.msra.mxu0 %v2051
        %2660 = vmatprep.subr.bf16.mxu0 %v2202
        %2661 = vmatpush2.bf16.msra.mxu0 %v2201
        %2662 = vmatprep.subr.bf16.mxu0 %v2192
        %2663 = vmatpush2.bf16.msra.mxu0 %v2191
        %2664 = vmatprep.subr.bf16.mxu0 %v2182
        %2665 = vmatpush2.bf16.msra.mxu0 %v2181
        %2666 = vmatprep.subr.bf16.mxu0 %v2172
        %2667 = vmatpush2.bf16.msra.mxu0 %v2171
        %2668 = vmatprep.subr.bf16.mxu0 %v2162
        %2669 = vmatpush2.bf16.msra.mxu0 %v2161
        %2670 = vmatprep.subr.bf16.mxu0 %v2152
        %2671 = vmatpush2.bf16.msra.mxu0 %v2151
        %2672 = vmatprep.subr.bf16.mxu0 %v2142
        %2673 = vmatpush2.bf16.msra.mxu0 %v2141
        %2674 = vmatprep.subr.bf16.mxu0 %v2132
        %2675 = vmatpush2.bf16.msra.mxu0 %v2131
        %2676 = vmatprep.mubr.bf16.mxu0 %v870
        %2677 = vmatmul.mubr.bf16.gmra.mxu0 %v869
        %v2678 = vpop.f32.mrf.mxu0
        %v2679 = vadd.f32 %v2566, %v2678
        %v2680 = vpop.f32.mrf.mxu0
        %v2681 = vadd.f32 %v2568, %v2680
        %v2682 = vpop.f32.mrf.mxu0
        %v2683 = vadd.f32 %v2570, %v2682
        %v2684 = vpop.f32.mrf.mxu0
        %v2685 = vadd.f32 %v2572, %v2684
        %2686 = vmatprep.mubr.bf16.mxu0 %v874
        %2687 = vmatmul.mubr.bf16.gmra.mxu0 %v873
        %v2688 = vpop.f32.mrf.mxu0
        %v2689 = vadd.f32 %v2576, %v2688
        %v2690 = vpop.f32.mrf.mxu0
        %v2691 = vadd.f32 %v2578, %v2690
        %v2692 = vpop.f32.mrf.mxu0
        %v2693 = vadd.f32 %v2580, %v2692
        %v2694 = vpop.f32.mrf.mxu0
        %v2695 = vadd.f32 %v2582, %v2694
        %2696 = vmatprep.mubr.bf16.mxu0 %v878
        %2697 = vmatmul.mubr.bf16.gmra.mxu0 %v877
        %v2698 = vpop.f32.mrf.mxu0
        %v2699 = vadd.f32 %v2586, %v2698
        %v2700 = vpop.f32.mrf.mxu0
        %v2701 = vadd.f32 %v2588, %v2700
        %v2702 = vpop.f32.mrf.mxu0
        %v2703 = vadd.f32 %v2590, %v2702
        %v2704 = vpop.f32.mrf.mxu0
        %v2705 = vadd.f32 %v2592, %v2704
        %2706 = vmatprep.mubr.bf16.mxu0 %v882
        %2707 = vmatmul.mubr.bf16.gmra.mxu0 %v881
        %v2708 = vpop.f32.mrf.mxu0
        %v2709 = vadd.f32 %v2596, %v2708
        %v2710 = vpop.f32.mrf.mxu0
        %v2711 = vadd.f32 %v2598, %v2710
        %v2712 = vpop.f32.mrf.mxu0
        %v2713 = vadd.f32 %v2600, %v2712
        %v2714 = vpop.f32.mrf.mxu0
        %v2715 = vadd.f32 %v2602, %v2714
        %2716 = vmatprep.mubr.bf16.mxu0 %v886
        %2717 = vmatmul.mubr.bf16.gmra.mxu0 %v885
        %v2718 = vpop.f32.mrf.mxu0
        %v2719 = vadd.f32 %v2606, %v2718
        %v2720 = vpop.f32.mrf.mxu0
        %v2721 = vadd.f32 %v2608, %v2720
        %v2722 = vpop.f32.mrf.mxu0
        %v2723 = vadd.f32 %v2610, %v2722
        %v2724 = vpop.f32.mrf.mxu0
        %v2725 = vadd.f32 %v2612, %v2724
        %2726 = vmatprep.mubr.bf16.mxu0 %v890
        %2727 = vmatmul.mubr.bf16.gmra.mxu0 %v889
        %v2728 = vpop.f32.mrf.mxu0
        %v2729 = vadd.f32 %v2616, %v2728
        %v2730 = vpop.f32.mrf.mxu0
        %v2731 = vadd.f32 %v2618, %v2730
        %v2732 = vpop.f32.mrf.mxu0
        %v2733 = vadd.f32 %v2620, %v2732
        %v2734 = vpop.f32.mrf.mxu0
        %v2735 = vadd.f32 %v2622, %v2734
        %2736 = vmatprep.mubr.bf16.mxu0 %v894
        %2737 = vmatmul.mubr.bf16.gmra.mxu0 %v893
        %v2738 = vpop.f32.mrf.mxu0
        %v2739 = vadd.f32 %v2626, %v2738
        %v2740 = vpop.f32.mrf.mxu0
        %v2741 = vadd.f32 %v2628, %v2740
        %v2742 = vpop.f32.mrf.mxu0
        %v2743 = vadd.f32 %v2630, %v2742
        %v2744 = vpop.f32.mrf.mxu0
        %v2745 = vadd.f32 %v2632, %v2744
        %2746 = vmatprep.mubr.bf16.mxu0 %v898
        %2747 = vmatmul.mubr.bf16.gmra.mxu0 %v897
        %v2748 = vpop.f32.mrf.mxu0
        %v2749 = vadd.f32 %v2636, %v2748
        %v2750 = vpop.f32.mrf.mxu0
        %v2751 = vadd.f32 %v2638, %v2750
        %v2752 = vpop.f32.mrf.mxu0
        %v2753 = vadd.f32 %v2640, %v2752
        %v2754 = vpop.f32.mrf.mxu0
        %v2755 = vadd.f32 %v2642, %v2754
        %2756 = vdwg.mxu0
        %2757 = vmatprep.subr.bf16.mxu0 %v1964
        %2758 = vmatpush1.bf16.msra.mxu0 %v1963
        %2759 = vmatprep.subr.bf16.mxu0 %v1954
        %2760 = vmatpush1.bf16.msra.mxu0 %v1953
        %2761 = vmatprep.subr.bf16.mxu0 %v1944
        %2762 = vmatpush1.bf16.msra.mxu0 %v1943
        %2763 = vmatprep.subr.bf16.mxu0 %v1934
        %2764 = vmatpush1.bf16.msra.mxu0 %v1933
        %2765 = vmatprep.subr.bf16.mxu0 %v1924
        %2766 = vmatpush1.bf16.msra.mxu0 %v1923
        %2767 = vmatprep.subr.bf16.mxu0 %v1914
        %2768 = vmatpush1.bf16.msra.mxu0 %v1913
        %2769 = vmatprep.subr.bf16.mxu0 %v1904
        %2770 = vmatpush1.bf16.msra.mxu0 %v1903
        %2771 = vmatprep.subr.bf16.mxu0 %v1894
        %2772 = vmatpush1.bf16.msra.mxu0 %v1893
        %2773 = vmatprep.subr.bf16.mxu0 %v2044
        %2774 = vmatpush2.bf16.msra.mxu0 %v2043
        %2775 = vmatprep.subr.bf16.mxu0 %v2034
        %2776 = vmatpush2.bf16.msra.mxu0 %v2033
        %2777 = vmatprep.subr.bf16.mxu0 %v2024
        %2778 = vmatpush2.bf16.msra.mxu0 %v2023
        %2779 = vmatprep.subr.bf16.mxu0 %v2014
        %2780 = vmatpush2.bf16.msra.mxu0 %v2013
        %2781 = vmatprep.subr.bf16.mxu0 %v2004
        %2782 = vmatpush2.bf16.msra.mxu0 %v2003
        %2783 = vmatprep.subr.bf16.mxu0 %v1994
        %2784 = vmatpush2.bf16.msra.mxu0 %v1993
        %2785 = vmatprep.subr.bf16.mxu0 %v1984
        %2786 = vmatpush2.bf16.msra.mxu0 %v1983
        %2787 = vmatprep.subr.bf16.mxu0 %v1974
        %2788 = vmatpush2.bf16.msra.mxu0 %v1973
        %2789 = vmatprep.mubr.bf16.mxu0 %v868
        %2790 = vmatmul.mubr.bf16.gmra.mxu0 %v867
        %v2791 = vpop.f32.mrf.mxu0
        %v2792 = vadd.f32 %v732, %v2791
        %v2793 = vpop.f32.mrf.mxu0
        %v2794 = vadd.f32 %v736, %v2793
        %v2795 = vpop.f32.mrf.mxu0
        %v2796 = vadd.f32 %v732, %v2795
        %v2797 = vpop.f32.mrf.mxu0
        %v2798 = vadd.f32 %v736, %v2797
        %2799 = vmatprep.mubr.bf16.mxu0 %v872
        %2800 = vmatmul.mubr.bf16.gmra.mxu0 %v871
        %v2801 = vpop.f32.mrf.mxu0
        %v2802 = vadd.f32 %v732, %v2801
        %v2803 = vpop.f32.mrf.mxu0
        %v2804 = vadd.f32 %v736, %v2803
        %v2805 = vpop.f32.mrf.mxu0
        %v2806 = vadd.f32 %v732, %v2805
        %v2807 = vpop.f32.mrf.mxu0
        %v2808 = vadd.f32 %v736, %v2807
        %2809 = vmatprep.mubr.bf16.mxu0 %v876
        %2810 = vmatmul.mubr.bf16.gmra.mxu0 %v875
        %v2811 = vpop.f32.mrf.mxu0
        %v2812 = vadd.f32 %v732, %v2811
        %v2813 = vpop.f32.mrf.mxu0
        %v2814 = vadd.f32 %v736, %v2813
        %v2815 = vpop.f32.mrf.mxu0
        %v2816 = vadd.f32 %v732, %v2815
        %v2817 = vpop.f32.mrf.mxu0
        %v2818 = vadd.f32 %v736, %v2817
        %2819 = vmatprep.mubr.bf16.mxu0 %v880
        %2820 = vmatmul.mubr.bf16.gmra.mxu0 %v879
        %v2821 = vpop.f32.mrf.mxu0
        %v2822 = vadd.f32 %v732, %v2821
        %v2823 = vpop.f32.mrf.mxu0
        %v2824 = vadd.f32 %v736, %v2823
        %v2825 = vpop.f32.mrf.mxu0
        %v2826 = vadd.f32 %v732, %v2825
        %v2827 = vpop.f32.mrf.mxu0
        %v2828 = vadd.f32 %v736, %v2827
        %2829 = vmatprep.mubr.bf16.mxu0 %v884
        %2830 = vmatmul.mubr.bf16.gmra.mxu0 %v883
        %v2831 = vpop.f32.mrf.mxu0
        %v2832 = vadd.f32 %v732, %v2831
        %v2833 = vpop.f32.mrf.mxu0
        %v2834 = vadd.f32 %v736, %v2833
        %v2835 = vpop.f32.mrf.mxu0
        %v2836 = vadd.f32 %v732, %v2835
        %v2837 = vpop.f32.mrf.mxu0
        %v2838 = vadd.f32 %v736, %v2837
        %2839 = vmatprep.mubr.bf16.mxu0 %v888
        %2840 = vmatmul.mubr.bf16.gmra.mxu0 %v887
        %v2841 = vpop.f32.mrf.mxu0
        %v2842 = vadd.f32 %v732, %v2841
        %v2843 = vpop.f32.mrf.mxu0
        %v2844 = vadd.f32 %v736, %v2843
        %v2845 = vpop.f32.mrf.mxu0
        %v2846 = vadd.f32 %v732, %v2845
        %v2847 = vpop.f32.mrf.mxu0
        %v2848 = vadd.f32 %v736, %v2847
        %2849 = vmatprep.mubr.bf16.mxu0 %v892
        %2850 = vmatmul.mubr.bf16.gmra.mxu0 %v891
        %v2851 = vpop.f32.mrf.mxu0
        %v2852 = vadd.f32 %v732, %v2851
        %v2853 = vpop.f32.mrf.mxu0
        %v2854 = vadd.f32 %v736, %v2853
        %v2855 = vpop.f32.mrf.mxu0
        %v2856 = vadd.f32 %v732, %v2855
        %v2857 = vpop.f32.mrf.mxu0
        %v2858 = vadd.f32 %v736, %v2857
        %2859 = vmatprep.mubr.bf16.mxu0 %v896
        %2860 = vmatmul.mubr.bf16.gmra.mxu0 %v895
        %v2861 = vpop.f32.mrf.mxu0
        %v2862 = vadd.f32 %v732, %v2861
        %v2863 = vpop.f32.mrf.mxu0
        %v2864 = vadd.f32 %v736, %v2863
        %v2865 = vpop.f32.mrf.mxu0
        %v2866 = vadd.f32 %v732, %v2865
        %v2867 = vpop.f32.mrf.mxu0
        %v2868 = vadd.f32 %v736, %v2867
        %2869 = vdwg.mxu0
        %2870 = vmatprep.subr.bf16.mxu0 %v2124
        %2871 = vmatpush1.bf16.msra.mxu0 %v2123
        %2872 = vmatprep.subr.bf16.mxu0 %v2114
        %2873 = vmatpush1.bf16.msra.mxu0 %v2113
        %2874 = vmatprep.subr.bf16.mxu0 %v2104
        %2875 = vmatpush1.bf16.msra.mxu0 %v2103
        %2876 = vmatprep.subr.bf16.mxu0 %v2094
        %2877 = vmatpush1.bf16.msra.mxu0 %v2093
        %2878 = vmatprep.subr.bf16.mxu0 %v2084
        %2879 = vmatpush1.bf16.msra.mxu0 %v2083
        %2880 = vmatprep.subr.bf16.mxu0 %v2074
        %2881 = vmatpush1.bf16.msra.mxu0 %v2073
        %2882 = vmatprep.subr.bf16.mxu0 %v2064
        %2883 = vmatpush1.bf16.msra.mxu0 %v2063
        %2884 = vmatprep.subr.bf16.mxu0 %v2054
        %2885 = vmatpush1.bf16.msra.mxu0 %v2053
        %2886 = vmatprep.subr.bf16.mxu0 %v2204
        %2887 = vmatpush2.bf16.msra.mxu0 %v2203
        %2888 = vmatprep.subr.bf16.mxu0 %v2194
        %2889 = vmatpush2.bf16.msra.mxu0 %v2193
        %2890 = vmatprep.subr.bf16.mxu0 %v2184
        %2891 = vmatpush2.bf16.msra.mxu0 %v2183
        %2892 = vmatprep.subr.bf16.mxu0 %v2174
        %2893 = vmatpush2.bf16.msra.mxu0 %v2173
        %2894 = vmatprep.subr.bf16.mxu0 %v2164
        %2895 = vmatpush2.bf16.msra.mxu0 %v2163
        %2896 = vmatprep.subr.bf16.mxu0 %v2154
        %2897 = vmatpush2.bf16.msra.mxu0 %v2153
        %2898 = vmatprep.subr.bf16.mxu0 %v2144
        %2899 = vmatpush2.bf16.msra.mxu0 %v2143
        %2900 = vmatprep.subr.bf16.mxu0 %v2134
        %2901 = vmatpush2.bf16.msra.mxu0 %v2133
        %2902 = vmatprep.mubr.bf16.mxu0 %v870
        %2903 = vmatmul.mubr.bf16.gmra.mxu0 %v869
        %v2904 = vpop.f32.mrf.mxu0
        %v2905 = vadd.f32 %v2792, %v2904
        %v2906 = vpop.f32.mrf.mxu0
        %v2907 = vadd.f32 %v2794, %v2906
        %v2908 = vpop.f32.mrf.mxu0
        %v2909 = vadd.f32 %v2796, %v2908
        %v2910 = vpop.f32.mrf.mxu0
        %v2911 = vadd.f32 %v2798, %v2910
        %2912 = vmatprep.mubr.bf16.mxu0 %v874
        %2913 = vmatmul.mubr.bf16.gmra.mxu0 %v873
        %v2914 = vpop.f32.mrf.mxu0
        %v2915 = vadd.f32 %v2802, %v2914
        %v2916 = vpop.f32.mrf.mxu0
        %v2917 = vadd.f32 %v2804, %v2916
        %v2918 = vpop.f32.mrf.mxu0
        %v2919 = vadd.f32 %v2806, %v2918
        %v2920 = vpop.f32.mrf.mxu0
        %v2921 = vadd.f32 %v2808, %v2920
        %2922 = vmatprep.mubr.bf16.mxu0 %v878
        %2923 = vmatmul.mubr.bf16.gmra.mxu0 %v877
        %v2924 = vpop.f32.mrf.mxu0
        %v2925 = vadd.f32 %v2812, %v2924
        %v2926 = vpop.f32.mrf.mxu0
        %v2927 = vadd.f32 %v2814, %v2926
        %v2928 = vpop.f32.mrf.mxu0
        %v2929 = vadd.f32 %v2816, %v2928
        %v2930 = vpop.f32.mrf.mxu0
        %v2931 = vadd.f32 %v2818, %v2930
        %2932 = vmatprep.mubr.bf16.mxu0 %v882
        %2933 = vmatmul.mubr.bf16.gmra.mxu0 %v881
        %v2934 = vpop.f32.mrf.mxu0
        %v2935 = vadd.f32 %v2822, %v2934
        %v2936 = vpop.f32.mrf.mxu0
        %v2937 = vadd.f32 %v2824, %v2936
        %v2938 = vpop.f32.mrf.mxu0
        %v2939 = vadd.f32 %v2826, %v2938
        %v2940 = vpop.f32.mrf.mxu0
        %v2941 = vadd.f32 %v2828, %v2940
        %2942 = vmatprep.mubr.bf16.mxu0 %v886
        %2943 = vmatmul.mubr.bf16.gmra.mxu0 %v885
        %v2944 = vpop.f32.mrf.mxu0
        %v2945 = vadd.f32 %v2832, %v2944
        %v2946 = vpop.f32.mrf.mxu0
        %v2947 = vadd.f32 %v2834, %v2946
        %v2948 = vpop.f32.mrf.mxu0
        %v2949 = vadd.f32 %v2836, %v2948
        %v2950 = vpop.f32.mrf.mxu0
        %v2951 = vadd.f32 %v2838, %v2950
        %2952 = vmatprep.mubr.bf16.mxu0 %v890
        %2953 = vmatmul.mubr.bf16.gmra.mxu0 %v889
        %v2954 = vpop.f32.mrf.mxu0
        %v2955 = vadd.f32 %v2842, %v2954
        %v2956 = vpop.f32.mrf.mxu0
        %v2957 = vadd.f32 %v2844, %v2956
        %v2958 = vpop.f32.mrf.mxu0
        %v2959 = vadd.f32 %v2846, %v2958
        %v2960 = vpop.f32.mrf.mxu0
        %v2961 = vadd.f32 %v2848, %v2960
        %2962 = vmatprep.mubr.bf16.mxu0 %v894
        %2963 = vmatmul.mubr.bf16.gmra.mxu0 %v893
        %v2964 = vpop.f32.mrf.mxu0
        %v2965 = vadd.f32 %v2852, %v2964
        %v2966 = vpop.f32.mrf.mxu0
        %v2967 = vadd.f32 %v2854, %v2966
        %v2968 = vpop.f32.mrf.mxu0
        %v2969 = vadd.f32 %v2856, %v2968
        %v2970 = vpop.f32.mrf.mxu0
        %v2971 = vadd.f32 %v2858, %v2970
        %2972 = vmatprep.mubr.bf16.mxu0 %v898
        %2973 = vmatmul.mubr.bf16.gmra.mxu0 %v897
        %v2974 = vpop.f32.mrf.mxu0
        %v2975 = vadd.f32 %v2862, %v2974
        %v2976 = vpop.f32.mrf.mxu0
        %v2977 = vadd.f32 %v2864, %v2976
        %v2978 = vpop.f32.mrf.mxu0
        %v2979 = vadd.f32 %v2866, %v2978
        %v2980 = vpop.f32.mrf.mxu0
        %v2981 = vadd.f32 %v2868, %v2980
        %2982 = vdwg.mxu0
        %2983 = vmatprep.subr.bf16.mxu0 %v1966
        %2984 = vmatpush1.bf16.msra.mxu0 %v1965
        %2985 = vmatprep.subr.bf16.mxu0 %v1956
        %2986 = vmatpush1.bf16.msra.mxu0 %v1955
        %2987 = vmatprep.subr.bf16.mxu0 %v1946
        %2988 = vmatpush1.bf16.msra.mxu0 %v1945
        %2989 = vmatprep.subr.bf16.mxu0 %v1936
        %2990 = vmatpush1.bf16.msra.mxu0 %v1935
        %2991 = vmatprep.subr.bf16.mxu0 %v1926
        %2992 = vmatpush1.bf16.msra.mxu0 %v1925
        %2993 = vmatprep.subr.bf16.mxu0 %v1916
        %2994 = vmatpush1.bf16.msra.mxu0 %v1915
        %2995 = vmatprep.subr.bf16.mxu0 %v1906
        %2996 = vmatpush1.bf16.msra.mxu0 %v1905
        %2997 = vmatprep.subr.bf16.mxu0 %v1896
        %2998 = vmatpush1.bf16.msra.mxu0 %v1895
        %2999 = vmatprep.subr.bf16.mxu0 %v2046
        %3000 = vmatpush2.bf16.msra.mxu0 %v2045
        %3001 = vmatprep.subr.bf16.mxu0 %v2036
        %3002 = vmatpush2.bf16.msra.mxu0 %v2035
        %3003 = vmatprep.subr.bf16.mxu0 %v2026
        %3004 = vmatpush2.bf16.msra.mxu0 %v2025
        %3005 = vmatprep.subr.bf16.mxu0 %v2016
        %3006 = vmatpush2.bf16.msra.mxu0 %v2015
        %3007 = vmatprep.subr.bf16.mxu0 %v2006
        %3008 = vmatpush2.bf16.msra.mxu0 %v2005
        %3009 = vmatprep.subr.bf16.mxu0 %v1996
        %3010 = vmatpush2.bf16.msra.mxu0 %v1995
        %3011 = vmatprep.subr.bf16.mxu0 %v1986
        %3012 = vmatpush2.bf16.msra.mxu0 %v1985
        %3013 = vmatprep.subr.bf16.mxu0 %v1976
        %3014 = vmatpush2.bf16.msra.mxu0 %v1975
        %3015 = vmatprep.mubr.bf16.mxu0 %v868
        %3016 = vmatmul.mubr.bf16.gmra.mxu0 %v867
        %v3017 = vpop.f32.mrf.mxu0
        %v3018 = vadd.f32 %v740, %v3017
        %v3019 = vpop.f32.mrf.mxu0
        %v3020 = vadd.f32 %v744, %v3019
        %v3021 = vpop.f32.mrf.mxu0
        %v3022 = vadd.f32 %v740, %v3021
        %v3023 = vpop.f32.mrf.mxu0
        %v3024 = vadd.f32 %v744, %v3023
        %3025 = vmatprep.mubr.bf16.mxu0 %v872
        %3026 = vmatmul.mubr.bf16.gmra.mxu0 %v871
        %v3027 = vpop.f32.mrf.mxu0
        %v3028 = vadd.f32 %v740, %v3027
        %v3029 = vpop.f32.mrf.mxu0
        %v3030 = vadd.f32 %v744, %v3029
        %v3031 = vpop.f32.mrf.mxu0
        %v3032 = vadd.f32 %v740, %v3031
        %v3033 = vpop.f32.mrf.mxu0
        %v3034 = vadd.f32 %v744, %v3033
        %3035 = vmatprep.mubr.bf16.mxu0 %v876
        %3036 = vmatmul.mubr.bf16.gmra.mxu0 %v875
        %v3037 = vpop.f32.mrf.mxu0
        %v3038 = vadd.f32 %v740, %v3037
        %v3039 = vpop.f32.mrf.mxu0
        %v3040 = vadd.f32 %v744, %v3039
        %v3041 = vpop.f32.mrf.mxu0
        %v3042 = vadd.f32 %v740, %v3041
        %v3043 = vpop.f32.mrf.mxu0
        %v3044 = vadd.f32 %v744, %v3043
        %3045 = vmatprep.mubr.bf16.mxu0 %v880
        %3046 = vmatmul.mubr.bf16.gmra.mxu0 %v879
        %v3047 = vpop.f32.mrf.mxu0
        %v3048 = vadd.f32 %v740, %v3047
        %v3049 = vpop.f32.mrf.mxu0
        %v3050 = vadd.f32 %v744, %v3049
        %v3051 = vpop.f32.mrf.mxu0
        %v3052 = vadd.f32 %v740, %v3051
        %v3053 = vpop.f32.mrf.mxu0
        %v3054 = vadd.f32 %v744, %v3053
        %3055 = vmatprep.mubr.bf16.mxu0 %v884
        %3056 = vmatmul.mubr.bf16.gmra.mxu0 %v883
        %v3057 = vpop.f32.mrf.mxu0
        %v3058 = vadd.f32 %v740, %v3057
        %v3059 = vpop.f32.mrf.mxu0
        %v3060 = vadd.f32 %v744, %v3059
        %v3061 = vpop.f32.mrf.mxu0
        %v3062 = vadd.f32 %v740, %v3061
        %v3063 = vpop.f32.mrf.mxu0
        %v3064 = vadd.f32 %v744, %v3063
        %3065 = vmatprep.mubr.bf16.mxu0 %v888
        %3066 = vmatmul.mubr.bf16.gmra.mxu0 %v887
        %v3067 = vpop.f32.mrf.mxu0
        %v3068 = vadd.f32 %v740, %v3067
        %v3069 = vpop.f32.mrf.mxu0
        %v3070 = vadd.f32 %v744, %v3069
        %v3071 = vpop.f32.mrf.mxu0
        %v3072 = vadd.f32 %v740, %v3071
        %v3073 = vpop.f32.mrf.mxu0
        %v3074 = vadd.f32 %v744, %v3073
        %3075 = vmatprep.mubr.bf16.mxu0 %v892
        %3076 = vmatmul.mubr.bf16.gmra.mxu0 %v891
        %v3077 = vpop.f32.mrf.mxu0
        %v3078 = vadd.f32 %v740, %v3077
        %v3079 = vpop.f32.mrf.mxu0
        %v3080 = vadd.f32 %v744, %v3079
        %v3081 = vpop.f32.mrf.mxu0
        %v3082 = vadd.f32 %v740, %v3081
        %v3083 = vpop.f32.mrf.mxu0
        %v3084 = vadd.f32 %v744, %v3083
        %3085 = vmatprep.mubr.bf16.mxu0 %v896
        %3086 = vmatmul.mubr.bf16.gmra.mxu0 %v895
        %v3087 = vpop.f32.mrf.mxu0
        %v3088 = vadd.f32 %v740, %v3087
        %v3089 = vpop.f32.mrf.mxu0
        %v3090 = vadd.f32 %v744, %v3089
        %v3091 = vpop.f32.mrf.mxu0
        %v3092 = vadd.f32 %v740, %v3091
        %v3093 = vpop.f32.mrf.mxu0
        %v3094 = vadd.f32 %v744, %v3093
        %3095 = vdwg.mxu0
        %3096 = vmatprep.subr.bf16.mxu0 %v2126
        %3097 = vmatpush1.bf16.msra.mxu0 %v2125
        %3098 = vmatprep.subr.bf16.mxu0 %v2116
        %3099 = vmatpush1.bf16.msra.mxu0 %v2115
        %3100 = vmatprep.subr.bf16.mxu0 %v2106
        %3101 = vmatpush1.bf16.msra.mxu0 %v2105
        %3102 = vmatprep.subr.bf16.mxu0 %v2096
        %3103 = vmatpush1.bf16.msra.mxu0 %v2095
        %3104 = vmatprep.subr.bf16.mxu0 %v2086
        %3105 = vmatpush1.bf16.msra.mxu0 %v2085
        %3106 = vmatprep.subr.bf16.mxu0 %v2076
        %3107 = vmatpush1.bf16.msra.mxu0 %v2075
        %3108 = vmatprep.subr.bf16.mxu0 %v2066
        %3109 = vmatpush1.bf16.msra.mxu0 %v2065
        %3110 = vmatprep.subr.bf16.mxu0 %v2056
        %3111 = vmatpush1.bf16.msra.mxu0 %v2055
        %3112 = vmatprep.subr.bf16.mxu0 %v2206
        %3113 = vmatpush2.bf16.msra.mxu0 %v2205
        %3114 = vmatprep.subr.bf16.mxu0 %v2196
        %3115 = vmatpush2.bf16.msra.mxu0 %v2195
        %3116 = vmatprep.subr.bf16.mxu0 %v2186
        %3117 = vmatpush2.bf16.msra.mxu0 %v2185
        %3118 = vmatprep.subr.bf16.mxu0 %v2176
        %3119 = vmatpush2.bf16.msra.mxu0 %v2175
        %3120 = vmatprep.subr.bf16.mxu0 %v2166
        %3121 = vmatpush2.bf16.msra.mxu0 %v2165
        %3122 = vmatprep.subr.bf16.mxu0 %v2156
        %3123 = vmatpush2.bf16.msra.mxu0 %v2155
        %3124 = vmatprep.subr.bf16.mxu0 %v2146
        %3125 = vmatpush2.bf16.msra.mxu0 %v2145
        %3126 = vmatprep.subr.bf16.mxu0 %v2136
        %3127 = vmatpush2.bf16.msra.mxu0 %v2135
        %3128 = vmatprep.mubr.bf16.mxu0 %v870
        %3129 = vmatmul.mubr.bf16.gmra.mxu0 %v869
        %v3130 = vpop.f32.mrf.mxu0
        %v3131 = vadd.f32 %v3018, %v3130
        %v3132 = vpop.f32.mrf.mxu0
        %v3133 = vadd.f32 %v3020, %v3132
        %v3134 = vpop.f32.mrf.mxu0
        %v3135 = vadd.f32 %v3022, %v3134
        %v3136 = vpop.f32.mrf.mxu0
        %v3137 = vadd.f32 %v3024, %v3136
        %3138 = vmatprep.mubr.bf16.mxu0 %v874
        %3139 = vmatmul.mubr.bf16.gmra.mxu0 %v873
        %v3140 = vpop.f32.mrf.mxu0
        %v3141 = vadd.f32 %v3028, %v3140
        %v3142 = vpop.f32.mrf.mxu0
        %v3143 = vadd.f32 %v3030, %v3142
        %v3144 = vpop.f32.mrf.mxu0
        %v3145 = vadd.f32 %v3032, %v3144
        %v3146 = vpop.f32.mrf.mxu0
        %v3147 = vadd.f32 %v3034, %v3146
        %3148 = vmatprep.mubr.bf16.mxu0 %v878
        %3149 = vmatmul.mubr.bf16.gmra.mxu0 %v877
        %v3150 = vpop.f32.mrf.mxu0
        %v3151 = vadd.f32 %v3038, %v3150
        %v3152 = vpop.f32.mrf.mxu0
        %v3153 = vadd.f32 %v3040, %v3152
        %v3154 = vpop.f32.mrf.mxu0
        %v3155 = vadd.f32 %v3042, %v3154
        %v3156 = vpop.f32.mrf.mxu0
        %v3157 = vadd.f32 %v3044, %v3156
        %3158 = vmatprep.mubr.bf16.mxu0 %v882
        %3159 = vmatmul.mubr.bf16.gmra.mxu0 %v881
        %v3160 = vpop.f32.mrf.mxu0
        %v3161 = vadd.f32 %v3048, %v3160
        %v3162 = vpop.f32.mrf.mxu0
        %v3163 = vadd.f32 %v3050, %v3162
        %v3164 = vpop.f32.mrf.mxu0
        %v3165 = vadd.f32 %v3052, %v3164
        %v3166 = vpop.f32.mrf.mxu0
        %v3167 = vadd.f32 %v3054, %v3166
        %3168 = vmatprep.mubr.bf16.mxu0 %v886
        %3169 = vmatmul.mubr.bf16.gmra.mxu0 %v885
        %v3170 = vpop.f32.mrf.mxu0
        %v3171 = vadd.f32 %v3058, %v3170
        %v3172 = vpop.f32.mrf.mxu0
        %v3173 = vadd.f32 %v3060, %v3172
        %v3174 = vpop.f32.mrf.mxu0
        %v3175 = vadd.f32 %v3062, %v3174
        %v3176 = vpop.f32.mrf.mxu0
        %v3177 = vadd.f32 %v3064, %v3176
        %3178 = vmatprep.mubr.bf16.mxu0 %v890
        %3179 = vmatmul.mubr.bf16.gmra.mxu0 %v889
        %v3180 = vpop.f32.mrf.mxu0
        %v3181 = vadd.f32 %v3068, %v3180
        %v3182 = vpop.f32.mrf.mxu0
        %v3183 = vadd.f32 %v3070, %v3182
        %v3184 = vpop.f32.mrf.mxu0
        %v3185 = vadd.f32 %v3072, %v3184
        %v3186 = vpop.f32.mrf.mxu0
        %v3187 = vadd.f32 %v3074, %v3186
        %3188 = vmatprep.mubr.bf16.mxu0 %v894
        %3189 = vmatmul.mubr.bf16.gmra.mxu0 %v893
        %v3190 = vpop.f32.mrf.mxu0
        %v3191 = vadd.f32 %v3078, %v3190
        %v3192 = vpop.f32.mrf.mxu0
        %v3193 = vadd.f32 %v3080, %v3192
        %v3194 = vpop.f32.mrf.mxu0
        %v3195 = vadd.f32 %v3082, %v3194
        %v3196 = vpop.f32.mrf.mxu0
        %v3197 = vadd.f32 %v3084, %v3196
        %3198 = vmatprep.mubr.bf16.mxu0 %v898
        %3199 = vmatmul.mubr.bf16.gmra.mxu0 %v897
        %v3200 = vpop.f32.mrf.mxu0
        %v3201 = vadd.f32 %v3088, %v3200
        %v3202 = vpop.f32.mrf.mxu0
        %v3203 = vadd.f32 %v3090, %v3202
        %v3204 = vpop.f32.mrf.mxu0
        %v3205 = vadd.f32 %v3092, %v3204
        %v3206 = vpop.f32.mrf.mxu0
        %v3207 = vadd.f32 %v3094, %v3206
        %3208 = vdwg.mxu0
        %3209 = vmatprep.subr.bf16.mxu0 %v1968
        %3210 = vmatpush1.bf16.msra.mxu0 %v1967
        %3211 = vmatprep.subr.bf16.mxu0 %v1958
        %3212 = vmatpush1.bf16.msra.mxu0 %v1957
        %3213 = vmatprep.subr.bf16.mxu0 %v1948
        %3214 = vmatpush1.bf16.msra.mxu0 %v1947
        %3215 = vmatprep.subr.bf16.mxu0 %v1938
        %3216 = vmatpush1.bf16.msra.mxu0 %v1937
        %3217 = vmatprep.subr.bf16.mxu0 %v1928
        %3218 = vmatpush1.bf16.msra.mxu0 %v1927
        %3219 = vmatprep.subr.bf16.mxu0 %v1918
        %3220 = vmatpush1.bf16.msra.mxu0 %v1917
        %3221 = vmatprep.subr.bf16.mxu0 %v1908
        %3222 = vmatpush1.bf16.msra.mxu0 %v1907
        %3223 = vmatprep.subr.bf16.mxu0 %v1898
        %3224 = vmatpush1.bf16.msra.mxu0 %v1897
        %3225 = vmatprep.subr.bf16.mxu0 %v2048
        %3226 = vmatpush2.bf16.msra.mxu0 %v2047
        %3227 = vmatprep.subr.bf16.mxu0 %v2038
        %3228 = vmatpush2.bf16.msra.mxu0 %v2037
        %3229 = vmatprep.subr.bf16.mxu0 %v2028
        %3230 = vmatpush2.bf16.msra.mxu0 %v2027
        %3231 = vmatprep.subr.bf16.mxu0 %v2018
        %3232 = vmatpush2.bf16.msra.mxu0 %v2017
        %3233 = vmatprep.subr.bf16.mxu0 %v2008
        %3234 = vmatpush2.bf16.msra.mxu0 %v2007
        %3235 = vmatprep.subr.bf16.mxu0 %v1998
        %3236 = vmatpush2.bf16.msra.mxu0 %v1997
        %3237 = vmatprep.subr.bf16.mxu0 %v1988
        %3238 = vmatpush2.bf16.msra.mxu0 %v1987
        %3239 = vmatprep.subr.bf16.mxu0 %v1978
        %3240 = vmatpush2.bf16.msra.mxu0 %v1977
        %3241 = vmatprep.mubr.bf16.mxu0 %v868
        %3242 = vmatmul.mubr.bf16.gmra.mxu0 %v867
        %v3243 = vpop.f32.mrf.mxu0
        %v3244 = vadd.f32 %v748, %v3243
        %v3245 = vpop.f32.mrf.mxu0
        %v3246 = vadd.f32 %v752, %v3245
        %v3247 = vpop.f32.mrf.mxu0
        %v3248 = vadd.f32 %v748, %v3247
        %v3249 = vpop.f32.mrf.mxu0
        %v3250 = vadd.f32 %v752, %v3249
        %3251 = vmatprep.mubr.bf16.mxu0 %v872
        %3252 = vmatmul.mubr.bf16.gmra.mxu0 %v871
        %v3253 = vpop.f32.mrf.mxu0
        %v3254 = vadd.f32 %v748, %v3253
        %v3255 = vpop.f32.mrf.mxu0
        %v3256 = vadd.f32 %v752, %v3255
        %v3257 = vpop.f32.mrf.mxu0
        %v3258 = vadd.f32 %v748, %v3257
        %v3259 = vpop.f32.mrf.mxu0
        %v3260 = vadd.f32 %v752, %v3259
        %3261 = vmatprep.mubr.bf16.mxu0 %v876
        %3262 = vmatmul.mubr.bf16.gmra.mxu0 %v875
        %v3263 = vpop.f32.mrf.mxu0
        %v3264 = vadd.f32 %v748, %v3263
        %v3265 = vpop.f32.mrf.mxu0
        %v3266 = vadd.f32 %v752, %v3265
        %v3267 = vpop.f32.mrf.mxu0
        %v3268 = vadd.f32 %v748, %v3267
        %v3269 = vpop.f32.mrf.mxu0
        %v3270 = vadd.f32 %v752, %v3269
        %3271 = vmatprep.mubr.bf16.mxu0 %v880
        %3272 = vmatmul.mubr.bf16.gmra.mxu0 %v879
        %v3273 = vpop.f32.mrf.mxu0
        %v3274 = vadd.f32 %v748, %v3273
        %v3275 = vpop.f32.mrf.mxu0
        %v3276 = vadd.f32 %v752, %v3275
        %v3277 = vpop.f32.mrf.mxu0
        %v3278 = vadd.f32 %v748, %v3277
        %v3279 = vpop.f32.mrf.mxu0
        %v3280 = vadd.f32 %v752, %v3279
        %3281 = vmatprep.mubr.bf16.mxu0 %v884
        %3282 = vmatmul.mubr.bf16.gmra.mxu0 %v883
        %v3283 = vpop.f32.mrf.mxu0
        %v3284 = vadd.f32 %v748, %v3283
        %v3285 = vpop.f32.mrf.mxu0
        %v3286 = vadd.f32 %v752, %v3285
        %v3287 = vpop.f32.mrf.mxu0
        %v3288 = vadd.f32 %v748, %v3287
        %v3289 = vpop.f32.mrf.mxu0
        %v3290 = vadd.f32 %v752, %v3289
        %3291 = vmatprep.mubr.bf16.mxu0 %v888
        %3292 = vmatmul.mubr.bf16.gmra.mxu0 %v887
        %v3293 = vpop.f32.mrf.mxu0
        %v3294 = vadd.f32 %v748, %v3293
        %v3295 = vpop.f32.mrf.mxu0
        %v3296 = vadd.f32 %v752, %v3295
        %v3297 = vpop.f32.mrf.mxu0
        %v3298 = vadd.f32 %v748, %v3297
        %v3299 = vpop.f32.mrf.mxu0
        %v3300 = vadd.f32 %v752, %v3299
        %3301 = vmatprep.mubr.bf16.mxu0 %v892
        %3302 = vmatmul.mubr.bf16.gmra.mxu0 %v891
        %v3303 = vpop.f32.mrf.mxu0
        %v3304 = vadd.f32 %v748, %v3303
        %v3305 = vpop.f32.mrf.mxu0
        %v3306 = vadd.f32 %v752, %v3305
        %v3307 = vpop.f32.mrf.mxu0
        %v3308 = vadd.f32 %v748, %v3307
        %v3309 = vpop.f32.mrf.mxu0
        %v3310 = vadd.f32 %v752, %v3309
        %3311 = vmatprep.mubr.bf16.mxu0 %v896
        %3312 = vmatmul.mubr.bf16.gmra.mxu0 %v895
        %v3313 = vpop.f32.mrf.mxu0
        %v3314 = vadd.f32 %v748, %v3313
        %v3315 = vpop.f32.mrf.mxu0
        %v3316 = vadd.f32 %v752, %v3315
        %v3317 = vpop.f32.mrf.mxu0
        %v3318 = vadd.f32 %v748, %v3317
        %v3319 = vpop.f32.mrf.mxu0
        %v3320 = vadd.f32 %v752, %v3319
        %3321 = vdwg.mxu0
        %3322 = vmatprep.subr.bf16.mxu0 %v2128
        %3323 = vmatpush1.bf16.msra.mxu0 %v2127
        %3324 = vmatprep.subr.bf16.mxu0 %v2118
        %3325 = vmatpush1.bf16.msra.mxu0 %v2117
        %3326 = vmatprep.subr.bf16.mxu0 %v2108
        %3327 = vmatpush1.bf16.msra.mxu0 %v2107
        %3328 = vmatprep.subr.bf16.mxu0 %v2098
        %3329 = vmatpush1.bf16.msra.mxu0 %v2097
        %3330 = vmatprep.subr.bf16.mxu0 %v2088
        %3331 = vmatpush1.bf16.msra.mxu0 %v2087
        %3332 = vmatprep.subr.bf16.mxu0 %v2078
        %3333 = vmatpush1.bf16.msra.mxu0 %v2077
        %3334 = vmatprep.subr.bf16.mxu0 %v2068
        %3335 = vmatpush1.bf16.msra.mxu0 %v2067
        %3336 = vmatprep.subr.bf16.mxu0 %v2058
        %3337 = vmatpush1.bf16.msra.mxu0 %v2057
        %3338 = vmatprep.subr.bf16.mxu0 %v2208
        %3339 = vmatpush2.bf16.msra.mxu0 %v2207
        %3340 = vmatprep.subr.bf16.mxu0 %v2198
        %3341 = vmatpush2.bf16.msra.mxu0 %v2197
        %3342 = vmatprep.subr.bf16.mxu0 %v2188
        %3343 = vmatpush2.bf16.msra.mxu0 %v2187
        %3344 = vmatprep.subr.bf16.mxu0 %v2178
        %3345 = vmatpush2.bf16.msra.mxu0 %v2177
        %3346 = vmatprep.subr.bf16.mxu0 %v2168
        %3347 = vmatpush2.bf16.msra.mxu0 %v2167
        %3348 = vmatprep.subr.bf16.mxu0 %v2158
        %3349 = vmatpush2.bf16.msra.mxu0 %v2157
        %3350 = vmatprep.subr.bf16.mxu0 %v2148
        %3351 = vmatpush2.bf16.msra.mxu0 %v2147
        %3352 = vmatprep.subr.bf16.mxu0 %v2138
        %3353 = vmatpush2.bf16.msra.mxu0 %v2137
        %3354 = vmatprep.mubr.bf16.mxu0 %v870
        %3355 = vmatmul.mubr.bf16.gmra.mxu0 %v869
        %v3356 = vpop.f32.mrf.mxu0
        %v3357 = vadd.f32 %v3244, %v3356
        %v3358 = vpop.f32.mrf.mxu0
        %v3359 = vadd.f32 %v3246, %v3358
        %v3360 = vpop.f32.mrf.mxu0
        %v3361 = vadd.f32 %v3248, %v3360
        %v3362 = vpop.f32.mrf.mxu0
        %v3363 = vadd.f32 %v3250, %v3362
        %3364 = vmatprep.mubr.bf16.mxu0 %v874
        %3365 = vmatmul.mubr.bf16.gmra.mxu0 %v873
        %v3366 = vpop.f32.mrf.mxu0
        %v3367 = vadd.f32 %v3254, %v3366
        %v3368 = vpop.f32.mrf.mxu0
        %v3369 = vadd.f32 %v3256, %v3368
        %v3370 = vpop.f32.mrf.mxu0
        %v3371 = vadd.f32 %v3258, %v3370
        %v3372 = vpop.f32.mrf.mxu0
        %v3373 = vadd.f32 %v3260, %v3372
        %3374 = vmatprep.mubr.bf16.mxu0 %v878
        %3375 = vmatmul.mubr.bf16.gmra.mxu0 %v877
        %v3376 = vpop.f32.mrf.mxu0
        %v3377 = vadd.f32 %v3264, %v3376
        %v3378 = vpop.f32.mrf.mxu0
        %v3379 = vadd.f32 %v3266, %v3378
        %v3380 = vpop.f32.mrf.mxu0
        %v3381 = vadd.f32 %v3268, %v3380
        %v3382 = vpop.f32.mrf.mxu0
        %v3383 = vadd.f32 %v3270, %v3382
        %3384 = vmatprep.mubr.bf16.mxu0 %v882
        %3385 = vmatmul.mubr.bf16.gmra.mxu0 %v881
        %v3386 = vpop.f32.mrf.mxu0
        %v3387 = vadd.f32 %v3274, %v3386
        %v3388 = vpop.f32.mrf.mxu0
        %v3389 = vadd.f32 %v3276, %v3388
        %v3390 = vpop.f32.mrf.mxu0
        %v3391 = vadd.f32 %v3278, %v3390
        %v3392 = vpop.f32.mrf.mxu0
        %v3393 = vadd.f32 %v3280, %v3392
        %3394 = vmatprep.mubr.bf16.mxu0 %v886
        %3395 = vmatmul.mubr.bf16.gmra.mxu0 %v885
        %v3396 = vpop.f32.mrf.mxu0
        %v3397 = vadd.f32 %v3284, %v3396
        %v3398 = vpop.f32.mrf.mxu0
        %v3399 = vadd.f32 %v3286, %v3398
        %v3400 = vpop.f32.mrf.mxu0
        %v3401 = vadd.f32 %v3288, %v3400
        %v3402 = vpop.f32.mrf.mxu0
        %v3403 = vadd.f32 %v3290, %v3402
        %3404 = vmatprep.mubr.bf16.mxu0 %v890
        %3405 = vmatmul.mubr.bf16.gmra.mxu0 %v889
        %v3406 = vpop.f32.mrf.mxu0
        %v3407 = vadd.f32 %v3294, %v3406
        %v3408 = vpop.f32.mrf.mxu0
        %v3409 = vadd.f32 %v3296, %v3408
        %v3410 = vpop.f32.mrf.mxu0
        %v3411 = vadd.f32 %v3298, %v3410
        %v3412 = vpop.f32.mrf.mxu0
        %v3413 = vadd.f32 %v3300, %v3412
        %3414 = vmatprep.mubr.bf16.mxu0 %v894
        %3415 = vmatmul.mubr.bf16.gmra.mxu0 %v893
        %v3416 = vpop.f32.mrf.mxu0
        %v3417 = vadd.f32 %v3304, %v3416
        %v3418 = vpop.f32.mrf.mxu0
        %v3419 = vadd.f32 %v3306, %v3418
        %v3420 = vpop.f32.mrf.mxu0
        %v3421 = vadd.f32 %v3308, %v3420
        %v3422 = vpop.f32.mrf.mxu0
        %v3423 = vadd.f32 %v3310, %v3422
        %3424 = vmatprep.mubr.bf16.mxu0 %v898
        %3425 = vmatmul.mubr.bf16.gmra.mxu0 %v897
        %v3426 = vpop.f32.mrf.mxu0
        %v3427 = vadd.f32 %v3314, %v3426
        %v3428 = vpop.f32.mrf.mxu0
        %v3429 = vadd.f32 %v3316, %v3428
        %v3430 = vpop.f32.mrf.mxu0
        %v3431 = vadd.f32 %v3318, %v3430
        %v3432 = vpop.f32.mrf.mxu0
        %v3433 = vadd.f32 %v3320, %v3432
        %3434 = vdwg.mxu0
        %3435 = vmatprep.subr.bf16.mxu0 %v1970
        %3436 = vmatpush1.bf16.msra.mxu0 %v1969
        %3437 = vmatprep.subr.bf16.mxu0 %v1960
        %3438 = vmatpush1.bf16.msra.mxu0 %v1959
        %3439 = vmatprep.subr.bf16.mxu0 %v1950
        %3440 = vmatpush1.bf16.msra.mxu0 %v1949
        %3441 = vmatprep.subr.bf16.mxu0 %v1940
        %3442 = vmatpush1.bf16.msra.mxu0 %v1939
        %3443 = vmatprep.subr.bf16.mxu0 %v1930
        %3444 = vmatpush1.bf16.msra.mxu0 %v1929
        %3445 = vmatprep.subr.bf16.mxu0 %v1920
        %3446 = vmatpush1.bf16.msra.mxu0 %v1919
        %3447 = vmatprep.subr.bf16.mxu0 %v1910
        %3448 = vmatpush1.bf16.msra.mxu0 %v1909
        %3449 = vmatprep.subr.bf16.mxu0 %v1900
        %3450 = vmatpush1.bf16.msra.mxu0 %v1899
        %3451 = vmatprep.subr.bf16.mxu0 %v2050
        %3452 = vmatpush2.bf16.msra.mxu0 %v2049
        %3453 = vmatprep.subr.bf16.mxu0 %v2040
        %3454 = vmatpush2.bf16.msra.mxu0 %v2039
        %3455 = vmatprep.subr.bf16.mxu0 %v2030
        %3456 = vmatpush2.bf16.msra.mxu0 %v2029
        %3457 = vmatprep.subr.bf16.mxu0 %v2020
        %3458 = vmatpush2.bf16.msra.mxu0 %v2019
        %3459 = vmatprep.subr.bf16.mxu0 %v2010
        %3460 = vmatpush2.bf16.msra.mxu0 %v2009
        %3461 = vmatprep.subr.bf16.mxu0 %v2000
        %3462 = vmatpush2.bf16.msra.mxu0 %v1999
        %3463 = vmatprep.subr.bf16.mxu0 %v1990
        %3464 = vmatpush2.bf16.msra.mxu0 %v1989
        %3465 = vmatprep.subr.bf16.mxu0 %v1980
        %3466 = vmatpush2.bf16.msra.mxu0 %v1979
        %3467 = vmatprep.mubr.bf16.mxu0 %v868
        %3468 = vmatmul.mubr.bf16.gmra.mxu0 %v867
        %v3469 = vpop.f32.mrf.mxu0
        %v3470 = vadd.f32 %v756, %v3469
        %v3471 = vpop.f32.mrf.mxu0
        %v3472 = vadd.f32 %v760, %v3471
        %v3473 = vpop.f32.mrf.mxu0
        %v3474 = vadd.f32 %v756, %v3473
        %v3475 = vpop.f32.mrf.mxu0
        %v3476 = vadd.f32 %v760, %v3475
        %3477 = vmatprep.mubr.bf16.mxu0 %v872
        %3478 = vmatmul.mubr.bf16.gmra.mxu0 %v871
        %v3479 = vpop.f32.mrf.mxu0
        %v3480 = vadd.f32 %v756, %v3479
        %v3481 = vpop.f32.mrf.mxu0
        %v3482 = vadd.f32 %v760, %v3481
        %v3483 = vpop.f32.mrf.mxu0
        %v3484 = vadd.f32 %v756, %v3483
        %v3485 = vpop.f32.mrf.mxu0
        %v3486 = vadd.f32 %v760, %v3485
        %3487 = vmatprep.mubr.bf16.mxu0 %v876
        %3488 = vmatmul.mubr.bf16.gmra.mxu0 %v875
        %v3489 = vpop.f32.mrf.mxu0
        %v3490 = vadd.f32 %v756, %v3489
        %v3491 = vpop.f32.mrf.mxu0
        %v3492 = vadd.f32 %v760, %v3491
        %v3493 = vpop.f32.mrf.mxu0
        %v3494 = vadd.f32 %v756, %v3493
        %v3495 = vpop.f32.mrf.mxu0
        %v3496 = vadd.f32 %v760, %v3495
        %3497 = vmatprep.mubr.bf16.mxu0 %v880
        %3498 = vmatmul.mubr.bf16.gmra.mxu0 %v879
        %v3499 = vpop.f32.mrf.mxu0
        %v3500 = vadd.f32 %v756, %v3499
        %v3501 = vpop.f32.mrf.mxu0
        %v3502 = vadd.f32 %v760, %v3501
        %v3503 = vpop.f32.mrf.mxu0
        %v3504 = vadd.f32 %v756, %v3503
        %v3505 = vpop.f32.mrf.mxu0
        %v3506 = vadd.f32 %v760, %v3505
        %3507 = vmatprep.mubr.bf16.mxu0 %v884
        %3508 = vmatmul.mubr.bf16.gmra.mxu0 %v883
        %v3509 = vpop.f32.mrf.mxu0
        %v3510 = vadd.f32 %v756, %v3509
        %v3511 = vpop.f32.mrf.mxu0
        %v3512 = vadd.f32 %v760, %v3511
        %v3513 = vpop.f32.mrf.mxu0
        %v3514 = vadd.f32 %v756, %v3513
        %v3515 = vpop.f32.mrf.mxu0
        %v3516 = vadd.f32 %v760, %v3515
        %3517 = vmatprep.mubr.bf16.mxu0 %v888
        %3518 = vmatmul.mubr.bf16.gmra.mxu0 %v887
        %v3519 = vpop.f32.mrf.mxu0
        %v3520 = vadd.f32 %v756, %v3519
        %v3521 = vpop.f32.mrf.mxu0
        %v3522 = vadd.f32 %v760, %v3521
        %v3523 = vpop.f32.mrf.mxu0
        %v3524 = vadd.f32 %v756, %v3523
        %v3525 = vpop.f32.mrf.mxu0
        %v3526 = vadd.f32 %v760, %v3525
        %3527 = vmatprep.mubr.bf16.mxu0 %v892
        %3528 = vmatmul.mubr.bf16.gmra.mxu0 %v891
        %v3529 = vpop.f32.mrf.mxu0
        %v3530 = vadd.f32 %v756, %v3529
        %v3531 = vpop.f32.mrf.mxu0
        %v3532 = vadd.f32 %v760, %v3531
        %v3533 = vpop.f32.mrf.mxu0
        %v3534 = vadd.f32 %v756, %v3533
        %v3535 = vpop.f32.mrf.mxu0
        %v3536 = vadd.f32 %v760, %v3535
        %3537 = vmatprep.mubr.bf16.mxu0 %v896
        %3538 = vmatmul.mubr.bf16.gmra.mxu0 %v895
        %v3539 = vpop.f32.mrf.mxu0
        %v3540 = vadd.f32 %v756, %v3539
        %v3541 = vpop.f32.mrf.mxu0
        %v3542 = vadd.f32 %v760, %v3541
        %v3543 = vpop.f32.mrf.mxu0
        %v3544 = vadd.f32 %v756, %v3543
        %v3545 = vpop.f32.mrf.mxu0
        %v3546 = vadd.f32 %v760, %v3545
        %3547 = vdwg.mxu0
        %3548 = vmatprep.subr.bf16.mxu0 %v2130
        %3549 = vmatpush1.bf16.msra.mxu0 %v2129
        %3550 = vmatprep.subr.bf16.mxu0 %v2120
        %3551 = vmatpush1.bf16.msra.mxu0 %v2119
        %3552 = vmatprep.subr.bf16.mxu0 %v2110
        %3553 = vmatpush1.bf16.msra.mxu0 %v2109
        %3554 = vmatprep.subr.bf16.mxu0 %v2100
        %3555 = vmatpush1.bf16.msra.mxu0 %v2099
        %3556 = vmatprep.subr.bf16.mxu0 %v2090
        %3557 = vmatpush1.bf16.msra.mxu0 %v2089
        %3558 = vmatprep.subr.bf16.mxu0 %v2080
        %3559 = vmatpush1.bf16.msra.mxu0 %v2079
        %3560 = vmatprep.subr.bf16.mxu0 %v2070
        %3561 = vmatpush1.bf16.msra.mxu0 %v2069
        %3562 = vmatprep.subr.bf16.mxu0 %v2060
        %3563 = vmatpush1.bf16.msra.mxu0 %v2059
        %3564 = vmatprep.subr.bf16.mxu0 %v2210
        %3565 = vmatpush2.bf16.msra.mxu0 %v2209
        %3566 = vmatprep.subr.bf16.mxu0 %v2200
        %3567 = vmatpush2.bf16.msra.mxu0 %v2199
        %3568 = vmatprep.subr.bf16.mxu0 %v2190
        %3569 = vmatpush2.bf16.msra.mxu0 %v2189
        %3570 = vmatprep.subr.bf16.mxu0 %v2180
        %3571 = vmatpush2.bf16.msra.mxu0 %v2179
        %3572 = vmatprep.subr.bf16.mxu0 %v2170
        %3573 = vmatpush2.bf16.msra.mxu0 %v2169
        %3574 = vmatprep.subr.bf16.mxu0 %v2160
        %3575 = vmatpush2.bf16.msra.mxu0 %v2159
        %3576 = vmatprep.subr.bf16.mxu0 %v2150
        %3577 = vmatpush2.bf16.msra.mxu0 %v2149
        %3578 = vmatprep.subr.bf16.mxu0 %v2140
        %3579 = vmatpush2.bf16.msra.mxu0 %v2139
        %3580 = vmatprep.mubr.bf16.mxu0 %v870
        %3581 = vmatmul.mubr.bf16.gmra.mxu0 %v869
        %v3582 = vpop.f32.mrf.mxu0
        %v3583 = vadd.f32 %v3470, %v3582
        %v3584 = vpop.f32.mrf.mxu0
        %v3585 = vadd.f32 %v3472, %v3584
        %v3586 = vpop.f32.mrf.mxu0
        %v3587 = vadd.f32 %v3474, %v3586
        %v3588 = vpop.f32.mrf.mxu0
        %v3589 = vadd.f32 %v3476, %v3588
        %3590 = vmatprep.mubr.bf16.mxu0 %v874
        %3591 = vmatmul.mubr.bf16.gmra.mxu0 %v873
        %v3592 = vpop.f32.mrf.mxu0
        %v3593 = vadd.f32 %v3480, %v3592
        %v3594 = vpop.f32.mrf.mxu0
        %v3595 = vadd.f32 %v3482, %v3594
        %v3596 = vpop.f32.mrf.mxu0
        %v3597 = vadd.f32 %v3484, %v3596
        %v3598 = vpop.f32.mrf.mxu0
        %v3599 = vadd.f32 %v3486, %v3598
        %3600 = vmatprep.mubr.bf16.mxu0 %v878
        %3601 = vmatmul.mubr.bf16.gmra.mxu0 %v877
        %v3602 = vpop.f32.mrf.mxu0
        %v3603 = vadd.f32 %v3490, %v3602
        %v3604 = vpop.f32.mrf.mxu0
        %v3605 = vadd.f32 %v3492, %v3604
        %v3606 = vpop.f32.mrf.mxu0
        %v3607 = vadd.f32 %v3494, %v3606
        %v3608 = vpop.f32.mrf.mxu0
        %v3609 = vadd.f32 %v3496, %v3608
        %3610 = vmatprep.mubr.bf16.mxu0 %v882
        %3611 = vmatmul.mubr.bf16.gmra.mxu0 %v881
        %v3612 = vpop.f32.mrf.mxu0
        %v3613 = vadd.f32 %v3500, %v3612
        %v3614 = vpop.f32.mrf.mxu0
        %v3615 = vadd.f32 %v3502, %v3614
        %v3616 = vpop.f32.mrf.mxu0
        %v3617 = vadd.f32 %v3504, %v3616
        %v3618 = vpop.f32.mrf.mxu0
        %v3619 = vadd.f32 %v3506, %v3618
        %3620 = vmatprep.mubr.bf16.mxu0 %v886
        %3621 = vmatmul.mubr.bf16.gmra.mxu0 %v885
        %v3622 = vpop.f32.mrf.mxu0
        %v3623 = vadd.f32 %v3510, %v3622
        %v3624 = vpop.f32.mrf.mxu0
        %v3625 = vadd.f32 %v3512, %v3624
        %v3626 = vpop.f32.mrf.mxu0
        %v3627 = vadd.f32 %v3514, %v3626
        %v3628 = vpop.f32.mrf.mxu0
        %v3629 = vadd.f32 %v3516, %v3628
        %3630 = vmatprep.mubr.bf16.mxu0 %v890
        %3631 = vmatmul.mubr.bf16.gmra.mxu0 %v889
        %v3632 = vpop.f32.mrf.mxu0
        %v3633 = vadd.f32 %v3520, %v3632
        %v3634 = vpop.f32.mrf.mxu0
        %v3635 = vadd.f32 %v3522, %v3634
        %v3636 = vpop.f32.mrf.mxu0
        %v3637 = vadd.f32 %v3524, %v3636
        %v3638 = vpop.f32.mrf.mxu0
        %v3639 = vadd.f32 %v3526, %v3638
        %3640 = vmatprep.mubr.bf16.mxu0 %v894
        %3641 = vmatmul.mubr.bf16.gmra.mxu0 %v893
        %v3642 = vpop.f32.mrf.mxu0
        %v3643 = vadd.f32 %v3530, %v3642
        %v3644 = vpop.f32.mrf.mxu0
        %v3645 = vadd.f32 %v3532, %v3644
        %v3646 = vpop.f32.mrf.mxu0
        %v3647 = vadd.f32 %v3534, %v3646
        %v3648 = vpop.f32.mrf.mxu0
        %v3649 = vadd.f32 %v3536, %v3648
        %3650 = vmatprep.mubr.bf16.mxu0 %v898
        %3651 = vmatmul.mubr.bf16.gmra.mxu0 %v897
        %v3652 = vpop.f32.mrf.mxu0
        %v3653 = vadd.f32 %v3540, %v3652
        %v3654 = vpop.f32.mrf.mxu0
        %v3655 = vadd.f32 %v3542, %v3654
        %v3656 = vpop.f32.mrf.mxu0
        %v3657 = vadd.f32 %v3544, %v3656
        %v3658 = vpop.f32.mrf.mxu0
        %v3659 = vadd.f32 %v3546, %v3658
        %3660 = vdwg.mxu0
        %v3661 = vxor.u32 %v2679, 2147483648
        %v3662 = vxor.u32 %v2681, 2147483648
        %v3663 = vxor.u32 %v2905, 2147483648
        %v3664 = vxor.u32 %v2907, 2147483648
        %v3665 = vxor.u32 %v3131, 2147483648
        %v3666 = vxor.u32 %v3133, 2147483648
        %v3667 = vxor.u32 %v3357, 2147483648
        %v3668 = vxor.u32 %v3359, 2147483648
        %v3669 = vxor.u32 %v3583, 2147483648
        %v3670 = vxor.u32 %v3585, 2147483648
        %v3671 = vxor.u32 %v2683, 2147483648
        %v3672 = vxor.u32 %v2685, 2147483648
        %v3673 = vxor.u32 %v2909, 2147483648
        %v3674 = vxor.u32 %v2911, 2147483648
        %v3675 = vxor.u32 %v3135, 2147483648
        %v3676 = vxor.u32 %v3137, 2147483648
        %v3677 = vxor.u32 %v3361, 2147483648
        %v3678 = vxor.u32 %v3363, 2147483648
        %v3679 = vxor.u32 %v3587, 2147483648
        %v3680 = vxor.u32 %v3589, 2147483648
        %v3681 = vxor.u32 %v2689, 2147483648
        %v3682 = vxor.u32 %v2691, 2147483648
        %v3683 = vxor.u32 %v2915, 2147483648
        %v3684 = vxor.u32 %v2917, 2147483648
        %v3685 = vxor.u32 %v3141, 2147483648
        %v3686 = vxor.u32 %v3143, 2147483648
        %v3687 = vxor.u32 %v3367, 2147483648
        %v3688 = vxor.u32 %v3369, 2147483648
        %v3689 = vxor.u32 %v3593, 2147483648
        %v3690 = vxor.u32 %v3595, 2147483648
        %v3691 = vxor.u32 %v2693, 2147483648
        %v3692 = vxor.u32 %v2695, 2147483648
        %v3693 = vxor.u32 %v2919, 2147483648
        %v3694 = vxor.u32 %v2921, 2147483648
        %v3695 = vxor.u32 %v3145, 2147483648
        %v3696 = vxor.u32 %v3147, 2147483648
        %v3697 = vxor.u32 %v3371, 2147483648
        %v3698 = vxor.u32 %v3373, 2147483648
        %v3699 = vxor.u32 %v3597, 2147483648
        %v3700 = vxor.u32 %v3599, 2147483648
        %v3701 = vxor.u32 %v2699, 2147483648
        %v3702 = vxor.u32 %v2701, 2147483648
        %v3703 = vxor.u32 %v2925, 2147483648
        %v3704 = vxor.u32 %v2927, 2147483648
        %v3705 = vxor.u32 %v3151, 2147483648
        %v3706 = vxor.u32 %v3153, 2147483648
        %v3707 = vxor.u32 %v3377, 2147483648
        %v3708 = vxor.u32 %v3379, 2147483648
        %v3709 = vxor.u32 %v3603, 2147483648
        %v3710 = vxor.u32 %v3605, 2147483648
        %v3711 = vxor.u32 %v2703, 2147483648
        %v3712 = vxor.u32 %v2705, 2147483648
        %v3713 = vxor.u32 %v2929, 2147483648
        %v3714 = vxor.u32 %v2931, 2147483648
        %v3715 = vxor.u32 %v3155, 2147483648
        %v3716 = vxor.u32 %v3157, 2147483648
        %v3717 = vxor.u32 %v3381, 2147483648
        %v3718 = vxor.u32 %v3383, 2147483648
        %v3719 = vxor.u32 %v3607, 2147483648
        %v3720 = vxor.u32 %v3609, 2147483648
        %v3721 = vxor.u32 %v2709, 2147483648
        %v3722 = vxor.u32 %v2711, 2147483648
        %v3723 = vxor.u32 %v2935, 2147483648
        %v3724 = vxor.u32 %v2937, 2147483648
        %v3725 = vxor.u32 %v3161, 2147483648
        %v3726 = vxor.u32 %v3163, 2147483648
        %v3727 = vxor.u32 %v3387, 2147483648
        %v3728 = vxor.u32 %v3389, 2147483648
        %v3729 = vxor.u32 %v3613, 2147483648
        %v3730 = vxor.u32 %v3615, 2147483648
        %v3731 = vxor.u32 %v2713, 2147483648
        %v3732 = vxor.u32 %v2715, 2147483648
        %v3733 = vxor.u32 %v2939, 2147483648
        %v3734 = vxor.u32 %v2941, 2147483648
        %v3735 = vxor.u32 %v3165, 2147483648
        %v3736 = vxor.u32 %v3167, 2147483648
        %v3737 = vxor.u32 %v3391, 2147483648
        %v3738 = vxor.u32 %v3393, 2147483648
        %v3739 = vxor.u32 %v3617, 2147483648
        %v3740 = vxor.u32 %v3619, 2147483648
        %v3741 = vxor.u32 %v2719, 2147483648
        %v3742 = vxor.u32 %v2721, 2147483648
        %v3743 = vxor.u32 %v2945, 2147483648
        %v3744 = vxor.u32 %v2947, 2147483648
        %v3745 = vxor.u32 %v3171, 2147483648
        %v3746 = vxor.u32 %v3173, 2147483648
        %v3747 = vxor.u32 %v3397, 2147483648
        %v3748 = vxor.u32 %v3399, 2147483648
        %v3749 = vxor.u32 %v3623, 2147483648
        %v3750 = vxor.u32 %v3625, 2147483648
        %v3751 = vxor.u32 %v2723, 2147483648
        %v3752 = vxor.u32 %v2725, 2147483648
        %v3753 = vxor.u32 %v2949, 2147483648
        %v3754 = vxor.u32 %v2951, 2147483648
        %v3755 = vxor.u32 %v3175, 2147483648
        %v3756 = vxor.u32 %v3177, 2147483648
        %v3757 = vxor.u32 %v3401, 2147483648
        %v3758 = vxor.u32 %v3403, 2147483648
        %v3759 = vxor.u32 %v3627, 2147483648
        %v3760 = vxor.u32 %v3629, 2147483648
        %v3761 = vxor.u32 %v2729, 2147483648
        %v3762 = vxor.u32 %v2731, 2147483648
        %v3763 = vxor.u32 %v2955, 2147483648
        %v3764 = vxor.u32 %v2957, 2147483648
        %v3765 = vxor.u32 %v3181, 2147483648
        %v3766 = vxor.u32 %v3183, 2147483648
        %v3767 = vxor.u32 %v3407, 2147483648
        %v3768 = vxor.u32 %v3409, 2147483648
        %v3769 = vxor.u32 %v3633, 2147483648
        %v3770 = vxor.u32 %v3635, 2147483648
        %v3771 = vxor.u32 %v2733, 2147483648
        %v3772 = vxor.u32 %v2735, 2147483648
        %v3773 = vxor.u32 %v2959, 2147483648
        %v3774 = vxor.u32 %v2961, 2147483648
        %v3775 = vxor.u32 %v3185, 2147483648
        %v3776 = vxor.u32 %v3187, 2147483648
        %v3777 = vxor.u32 %v3411, 2147483648
        %v3778 = vxor.u32 %v3413, 2147483648
        %v3779 = vxor.u32 %v3637, 2147483648
        %v3780 = vxor.u32 %v3639, 2147483648
        %v3781 = vxor.u32 %v2739, 2147483648
        %v3782 = vxor.u32 %v2741, 2147483648
        %v3783 = vxor.u32 %v2965, 2147483648
        %v3784 = vxor.u32 %v2967, 2147483648
        %v3785 = vxor.u32 %v3191, 2147483648
        %v3786 = vxor.u32 %v3193, 2147483648
        %v3787 = vxor.u32 %v3417, 2147483648
        %v3788 = vxor.u32 %v3419, 2147483648
        %v3789 = vxor.u32 %v3643, 2147483648
        %v3790 = vxor.u32 %v3645, 2147483648
        %v3791 = vxor.u32 %v2743, 2147483648
        %v3792 = vxor.u32 %v2745, 2147483648
        %v3793 = vxor.u32 %v2969, 2147483648
        %v3794 = vxor.u32 %v2971, 2147483648
        %v3795 = vxor.u32 %v3195, 2147483648
        %v3796 = vxor.u32 %v3197, 2147483648
        %v3797 = vxor.u32 %v3421, 2147483648
        %v3798 = vxor.u32 %v3423, 2147483648
        %v3799 = vxor.u32 %v3647, 2147483648
        %v3800 = vxor.u32 %v3649, 2147483648
        %v3801 = vxor.u32 %v2749, 2147483648
        %v3802 = vxor.u32 %v2751, 2147483648
        %v3803 = vxor.u32 %v2975, 2147483648
        %v3804 = vxor.u32 %v2977, 2147483648
        %v3805 = vxor.u32 %v3201, 2147483648
        %v3806 = vxor.u32 %v3203, 2147483648
        %v3807 = vxor.u32 %v3427, 2147483648
        %v3808 = vxor.u32 %v3429, 2147483648
        %v3809 = vxor.u32 %v3653, 2147483648
        %v3810 = vxor.u32 %v3655, 2147483648
        %v3811 = vxor.u32 %v2753, 2147483648
        %v3812 = vxor.u32 %v2755, 2147483648
        %v3813 = vxor.u32 %v2979, 2147483648
        %v3814 = vxor.u32 %v2981, 2147483648
        %v3815 = vxor.u32 %v3205, 2147483648
        %v3816 = vxor.u32 %v3207, 2147483648
        %v3817 = vxor.u32 %v3431, 2147483648
        %v3818 = vxor.u32 %v3433, 2147483648
        %v3819 = vxor.u32 %v3657, 2147483648
        %v3820 = vxor.u32 %v3659, 2147483648
        %v3821 = vmul.f32 %v3661, 1.442695
        %v3822 = vpow.pop %v3821
        %v3823 = vmul.f32 %v3662, 1.442695
        %v3824 = vpow.pop %v3823
        %v3825 = vmul.f32 %v3663, 1.442695
        %v3826 = vpow.pop %v3825
        %v3827 = vmul.f32 %v3664, 1.442695
        %v3828 = vpow.pop %v3827
        %v3829 = vmul.f32 %v3665, 1.442695
        %v3830 = vpow.pop %v3829
        %v3831 = vmul.f32 %v3666, 1.442695
        %v3832 = vpow.pop %v3831
        %v3833 = vmul.f32 %v3667, 1.442695
        %v3834 = vpow.pop %v3833
        %v3835 = vmul.f32 %v3668, 1.442695
        %v3836 = vpow.pop %v3835
        %v3837 = vmul.f32 %v3669, 1.442695
        %v3838 = vpow.pop %v3837
        %v3839 = vmul.f32 %v3670, 1.442695
        %v3840 = vpow.pop %v3839
        %v3841 = vmul.f32 %v3671, 1.442695
        %v3842 = vpow.pop %v3841
        %v3843 = vmul.f32 %v3672, 1.442695
        %v3844 = vpow.pop %v3843
        %v3845 = vmul.f32 %v3673, 1.442695
        %v3846 = vpow.pop %v3845
        %v3847 = vmul.f32 %v3674, 1.442695
        %v3848 = vpow.pop %v3847
        %v3849 = vmul.f32 %v3675, 1.442695
        %v3850 = vpow.pop %v3849
        %v3851 = vmul.f32 %v3676, 1.442695
        %v3852 = vpow.pop %v3851
        %v3853 = vmul.f32 %v3677, 1.442695
        %v3854 = vpow.pop %v3853
        %v3855 = vmul.f32 %v3678, 1.442695
        %v3856 = vpow.pop %v3855
        %v3857 = vmul.f32 %v3679, 1.442695
        %v3858 = vpow.pop %v3857
        %v3859 = vmul.f32 %v3680, 1.442695
        %v3860 = vpow.pop %v3859
        %v3861 = vmul.f32 %v3681, 1.442695
        %v3862 = vpow.pop %v3861
        %v3863 = vmul.f32 %v3682, 1.442695
        %v3864 = vpow.pop %v3863
        %v3865 = vmul.f32 %v3683, 1.442695
        %v3866 = vpow.pop %v3865
        %v3867 = vmul.f32 %v3684, 1.442695
        %v3868 = vpow.pop %v3867
        %v3869 = vmul.f32 %v3685, 1.442695
        %v3870 = vpow.pop %v3869
        %v3871 = vmul.f32 %v3686, 1.442695
        %v3872 = vpow.pop %v3871
        %v3873 = vmul.f32 %v3687, 1.442695
        %v3874 = vpow.pop %v3873
        %v3875 = vmul.f32 %v3688, 1.442695
        %v3876 = vpow.pop %v3875
        %v3877 = vmul.f32 %v3689, 1.442695
        %v3878 = vpow.pop %v3877
        %v3879 = vmul.f32 %v3690, 1.442695
        %v3880 = vpow.pop %v3879
        %v3881 = vmul.f32 %v3691, 1.442695
        %v3882 = vpow.pop %v3881
        %v3883 = vmul.f32 %v3692, 1.442695
        %v3884 = vpow.pop %v3883
        %v3885 = vmul.f32 %v3693, 1.442695
        %v3886 = vpow.pop %v3885
        %v3887 = vmul.f32 %v3694, 1.442695
        %v3888 = vpow.pop %v3887
        %v3889 = vmul.f32 %v3695, 1.442695
        %v3890 = vpow.pop %v3889
        %v3891 = vmul.f32 %v3696, 1.442695
        %v3892 = vpow.pop %v3891
        %v3893 = vmul.f32 %v3697, 1.442695
        %v3894 = vpow.pop %v3893
        %v3895 = vmul.f32 %v3698, 1.442695
        %v3896 = vpow.pop %v3895
        %v3897 = vmul.f32 %v3699, 1.442695
        %v3898 = vpow.pop %v3897
        %v3899 = vmul.f32 %v3700, 1.442695
        %v3900 = vpow.pop %v3899
        %v3901 = vmul.f32 %v3701, 1.442695
        %v3902 = vpow.pop %v3901
        %v3903 = vmul.f32 %v3702, 1.442695
        %v3904 = vpow.pop %v3903
        %v3905 = vmul.f32 %v3703, 1.442695
        %v3906 = vpow.pop %v3905
        %v3907 = vmul.f32 %v3704, 1.442695
        %v3908 = vpow.pop %v3907
        %v3909 = vmul.f32 %v3705, 1.442695
        %v3910 = vpow.pop %v3909
        %v3911 = vmul.f32 %v3706, 1.442695
        %v3912 = vpow.pop %v3911
        %v3913 = vmul.f32 %v3707, 1.442695
        %v3914 = vpow.pop %v3913
        %v3915 = vmul.f32 %v3708, 1.442695
        %v3916 = vpow.pop %v3915
        %v3917 = vmul.f32 %v3709, 1.442695
        %v3918 = vpow.pop %v3917
        %v3919 = vmul.f32 %v3710, 1.442695
        %v3920 = vpow.pop %v3919
        %v3921 = vmul.f32 %v3711, 1.442695
        %v3922 = vpow.pop %v3921
        %v3923 = vmul.f32 %v3712, 1.442695
        %v3924 = vpow.pop %v3923
        %v3925 = vmul.f32 %v3713, 1.442695
        %v3926 = vpow.pop %v3925
        %v3927 = vmul.f32 %v3714, 1.442695
        %v3928 = vpow.pop %v3927
        %v3929 = vmul.f32 %v3715, 1.442695
        %v3930 = vpow.pop %v3929
        %v3931 = vmul.f32 %v3716, 1.442695
        %v3932 = vpow.pop %v3931
        %v3933 = vmul.f32 %v3717, 1.442695
        %v3934 = vpow.pop %v3933
        %v3935 = vmul.f32 %v3718, 1.442695
        %v3936 = vpow.pop %v3935
        %v3937 = vmul.f32 %v3719, 1.442695
        %v3938 = vpow.pop %v3937
        %v3939 = vmul.f32 %v3720, 1.442695
        %v3940 = vpow.pop %v3939
        %v3941 = vmul.f32 %v3721, 1.442695
        %v3942 = vpow.pop %v3941
        %v3943 = vmul.f32 %v3722, 1.442695
        %v3944 = vpow.pop %v3943
        %v3945 = vmul.f32 %v3723, 1.442695
        %v3946 = vpow.pop %v3945
        %v3947 = vmul.f32 %v3724, 1.442695
        %v3948 = vpow.pop %v3947
        %v3949 = vmul.f32 %v3725, 1.442695
        %v3950 = vpow.pop %v3949
        %v3951 = vmul.f32 %v3726, 1.442695
        %v3952 = vpow.pop %v3951
        %v3953 = vmul.f32 %v3727, 1.442695
        %v3954 = vpow.pop %v3953
        %v3955 = vmul.f32 %v3728, 1.442695
        %v3956 = vpow.pop %v3955
        %v3957 = vmul.f32 %v3729, 1.442695
        %v3958 = vpow.pop %v3957
        %v3959 = vmul.f32 %v3730, 1.442695
        %v3960 = vpow.pop %v3959
        %v3961 = vmul.f32 %v3731, 1.442695
        %v3962 = vpow.pop %v3961
        %v3963 = vmul.f32 %v3732, 1.442695
        %v3964 = vpow.pop %v3963
        %v3965 = vmul.f32 %v3733, 1.442695
        %v3966 = vpow.pop %v3965
        %v3967 = vmul.f32 %v3734, 1.442695
        %v3968 = vpow.pop %v3967
        %v3969 = vmul.f32 %v3735, 1.442695
        %v3970 = vpow.pop %v3969
        %v3971 = vmul.f32 %v3736, 1.442695
        %v3972 = vpow.pop %v3971
        %v3973 = vmul.f32 %v3737, 1.442695
        %v3974 = vpow.pop %v3973
        %v3975 = vmul.f32 %v3738, 1.442695
        %v3976 = vpow.pop %v3975
        %v3977 = vmul.f32 %v3739, 1.442695
        %v3978 = vpow.pop %v3977
        %v3979 = vmul.f32 %v3740, 1.442695
        %v3980 = vpow.pop %v3979
        %v3981 = vmul.f32 %v3741, 1.442695
        %v3982 = vpow.pop %v3981
        %v3983 = vmul.f32 %v3742, 1.442695
        %v3984 = vpow.pop %v3983
        %v3985 = vmul.f32 %v3743, 1.442695
        %v3986 = vpow.pop %v3985
        %v3987 = vmul.f32 %v3744, 1.442695
        %v3988 = vpow.pop %v3987
        %v3989 = vmul.f32 %v3745, 1.442695
        %v3990 = vpow.pop %v3989
        %v3991 = vmul.f32 %v3746, 1.442695
        %v3992 = vpow.pop %v3991
        %v3993 = vmul.f32 %v3747, 1.442695
        %v3994 = vpow.pop %v3993
        %v3995 = vmul.f32 %v3748, 1.442695
        %v3996 = vpow.pop %v3995
        %v3997 = vmul.f32 %v3749, 1.442695
        %v3998 = vpow.pop %v3997
        %v3999 = vmul.f32 %v3750, 1.442695
        %v4000 = vpow.pop %v3999
        %v4001 = vmul.f32 %v3751, 1.442695
        %v4002 = vpow.pop %v4001
        %v4003 = vmul.f32 %v3752, 1.442695
        %v4004 = vpow.pop %v4003
        %v4005 = vmul.f32 %v3753, 1.442695
        %v4006 = vpow.pop %v4005
        %v4007 = vmul.f32 %v3754, 1.442695
        %v4008 = vpow.pop %v4007
        %v4009 = vmul.f32 %v3755, 1.442695
        %v4010 = vpow.pop %v4009
        %v4011 = vmul.f32 %v3756, 1.442695
        %v4012 = vpow.pop %v4011
        %v4013 = vmul.f32 %v3757, 1.442695
        %v4014 = vpow.pop %v4013
        %v4015 = vmul.f32 %v3758, 1.442695
        %v4016 = vpow.pop %v4015
        %v4017 = vmul.f32 %v3759, 1.442695
        %v4018 = vpow.pop %v4017
        %v4019 = vmul.f32 %v3760, 1.442695
        %v4020 = vpow.pop %v4019
        %v4021 = vmul.f32 %v3761, 1.442695
        %v4022 = vpow.pop %v4021
        %v4023 = vmul.f32 %v3762, 1.442695
        %v4024 = vpow.pop %v4023
        %v4025 = vmul.f32 %v3763, 1.442695
        %v4026 = vpow.pop %v4025
        %v4027 = vmul.f32 %v3764, 1.442695
        %v4028 = vpow.pop %v4027
        %v4029 = vmul.f32 %v3765, 1.442695
        %v4030 = vpow.pop %v4029
        %v4031 = vmul.f32 %v3766, 1.442695
        %v4032 = vpow.pop %v4031
        %v4033 = vmul.f32 %v3767, 1.442695
        %v4034 = vpow.pop %v4033
        %v4035 = vmul.f32 %v3768, 1.442695
        %v4036 = vpow.pop %v4035
        %v4037 = vmul.f32 %v3769, 1.442695
        %v4038 = vpow.pop %v4037
        %v4039 = vmul.f32 %v3770, 1.442695
        %v4040 = vpow.pop %v4039
        %v4041 = vmul.f32 %v3771, 1.442695
        %v4042 = vpow.pop %v4041
        %v4043 = vmul.f32 %v3772, 1.442695
        %v4044 = vpow.pop %v4043
        %v4045 = vmul.f32 %v3773, 1.442695
        %v4046 = vpow.pop %v4045
        %v4047 = vmul.f32 %v3774, 1.442695
        %v4048 = vpow.pop %v4047
        %v4049 = vmul.f32 %v3775, 1.442695
        %v4050 = vpow.pop %v4049
        %v4051 = vmul.f32 %v3776, 1.442695
        %v4052 = vpow.pop %v4051
        %v4053 = vmul.f32 %v3777, 1.442695
        %v4054 = vpow.pop %v4053
        %v4055 = vmul.f32 %v3778, 1.442695
        %v4056 = vpow.pop %v4055
        %v4057 = vmul.f32 %v3779, 1.442695
        %v4058 = vpow.pop %v4057
        %v4059 = vmul.f32 %v3780, 1.442695
        %v4060 = vpow.pop %v4059
        %v4061 = vmul.f32 %v3781, 1.442695
        %v4062 = vpow.pop %v4061
        %v4063 = vmul.f32 %v3782, 1.442695
        %v4064 = vpow.pop %v4063
        %v4065 = vmul.f32 %v3783, 1.442695
        %v4066 = vpow.pop %v4065
        %v4067 = vmul.f32 %v3784, 1.442695
        %v4068 = vpow.pop %v4067
        %v4069 = vmul.f32 %v3785, 1.442695
        %v4070 = vpow.pop %v4069
        %v4071 = vmul.f32 %v3786, 1.442695
        %v4072 = vpow.pop %v4071
        %v4073 = vmul.f32 %v3787, 1.442695
        %v4074 = vpow.pop %v4073
        %v4075 = vmul.f32 %v3788, 1.442695
        %v4076 = vpow.pop %v4075
        %v4077 = vmul.f32 %v3789, 1.442695
        %v4078 = vpow.pop %v4077
        %v4079 = vmul.f32 %v3790, 1.442695
        %v4080 = vpow.pop %v4079
        %v4081 = vmul.f32 %v3791, 1.442695
        %v4082 = vpow.pop %v4081
        %v4083 = vmul.f32 %v3792, 1.442695
        %v4084 = vpow.pop %v4083
        %v4085 = vmul.f32 %v3793, 1.442695
        %v4086 = vpow.pop %v4085
        %v4087 = vmul.f32 %v3794, 1.442695
        %v4088 = vpow.pop %v4087
        %v4089 = vmul.f32 %v3795, 1.442695
        %v4090 = vpow.pop %v4089
        %v4091 = vmul.f32 %v3796, 1.442695
        %v4092 = vpow.pop %v4091
        %v4093 = vmul.f32 %v3797, 1.442695
        %v4094 = vpow.pop %v4093
        %v4095 = vmul.f32 %v3798, 1.442695
        %v4096 = vpow.pop %v4095
        %v4097 = vmul.f32 %v3799, 1.442695
        %v4098 = vpow.pop %v4097
        %v4099 = vmul.f32 %v3800, 1.442695
        %v4100 = vpow.pop %v4099
        %v4101 = vmul.f32 %v3801, 1.442695
        %v4102 = vpow.pop %v4101
        %v4103 = vmul.f32 %v3802, 1.442695
        %v4104 = vpow.pop %v4103
        %v4105 = vmul.f32 %v3803, 1.442695
        %v4106 = vpow.pop %v4105
        %v4107 = vmul.f32 %v3804, 1.442695
        %v4108 = vpow.pop %v4107
        %v4109 = vmul.f32 %v3805, 1.442695
        %v4110 = vpow.pop %v4109
        %v4111 = vmul.f32 %v3806, 1.442695
        %v4112 = vpow.pop %v4111
        %v4113 = vmul.f32 %v3807, 1.442695
        %v4114 = vpow.pop %v4113
        %v4115 = vmul.f32 %v3808, 1.442695
        %v4116 = vpow.pop %v4115
        %v4117 = vmul.f32 %v3809, 1.442695
        %v4118 = vpow.pop %v4117
        %v4119 = vmul.f32 %v3810, 1.442695
        %v4120 = vpow.pop %v4119
        %v4121 = vmul.f32 %v3811, 1.442695
        %v4122 = vpow.pop %v4121
        %v4123 = vmul.f32 %v3812, 1.442695
        %v4124 = vpow.pop %v4123
        %v4125 = vmul.f32 %v3813, 1.442695
        %v4126 = vpow.pop %v4125
        %v4127 = vmul.f32 %v3814, 1.442695
        %v4128 = vpow.pop %v4127
        %v4129 = vmul.f32 %v3815, 1.442695
        %v4130 = vpow.pop %v4129
        %v4131 = vmul.f32 %v3816, 1.442695
        %v4132 = vpow.pop %v4131
        %v4133 = vmul.f32 %v3817, 1.442695
        %v4134 = vpow.pop %v4133
        %v4135 = vmul.f32 %v3818, 1.442695
        %v4136 = vpow.pop %v4135
        %v4137 = vmul.f32 %v3819, 1.442695
        %v4138 = vpow.pop %v4137
        %v4139 = vmul.f32 %v3820, 1.442695
        %v4140 = vpow.pop %v4139
        %v4141 = vadd.f32 %v3822, 1.0
        %v4142 = vadd.f32 %v3824, 1.0
        %v4143 = vadd.f32 %v3826, 1.0
        %v4144 = vadd.f32 %v3828, 1.0
        %v4145 = vadd.f32 %v3830, 1.0
        %v4146 = vadd.f32 %v3832, 1.0
        %v4147 = vadd.f32 %v3834, 1.0
        %v4148 = vadd.f32 %v3836, 1.0
        %v4149 = vadd.f32 %v3838, 1.0
        %v4150 = vadd.f32 %v3840, 1.0
        %v4151 = vadd.f32 %v3842, 1.0
        %v4152 = vadd.f32 %v3844, 1.0
        %v4153 = vadd.f32 %v3846, 1.0
        %v4154 = vadd.f32 %v3848, 1.0
        %v4155 = vadd.f32 %v3850, 1.0
        %v4156 = vadd.f32 %v3852, 1.0
        %v4157 = vadd.f32 %v3854, 1.0
        %v4158 = vadd.f32 %v3856, 1.0
        %v4159 = vadd.f32 %v3858, 1.0
        %v4160 = vadd.f32 %v3860, 1.0
        %v4161 = vadd.f32 %v3862, 1.0
        %v4162 = vadd.f32 %v3864, 1.0
        %v4163 = vadd.f32 %v3866, 1.0
        %v4164 = vadd.f32 %v3868, 1.0
        %v4165 = vadd.f32 %v3870, 1.0
        %v4166 = vadd.f32 %v3872, 1.0
        %v4167 = vadd.f32 %v3874, 1.0
        %v4168 = vadd.f32 %v3876, 1.0
        %v4169 = vadd.f32 %v3878, 1.0
        %v4170 = vadd.f32 %v3880, 1.0
        %v4171 = vadd.f32 %v3882, 1.0
        %v4172 = vadd.f32 %v3884, 1.0
        %v4173 = vadd.f32 %v3886, 1.0
        %v4174 = vadd.f32 %v3888, 1.0
        %v4175 = vadd.f32 %v3890, 1.0
        %v4176 = vadd.f32 %v3892, 1.0
        %v4177 = vadd.f32 %v3894, 1.0
        %v4178 = vadd.f32 %v3896, 1.0
        %v4179 = vadd.f32 %v3898, 1.0
        %v4180 = vadd.f32 %v3900, 1.0
        %v4181 = vadd.f32 %v3902, 1.0
        %v4182 = vadd.f32 %v3904, 1.0
        %v4183 = vadd.f32 %v3906, 1.0
        %v4184 = vadd.f32 %v3908, 1.0
        %v4185 = vadd.f32 %v3910, 1.0
        %v4186 = vadd.f32 %v3912, 1.0
        %v4187 = vadd.f32 %v3914, 1.0
        %v4188 = vadd.f32 %v3916, 1.0
        %v4189 = vadd.f32 %v3918, 1.0
        %v4190 = vadd.f32 %v3920, 1.0
        %v4191 = vadd.f32 %v3922, 1.0
        %v4192 = vadd.f32 %v3924, 1.0
        %v4193 = vadd.f32 %v3926, 1.0
        %v4194 = vadd.f32 %v3928, 1.0
        %v4195 = vadd.f32 %v3930, 1.0
        %v4196 = vadd.f32 %v3932, 1.0
        %v4197 = vadd.f32 %v3934, 1.0
        %v4198 = vadd.f32 %v3936, 1.0
        %v4199 = vadd.f32 %v3938, 1.0
        %v4200 = vadd.f32 %v3940, 1.0
        %v4201 = vadd.f32 %v3942, 1.0
        %v4202 = vadd.f32 %v3944, 1.0
        %v4203 = vadd.f32 %v3946, 1.0
        %v4204 = vadd.f32 %v3948, 1.0
        %v4205 = vadd.f32 %v3950, 1.0
        %v4206 = vadd.f32 %v3952, 1.0
        %v4207 = vadd.f32 %v3954, 1.0
        %v4208 = vadd.f32 %v3956, 1.0
        %v4209 = vadd.f32 %v3958, 1.0
        %v4210 = vadd.f32 %v3960, 1.0
        %v4211 = vadd.f32 %v3962, 1.0
        %v4212 = vadd.f32 %v3964, 1.0
        %v4213 = vadd.f32 %v3966, 1.0
        %v4214 = vadd.f32 %v3968, 1.0
        %v4215 = vadd.f32 %v3970, 1.0
        %v4216 = vadd.f32 %v3972, 1.0
        %v4217 = vadd.f32 %v3974, 1.0
        %v4218 = vadd.f32 %v3976, 1.0
        %v4219 = vadd.f32 %v3978, 1.0
        %v4220 = vadd.f32 %v3980, 1.0
        %v4221 = vadd.f32 %v3982, 1.0
        %v4222 = vadd.f32 %v3984, 1.0
        %v4223 = vadd.f32 %v3986, 1.0
        %v4224 = vadd.f32 %v3988, 1.0
        %v4225 = vadd.f32 %v3990, 1.0
        %v4226 = vadd.f32 %v3992, 1.0
        %v4227 = vadd.f32 %v3994, 1.0
        %v4228 = vadd.f32 %v3996, 1.0
        %v4229 = vadd.f32 %v3998, 1.0
        %v4230 = vadd.f32 %v4000, 1.0
        %v4231 = vadd.f32 %v4002, 1.0
        %v4232 = vadd.f32 %v4004, 1.0
        %v4233 = vadd.f32 %v4006, 1.0
        %v4234 = vadd.f32 %v4008, 1.0
        %v4235 = vadd.f32 %v4010, 1.0
        %v4236 = vadd.f32 %v4012, 1.0
        %v4237 = vadd.f32 %v4014, 1.0
        %v4238 = vadd.f32 %v4016, 1.0
        %v4239 = vadd.f32 %v4018, 1.0
        %v4240 = vadd.f32 %v4020, 1.0
        %v4241 = vadd.f32 %v4022, 1.0
        %v4242 = vadd.f32 %v4024, 1.0
        %v4243 = vadd.f32 %v4026, 1.0
        %v4244 = vadd.f32 %v4028, 1.0
        %v4245 = vadd.f32 %v4030, 1.0
        %v4246 = vadd.f32 %v4032, 1.0
        %v4247 = vadd.f32 %v4034, 1.0
        %v4248 = vadd.f32 %v4036, 1.0
        %v4249 = vadd.f32 %v4038, 1.0
        %v4250 = vadd.f32 %v4040, 1.0
        %v4251 = vadd.f32 %v4042, 1.0
        %v4252 = vadd.f32 %v4044, 1.0
        %v4253 = vadd.f32 %v4046, 1.0
        %v4254 = vadd.f32 %v4048, 1.0
        %v4255 = vadd.f32 %v4050, 1.0
        %v4256 = vadd.f32 %v4052, 1.0
        %v4257 = vadd.f32 %v4054, 1.0
        %v4258 = vadd.f32 %v4056, 1.0
        %v4259 = vadd.f32 %v4058, 1.0
        %v4260 = vadd.f32 %v4060, 1.0
        %v4261 = vadd.f32 %v4062, 1.0
        %v4262 = vadd.f32 %v4064, 1.0
        %v4263 = vadd.f32 %v4066, 1.0
        %v4264 = vadd.f32 %v4068, 1.0
        %v4265 = vadd.f32 %v4070, 1.0
        %v4266 = vadd.f32 %v4072, 1.0
        %v4267 = vadd.f32 %v4074, 1.0
        %v4268 = vadd.f32 %v4076, 1.0
        %v4269 = vadd.f32 %v4078, 1.0
        %v4270 = vadd.f32 %v4080, 1.0
        %v4271 = vadd.f32 %v4082, 1.0
        %v4272 = vadd.f32 %v4084, 1.0
        %v4273 = vadd.f32 %v4086, 1.0
        %v4274 = vadd.f32 %v4088, 1.0
        %v4275 = vadd.f32 %v4090, 1.0
        %v4276 = vadd.f32 %v4092, 1.0
        %v4277 = vadd.f32 %v4094, 1.0
        %v4278 = vadd.f32 %v4096, 1.0
        %v4279 = vadd.f32 %v4098, 1.0
        %v4280 = vadd.f32 %v4100, 1.0
        %v4281 = vadd.f32 %v4102, 1.0
        %v4282 = vadd.f32 %v4104, 1.0
        %v4283 = vadd.f32 %v4106, 1.0
        %v4284 = vadd.f32 %v4108, 1.0
        %v4285 = vadd.f32 %v4110, 1.0
        %v4286 = vadd.f32 %v4112, 1.0
        %v4287 = vadd.f32 %v4114, 1.0
        %v4288 = vadd.f32 %v4116, 1.0
        %v4289 = vadd.f32 %v4118, 1.0
        %v4290 = vadd.f32 %v4120, 1.0
        %v4291 = vadd.f32 %v4122, 1.0
        %v4292 = vadd.f32 %v4124, 1.0
        %v4293 = vadd.f32 %v4126, 1.0
        %v4294 = vadd.f32 %v4128, 1.0
        %v4295 = vadd.f32 %v4130, 1.0
        %v4296 = vadd.f32 %v4132, 1.0
        %v4297 = vadd.f32 %v4134, 1.0
        %v4298 = vadd.f32 %v4136, 1.0
        %v4299 = vadd.f32 %v4138, 1.0
        %v4300 = vadd.f32 %v4140, 1.0
        %v4301 = vrcp.pop %v4141
        %v4302 = vmul.f32 1.0, %v4301
        %v4303 = vrcp.pop %v4142
        %v4304 = vmul.f32 1.0, %v4303
        %v4305 = vrcp.pop %v4143
        %v4306 = vmul.f32 1.0, %v4305
        %v4307 = vrcp.pop %v4144
        %v4308 = vmul.f32 1.0, %v4307
        %v4309 = vrcp.pop %v4145
        %v4310 = vmul.f32 1.0, %v4309
        %v4311 = vrcp.pop %v4146
        %v4312 = vmul.f32 1.0, %v4311
        %v4313 = vrcp.pop %v4147
        %v4314 = vmul.f32 1.0, %v4313
        %v4315 = vrcp.pop %v4148
        %v4316 = vmul.f32 1.0, %v4315
        %v4317 = vrcp.pop %v4149
        %v4318 = vmul.f32 1.0, %v4317
        %v4319 = vrcp.pop %v4150
        %v4320 = vmul.f32 1.0, %v4319
        %v4321 = vrcp.pop %v4151
        %v4322 = vmul.f32 1.0, %v4321
        %v4323 = vrcp.pop %v4152
        %v4324 = vmul.f32 1.0, %v4323
        %v4325 = vrcp.pop %v4153
        %v4326 = vmul.f32 1.0, %v4325
        %v4327 = vrcp.pop %v4154
        %v4328 = vmul.f32 1.0, %v4327
        %v4329 = vrcp.pop %v4155
        %v4330 = vmul.f32 1.0, %v4329
        %v4331 = vrcp.pop %v4156
        %v4332 = vmul.f32 1.0, %v4331
        %v4333 = vrcp.pop %v4157
        %v4334 = vmul.f32 1.0, %v4333
        %v4335 = vrcp.pop %v4158
        %v4336 = vmul.f32 1.0, %v4335
        %v4337 = vrcp.pop %v4159
        %v4338 = vmul.f32 1.0, %v4337
        %v4339 = vrcp.pop %v4160
        %v4340 = vmul.f32 1.0, %v4339
        %v4341 = vrcp.pop %v4161
        %v4342 = vmul.f32 1.0, %v4341
        %v4343 = vrcp.pop %v4162
        %v4344 = vmul.f32 1.0, %v4343
        %v4345 = vrcp.pop %v4163
        %v4346 = vmul.f32 1.0, %v4345
        %v4347 = vrcp.pop %v4164
        %v4348 = vmul.f32 1.0, %v4347
        %v4349 = vrcp.pop %v4165
        %v4350 = vmul.f32 1.0, %v4349
        %v4351 = vrcp.pop %v4166
        %v4352 = vmul.f32 1.0, %v4351
        %v4353 = vrcp.pop %v4167
        %v4354 = vmul.f32 1.0, %v4353
        %v4355 = vrcp.pop %v4168
        %v4356 = vmul.f32 1.0, %v4355
        %v4357 = vrcp.pop %v4169
        %v4358 = vmul.f32 1.0, %v4357
        %v4359 = vrcp.pop %v4170
        %v4360 = vmul.f32 1.0, %v4359
        %v4361 = vrcp.pop %v4171
        %v4362 = vmul.f32 1.0, %v4361
        %v4363 = vrcp.pop %v4172
        %v4364 = vmul.f32 1.0, %v4363
        %v4365 = vrcp.pop %v4173
        %v4366 = vmul.f32 1.0, %v4365
        %v4367 = vrcp.pop %v4174
        %v4368 = vmul.f32 1.0, %v4367
        %v4369 = vrcp.pop %v4175
        %v4370 = vmul.f32 1.0, %v4369
        %v4371 = vrcp.pop %v4176
        %v4372 = vmul.f32 1.0, %v4371
        %v4373 = vrcp.pop %v4177
        %v4374 = vmul.f32 1.0, %v4373
        %v4375 = vrcp.pop %v4178
        %v4376 = vmul.f32 1.0, %v4375
        %v4377 = vrcp.pop %v4179
        %v4378 = vmul.f32 1.0, %v4377
        %v4379 = vrcp.pop %v4180
        %v4380 = vmul.f32 1.0, %v4379
        %v4381 = vrcp.pop %v4181
        %v4382 = vmul.f32 1.0, %v4381
        %v4383 = vrcp.pop %v4182
        %v4384 = vmul.f32 1.0, %v4383
        %v4385 = vrcp.pop %v4183
        %v4386 = vmul.f32 1.0, %v4385
        %v4387 = vrcp.pop %v4184
        %v4388 = vmul.f32 1.0, %v4387
        %v4389 = vrcp.pop %v4185
        %v4390 = vmul.f32 1.0, %v4389
        %v4391 = vrcp.pop %v4186
        %v4392 = vmul.f32 1.0, %v4391
        %v4393 = vrcp.pop %v4187
        %v4394 = vmul.f32 1.0, %v4393
        %v4395 = vrcp.pop %v4188
        %v4396 = vmul.f32 1.0, %v4395
        %v4397 = vrcp.pop %v4189
        %v4398 = vmul.f32 1.0, %v4397
        %v4399 = vrcp.pop %v4190
        %v4400 = vmul.f32 1.0, %v4399
        %v4401 = vrcp.pop %v4191
        %v4402 = vmul.f32 1.0, %v4401
        %v4403 = vrcp.pop %v4192
        %v4404 = vmul.f32 1.0, %v4403
        %v4405 = vrcp.pop %v4193
        %v4406 = vmul.f32 1.0, %v4405
        %v4407 = vrcp.pop %v4194
        %v4408 = vmul.f32 1.0, %v4407
        %v4409 = vrcp.pop %v4195
        %v4410 = vmul.f32 1.0, %v4409
        %v4411 = vrcp.pop %v4196
        %v4412 = vmul.f32 1.0, %v4411
        %v4413 = vrcp.pop %v4197
        %v4414 = vmul.f32 1.0, %v4413
        %v4415 = vrcp.pop %v4198
        %v4416 = vmul.f32 1.0, %v4415
        %v4417 = vrcp.pop %v4199
        %v4418 = vmul.f32 1.0, %v4417
        %v4419 = vrcp.pop %v4200
        %v4420 = vmul.f32 1.0, %v4419
        %v4421 = vrcp.pop %v4201
        %v4422 = vmul.f32 1.0, %v4421
        %v4423 = vrcp.pop %v4202
        %v4424 = vmul.f32 1.0, %v4423
        %v4425 = vrcp.pop %v4203
        %v4426 = vmul.f32 1.0, %v4425
        %v4427 = vrcp.pop %v4204
        %v4428 = vmul.f32 1.0, %v4427
        %v4429 = vrcp.pop %v4205
        %v4430 = vmul.f32 1.0, %v4429
        %v4431 = vrcp.pop %v4206
        %v4432 = vmul.f32 1.0, %v4431
        %v4433 = vrcp.pop %v4207
        %v4434 = vmul.f32 1.0, %v4433
        %v4435 = vrcp.pop %v4208
        %v4436 = vmul.f32 1.0, %v4435
        %v4437 = vrcp.pop %v4209
        %v4438 = vmul.f32 1.0, %v4437
        %v4439 = vrcp.pop %v4210
        %v4440 = vmul.f32 1.0, %v4439
        %v4441 = vrcp.pop %v4211
        %v4442 = vmul.f32 1.0, %v4441
        %v4443 = vrcp.pop %v4212
        %v4444 = vmul.f32 1.0, %v4443
        %v4445 = vrcp.pop %v4213
        %v4446 = vmul.f32 1.0, %v4445
        %v4447 = vrcp.pop %v4214
        %v4448 = vmul.f32 1.0, %v4447
        %v4449 = vrcp.pop %v4215
        %v4450 = vmul.f32 1.0, %v4449
        %v4451 = vrcp.pop %v4216
        %v4452 = vmul.f32 1.0, %v4451
        %v4453 = vrcp.pop %v4217
        %v4454 = vmul.f32 1.0, %v4453
        %v4455 = vrcp.pop %v4218
        %v4456 = vmul.f32 1.0, %v4455
        %v4457 = vrcp.pop %v4219
        %v4458 = vmul.f32 1.0, %v4457
        %v4459 = vrcp.pop %v4220
        %v4460 = vmul.f32 1.0, %v4459
        %v4461 = vrcp.pop %v4221
        %v4462 = vmul.f32 1.0, %v4461
        %v4463 = vrcp.pop %v4222
        %v4464 = vmul.f32 1.0, %v4463
        %v4465 = vrcp.pop %v4223
        %v4466 = vmul.f32 1.0, %v4465
        %v4467 = vrcp.pop %v4224
        %v4468 = vmul.f32 1.0, %v4467
        %v4469 = vrcp.pop %v4225
        %v4470 = vmul.f32 1.0, %v4469
        %v4471 = vrcp.pop %v4226
        %v4472 = vmul.f32 1.0, %v4471
        %v4473 = vrcp.pop %v4227
        %v4474 = vmul.f32 1.0, %v4473
        %v4475 = vrcp.pop %v4228
        %v4476 = vmul.f32 1.0, %v4475
        %v4477 = vrcp.pop %v4229
        %v4478 = vmul.f32 1.0, %v4477
        %v4479 = vrcp.pop %v4230
        %v4480 = vmul.f32 1.0, %v4479
        %v4481 = vrcp.pop %v4231
        %v4482 = vmul.f32 1.0, %v4481
        %v4483 = vrcp.pop %v4232
        %v4484 = vmul.f32 1.0, %v4483
        %v4485 = vrcp.pop %v4233
        %v4486 = vmul.f32 1.0, %v4485
        %v4487 = vrcp.pop %v4234
        %v4488 = vmul.f32 1.0, %v4487
        %v4489 = vrcp.pop %v4235
        %v4490 = vmul.f32 1.0, %v4489
        %v4491 = vrcp.pop %v4236
        %v4492 = vmul.f32 1.0, %v4491
        %v4493 = vrcp.pop %v4237
        %v4494 = vmul.f32 1.0, %v4493
        %v4495 = vrcp.pop %v4238
        %v4496 = vmul.f32 1.0, %v4495
        %v4497 = vrcp.pop %v4239
        %v4498 = vmul.f32 1.0, %v4497
        %v4499 = vrcp.pop %v4240
        %v4500 = vmul.f32 1.0, %v4499
        %v4501 = vrcp.pop %v4241
        %v4502 = vmul.f32 1.0, %v4501
        %v4503 = vrcp.pop %v4242
        %v4504 = vmul.f32 1.0, %v4503
        %v4505 = vrcp.pop %v4243
        %v4506 = vmul.f32 1.0, %v4505
        %v4507 = vrcp.pop %v4244
        %v4508 = vmul.f32 1.0, %v4507
        %v4509 = vrcp.pop %v4245
        %v4510 = vmul.f32 1.0, %v4509
        %v4511 = vrcp.pop %v4246
        %v4512 = vmul.f32 1.0, %v4511
        %v4513 = vrcp.pop %v4247
        %v4514 = vmul.f32 1.0, %v4513
        %v4515 = vrcp.pop %v4248
        %v4516 = vmul.f32 1.0, %v4515
        %v4517 = vrcp.pop %v4249
        %v4518 = vmul.f32 1.0, %v4517
        %v4519 = vrcp.pop %v4250
        %v4520 = vmul.f32 1.0, %v4519
        %v4521 = vrcp.pop %v4251
        %v4522 = vmul.f32 1.0, %v4521
        %v4523 = vrcp.pop %v4252
        %v4524 = vmul.f32 1.0, %v4523
        %v4525 = vrcp.pop %v4253
        %v4526 = vmul.f32 1.0, %v4525
        %v4527 = vrcp.pop %v4254
        %v4528 = vmul.f32 1.0, %v4527
        %v4529 = vrcp.pop %v4255
        %v4530 = vmul.f32 1.0, %v4529
        %v4531 = vrcp.pop %v4256
        %v4532 = vmul.f32 1.0, %v4531
        %v4533 = vrcp.pop %v4257
        %v4534 = vmul.f32 1.0, %v4533
        %v4535 = vrcp.pop %v4258
        %v4536 = vmul.f32 1.0, %v4535
        %v4537 = vrcp.pop %v4259
        %v4538 = vmul.f32 1.0, %v4537
        %v4539 = vrcp.pop %v4260
        %v4540 = vmul.f32 1.0, %v4539
        %v4541 = vrcp.pop %v4261
        %v4542 = vmul.f32 1.0, %v4541
        %v4543 = vrcp.pop %v4262
        %v4544 = vmul.f32 1.0, %v4543
        %v4545 = vrcp.pop %v4263
        %v4546 = vmul.f32 1.0, %v4545
        %v4547 = vrcp.pop %v4264
        %v4548 = vmul.f32 1.0, %v4547
        %v4549 = vrcp.pop %v4265
        %v4550 = vmul.f32 1.0, %v4549
        %v4551 = vrcp.pop %v4266
        %v4552 = vmul.f32 1.0, %v4551
        %v4553 = vrcp.pop %v4267
        %v4554 = vmul.f32 1.0, %v4553
        %v4555 = vrcp.pop %v4268
        %v4556 = vmul.f32 1.0, %v4555
        %v4557 = vrcp.pop %v4269
        %v4558 = vmul.f32 1.0, %v4557
        %v4559 = vrcp.pop %v4270
        %v4560 = vmul.f32 1.0, %v4559
        %v4561 = vrcp.pop %v4271
        %v4562 = vmul.f32 1.0, %v4561
        %v4563 = vrcp.pop %v4272
        %v4564 = vmul.f32 1.0, %v4563
        %v4565 = vrcp.pop %v4273
        %v4566 = vmul.f32 1.0, %v4565
        %v4567 = vrcp.pop %v4274
        %v4568 = vmul.f32 1.0, %v4567
        %v4569 = vrcp.pop %v4275
        %v4570 = vmul.f32 1.0, %v4569
        %v4571 = vrcp.pop %v4276
        %v4572 = vmul.f32 1.0, %v4571
        %v4573 = vrcp.pop %v4277
        %v4574 = vmul.f32 1.0, %v4573
        %v4575 = vrcp.pop %v4278
        %v4576 = vmul.f32 1.0, %v4575
        %v4577 = vrcp.pop %v4279
        %v4578 = vmul.f32 1.0, %v4577
        %v4579 = vrcp.pop %v4280
        %v4580 = vmul.f32 1.0, %v4579
        %v4581 = vrcp.pop %v4281
        %v4582 = vmul.f32 1.0, %v4581
        %v4583 = vrcp.pop %v4282
        %v4584 = vmul.f32 1.0, %v4583
        %v4585 = vrcp.pop %v4283
        %v4586 = vmul.f32 1.0, %v4585
        %v4587 = vrcp.pop %v4284
        %v4588 = vmul.f32 1.0, %v4587
        %v4589 = vrcp.pop %v4285
        %v4590 = vmul.f32 1.0, %v4589
        %v4591 = vrcp.pop %v4286
        %v4592 = vmul.f32 1.0, %v4591
        %v4593 = vrcp.pop %v4287
        %v4594 = vmul.f32 1.0, %v4593
        %v4595 = vrcp.pop %v4288
        %v4596 = vmul.f32 1.0, %v4595
        %v4597 = vrcp.pop %v4289
        %v4598 = vmul.f32 1.0, %v4597
        %v4599 = vrcp.pop %v4290
        %v4600 = vmul.f32 1.0, %v4599
        %v4601 = vrcp.pop %v4291
        %v4602 = vmul.f32 1.0, %v4601
        %v4603 = vrcp.pop %v4292
        %v4604 = vmul.f32 1.0, %v4603
        %v4605 = vrcp.pop %v4293
        %v4606 = vmul.f32 1.0, %v4605
        %v4607 = vrcp.pop %v4294
        %v4608 = vmul.f32 1.0, %v4607
        %v4609 = vrcp.pop %v4295
        %v4610 = vmul.f32 1.0, %v4609
        %v4611 = vrcp.pop %v4296
        %v4612 = vmul.f32 1.0, %v4611
        %v4613 = vrcp.pop %v4297
        %v4614 = vmul.f32 1.0, %v4613
        %v4615 = vrcp.pop %v4298
        %v4616 = vmul.f32 1.0, %v4615
        %v4617 = vrcp.pop %v4299
        %v4618 = vmul.f32 1.0, %v4617
        %v4619 = vrcp.pop %v4300
        %v4620 = vmul.f32 1.0, %v4619
        %v4621 = vmul.f32 %v2679, %v4302
        %v4622 = vmul.f32 %v2681, %v4304
        %v4623 = vmul.f32 %v2905, %v4306
        %v4624 = vmul.f32 %v2907, %v4308
        %v4625 = vmul.f32 %v3131, %v4310
        %v4626 = vmul.f32 %v3133, %v4312
        %v4627 = vmul.f32 %v3357, %v4314
        %v4628 = vmul.f32 %v3359, %v4316
        %v4629 = vmul.f32 %v3583, %v4318
        %v4630 = vmul.f32 %v3585, %v4320
        %v4631 = vmul.f32 %v2683, %v4322
        %v4632 = vmul.f32 %v2685, %v4324
        %v4633 = vmul.f32 %v2909, %v4326
        %v4634 = vmul.f32 %v2911, %v4328
        %v4635 = vmul.f32 %v3135, %v4330
        %v4636 = vmul.f32 %v3137, %v4332
        %v4637 = vmul.f32 %v3361, %v4334
        %v4638 = vmul.f32 %v3363, %v4336
        %v4639 = vmul.f32 %v3587, %v4338
        %v4640 = vmul.f32 %v3589, %v4340
        %v4641 = vmul.f32 %v2689, %v4342
        %v4642 = vmul.f32 %v2691, %v4344
        %v4643 = vmul.f32 %v2915, %v4346
        %v4644 = vmul.f32 %v2917, %v4348
        %v4645 = vmul.f32 %v3141, %v4350
        %v4646 = vmul.f32 %v3143, %v4352
        %v4647 = vmul.f32 %v3367, %v4354
        %v4648 = vmul.f32 %v3369, %v4356
        %v4649 = vmul.f32 %v3593, %v4358
        %v4650 = vmul.f32 %v3595, %v4360
        %v4651 = vmul.f32 %v2693, %v4362
        %v4652 = vmul.f32 %v2695, %v4364
        %v4653 = vmul.f32 %v2919, %v4366
        %v4654 = vmul.f32 %v2921, %v4368
        %v4655 = vmul.f32 %v3145, %v4370
        %v4656 = vmul.f32 %v3147, %v4372
        %v4657 = vmul.f32 %v3371, %v4374
        %v4658 = vmul.f32 %v3373, %v4376
        %v4659 = vmul.f32 %v3597, %v4378
        %v4660 = vmul.f32 %v3599, %v4380
        %v4661 = vmul.f32 %v2699, %v4382
        %v4662 = vmul.f32 %v2701, %v4384
        %v4663 = vmul.f32 %v2925, %v4386
        %v4664 = vmul.f32 %v2927, %v4388
        %v4665 = vmul.f32 %v3151, %v4390
        %v4666 = vmul.f32 %v3153, %v4392
        %v4667 = vmul.f32 %v3377, %v4394
        %v4668 = vmul.f32 %v3379, %v4396
        %v4669 = vmul.f32 %v3603, %v4398
        %v4670 = vmul.f32 %v3605, %v4400
        %v4671 = vmul.f32 %v2703, %v4402
        %v4672 = vmul.f32 %v2705, %v4404
        %v4673 = vmul.f32 %v2929, %v4406
        %v4674 = vmul.f32 %v2931, %v4408
        %v4675 = vmul.f32 %v3155, %v4410
        %v4676 = vmul.f32 %v3157, %v4412
        %v4677 = vmul.f32 %v3381, %v4414
        %v4678 = vmul.f32 %v3383, %v4416
        %v4679 = vmul.f32 %v3607, %v4418
        %v4680 = vmul.f32 %v3609, %v4420
        %v4681 = vmul.f32 %v2709, %v4422
        %v4682 = vmul.f32 %v2711, %v4424
        %v4683 = vmul.f32 %v2935, %v4426
        %v4684 = vmul.f32 %v2937, %v4428
        %v4685 = vmul.f32 %v3161, %v4430
        %v4686 = vmul.f32 %v3163, %v4432
        %v4687 = vmul.f32 %v3387, %v4434
        %v4688 = vmul.f32 %v3389, %v4436
        %v4689 = vmul.f32 %v3613, %v4438
        %v4690 = vmul.f32 %v3615, %v4440
        %v4691 = vmul.f32 %v2713, %v4442
        %v4692 = vmul.f32 %v2715, %v4444
        %v4693 = vmul.f32 %v2939, %v4446
        %v4694 = vmul.f32 %v2941, %v4448
        %v4695 = vmul.f32 %v3165, %v4450
        %v4696 = vmul.f32 %v3167, %v4452
        %v4697 = vmul.f32 %v3391, %v4454
        %v4698 = vmul.f32 %v3393, %v4456
        %v4699 = vmul.f32 %v3617, %v4458
        %v4700 = vmul.f32 %v3619, %v4460
        %v4701 = vmul.f32 %v2719, %v4462
        %v4702 = vmul.f32 %v2721, %v4464
        %v4703 = vmul.f32 %v2945, %v4466
        %v4704 = vmul.f32 %v2947, %v4468
        %v4705 = vmul.f32 %v3171, %v4470
        %v4706 = vmul.f32 %v3173, %v4472
        %v4707 = vmul.f32 %v3397, %v4474
        %v4708 = vmul.f32 %v3399, %v4476
        %v4709 = vmul.f32 %v3623, %v4478
        %v4710 = vmul.f32 %v3625, %v4480
        %v4711 = vmul.f32 %v2723, %v4482
        %v4712 = vmul.f32 %v2725, %v4484
        %v4713 = vmul.f32 %v2949, %v4486
        %v4714 = vmul.f32 %v2951, %v4488
        %v4715 = vmul.f32 %v3175, %v4490
        %v4716 = vmul.f32 %v3177, %v4492
        %v4717 = vmul.f32 %v3401, %v4494
        %v4718 = vmul.f32 %v3403, %v4496
        %v4719 = vmul.f32 %v3627, %v4498
        %v4720 = vmul.f32 %v3629, %v4500
        %v4721 = vmul.f32 %v2729, %v4502
        %v4722 = vmul.f32 %v2731, %v4504
        %v4723 = vmul.f32 %v2955, %v4506
        %v4724 = vmul.f32 %v2957, %v4508
        %v4725 = vmul.f32 %v3181, %v4510
        %v4726 = vmul.f32 %v3183, %v4512
        %v4727 = vmul.f32 %v3407, %v4514
        %v4728 = vmul.f32 %v3409, %v4516
        %v4729 = vmul.f32 %v3633, %v4518
        %v4730 = vmul.f32 %v3635, %v4520
        %v4731 = vmul.f32 %v2733, %v4522
        %v4732 = vmul.f32 %v2735, %v4524
        %v4733 = vmul.f32 %v2959, %v4526
        %v4734 = vmul.f32 %v2961, %v4528
        %v4735 = vmul.f32 %v3185, %v4530
        %v4736 = vmul.f32 %v3187, %v4532
        %v4737 = vmul.f32 %v3411, %v4534
        %v4738 = vmul.f32 %v3413, %v4536
        %v4739 = vmul.f32 %v3637, %v4538
        %v4740 = vmul.f32 %v3639, %v4540
        %v4741 = vmul.f32 %v2739, %v4542
        %v4742 = vmul.f32 %v2741, %v4544
        %v4743 = vmul.f32 %v2965, %v4546
        %v4744 = vmul.f32 %v2967, %v4548
        %v4745 = vmul.f32 %v3191, %v4550
        %v4746 = vmul.f32 %v3193, %v4552
        %v4747 = vmul.f32 %v3417, %v4554
        %v4748 = vmul.f32 %v3419, %v4556
        %v4749 = vmul.f32 %v3643, %v4558
        %v4750 = vmul.f32 %v3645, %v4560
        %v4751 = vmul.f32 %v2743, %v4562
        %v4752 = vmul.f32 %v2745, %v4564
        %v4753 = vmul.f32 %v2969, %v4566
        %v4754 = vmul.f32 %v2971, %v4568
        %v4755 = vmul.f32 %v3195, %v4570
        %v4756 = vmul.f32 %v3197, %v4572
        %v4757 = vmul.f32 %v3421, %v4574
        %v4758 = vmul.f32 %v3423, %v4576
        %v4759 = vmul.f32 %v3647, %v4578
        %v4760 = vmul.f32 %v3649, %v4580
        %v4761 = vmul.f32 %v2749, %v4582
        %v4762 = vmul.f32 %v2751, %v4584
        %v4763 = vmul.f32 %v2975, %v4586
        %v4764 = vmul.f32 %v2977, %v4588
        %v4765 = vmul.f32 %v3201, %v4590
        %v4766 = vmul.f32 %v3203, %v4592
        %v4767 = vmul.f32 %v3427, %v4594
        %v4768 = vmul.f32 %v3429, %v4596
        %v4769 = vmul.f32 %v3653, %v4598
        %v4770 = vmul.f32 %v3655, %v4600
        %v4771 = vmul.f32 %v2753, %v4602
        %v4772 = vmul.f32 %v2755, %v4604
        %v4773 = vmul.f32 %v2979, %v4606
        %v4774 = vmul.f32 %v2981, %v4608
        %v4775 = vmul.f32 %v3205, %v4610
        %v4776 = vmul.f32 %v3207, %v4612
        %v4777 = vmul.f32 %v3431, %v4614
        %v4778 = vmul.f32 %v3433, %v4616
        %v4779 = vmul.f32 %v3657, %v4618
        %v4780 = vmul.f32 %v3659, %v4620
        %v4781 = vadd.f32 %v4621, %v4631
        %v4782 = vadd.f32 %v4781, %v4641
        %v4783 = vadd.f32 %v4782, %v4651
        %v4784 = vadd.f32 %v4783, %v4661
        %v4785 = vadd.f32 %v4784, %v4671
        %v4786 = vadd.f32 %v4785, %v4681
        %v4787 = vadd.f32 %v4786, %v4691
        %v4788 = vrot.slane %v4787, 4
        %v4789 = vadd.f32 %v4787, %v4788
        %v4790 = vrot.slane %v4789, 2
        %v4791 = vadd.f32 %v4789, %v4790
        %v4792 = vrot.slane %v4791, 1
        %v4793 = vadd.f32 %v4791, %v4792
        %v4794 = vadd.f32 %v4622, %v4632
        %v4795 = vadd.f32 %v4794, %v4642
        %v4796 = vadd.f32 %v4795, %v4652
        %v4797 = vadd.f32 %v4796, %v4662
        %v4798 = vadd.f32 %v4797, %v4672
        %v4799 = vadd.f32 %v4798, %v4682
        %v4800 = vadd.f32 %v4799, %v4692
        %v4801 = vrot.slane %v4800, 4
        %v4802 = vadd.f32 %v4800, %v4801
        %v4803 = vrot.slane %v4802, 2
        %v4804 = vadd.f32 %v4802, %v4803
        %v4805 = vrot.slane %v4804, 1
        %v4806 = vadd.f32 %v4804, %v4805
        %v4807 = vadd.f32 %v4623, %v4633
        %v4808 = vadd.f32 %v4807, %v4643
        %v4809 = vadd.f32 %v4808, %v4653
        %v4810 = vadd.f32 %v4809, %v4663
        %v4811 = vadd.f32 %v4810, %v4673
        %v4812 = vadd.f32 %v4811, %v4683
        %v4813 = vadd.f32 %v4812, %v4693
        %v4814 = vrot.slane %v4813, 4
        %v4815 = vadd.f32 %v4813, %v4814
        %v4816 = vrot.slane %v4815, 2
        %v4817 = vadd.f32 %v4815, %v4816
        %v4818 = vrot.slane %v4817, 1
        %v4819 = vadd.f32 %v4817, %v4818
        %v4820 = vadd.f32 %v4624, %v4634
        %v4821 = vadd.f32 %v4820, %v4644
        %v4822 = vadd.f32 %v4821, %v4654
        %v4823 = vadd.f32 %v4822, %v4664
        %v4824 = vadd.f32 %v4823, %v4674
        %v4825 = vadd.f32 %v4824, %v4684
        %v4826 = vadd.f32 %v4825, %v4694
        %v4827 = vrot.slane %v4826, 4
        %v4828 = vadd.f32 %v4826, %v4827
        %v4829 = vrot.slane %v4828, 2
        %v4830 = vadd.f32 %v4828, %v4829
        %v4831 = vrot.slane %v4830, 1
        %v4832 = vadd.f32 %v4830, %v4831
        %v4833 = vadd.f32 %v4625, %v4635
        %v4834 = vadd.f32 %v4833, %v4645
        %v4835 = vadd.f32 %v4834, %v4655
        %v4836 = vadd.f32 %v4835, %v4665
        %v4837 = vadd.f32 %v4836, %v4675
        %v4838 = vadd.f32 %v4837, %v4685
        %v4839 = vadd.f32 %v4838, %v4695
        %v4840 = vrot.slane %v4839, 4
        %v4841 = vadd.f32 %v4839, %v4840
        %v4842 = vrot.slane %v4841, 2
        %v4843 = vadd.f32 %v4841, %v4842
        %v4844 = vrot.slane %v4843, 1
        %v4845 = vadd.f32 %v4843, %v4844
        %v4846 = vadd.f32 %v4626, %v4636
        %v4847 = vadd.f32 %v4846, %v4646
        %v4848 = vadd.f32 %v4847, %v4656
        %v4849 = vadd.f32 %v4848, %v4666
        %v4850 = vadd.f32 %v4849, %v4676
        %v4851 = vadd.f32 %v4850, %v4686
        %v4852 = vadd.f32 %v4851, %v4696
        %v4853 = vrot.slane %v4852, 4
        %v4854 = vadd.f32 %v4852, %v4853
        %v4855 = vrot.slane %v4854, 2
        %v4856 = vadd.f32 %v4854, %v4855
        %v4857 = vrot.slane %v4856, 1
        %v4858 = vadd.f32 %v4856, %v4857
        %v4859 = vadd.f32 %v4627, %v4637
        %v4860 = vadd.f32 %v4859, %v4647
        %v4861 = vadd.f32 %v4860, %v4657
        %v4862 = vadd.f32 %v4861, %v4667
        %v4863 = vadd.f32 %v4862, %v4677
        %v4864 = vadd.f32 %v4863, %v4687
        %v4865 = vadd.f32 %v4864, %v4697
        %v4866 = vrot.slane %v4865, 4
        %v4867 = vadd.f32 %v4865, %v4866
        %v4868 = vrot.slane %v4867, 2
        %v4869 = vadd.f32 %v4867, %v4868
        %v4870 = vrot.slane %v4869, 1
        %v4871 = vadd.f32 %v4869, %v4870
        %v4872 = vadd.f32 %v4628, %v4638
        %v4873 = vadd.f32 %v4872, %v4648
        %v4874 = vadd.f32 %v4873, %v4658
        %v4875 = vadd.f32 %v4874, %v4668
        %v4876 = vadd.f32 %v4875, %v4678
        %v4877 = vadd.f32 %v4876, %v4688
        %v4878 = vadd.f32 %v4877, %v4698
        %v4879 = vrot.slane %v4878, 4
        %v4880 = vadd.f32 %v4878, %v4879
        %v4881 = vrot.slane %v4880, 2
        %v4882 = vadd.f32 %v4880, %v4881
        %v4883 = vrot.slane %v4882, 1
        %v4884 = vadd.f32 %v4882, %v4883
        %v4885 = vadd.f32 %v4629, %v4639
        %v4886 = vadd.f32 %v4885, %v4649
        %v4887 = vadd.f32 %v4886, %v4659
        %v4888 = vadd.f32 %v4887, %v4669
        %v4889 = vadd.f32 %v4888, %v4679
        %v4890 = vadd.f32 %v4889, %v4689
        %v4891 = vadd.f32 %v4890, %v4699
        %v4892 = vrot.slane %v4891, 4
        %v4893 = vadd.f32 %v4891, %v4892
        %v4894 = vrot.slane %v4893, 2
        %v4895 = vadd.f32 %v4893, %v4894
        %v4896 = vrot.slane %v4895, 1
        %v4897 = vadd.f32 %v4895, %v4896
        %v4898 = vadd.f32 %v4630, %v4640
        %v4899 = vadd.f32 %v4898, %v4650
        %v4900 = vadd.f32 %v4899, %v4660
        %v4901 = vadd.f32 %v4900, %v4670
        %v4902 = vadd.f32 %v4901, %v4680
        %v4903 = vadd.f32 %v4902, %v4690
        %v4904 = vadd.f32 %v4903, %v4700
        %v4905 = vrot.slane %v4904, 4
        %v4906 = vadd.f32 %v4904, %v4905
        %v4907 = vrot.slane %v4906, 2
        %v4908 = vadd.f32 %v4906, %v4907
        %v4909 = vrot.slane %v4908, 1
        %v4910 = vadd.f32 %v4908, %v4909
        %v4911 = vadd.f32 %v4701, %v4711
        %v4912 = vadd.f32 %v4911, %v4721
        %v4913 = vadd.f32 %v4912, %v4731
        %v4914 = vadd.f32 %v4913, %v4741
        %v4915 = vadd.f32 %v4914, %v4751
        %v4916 = vadd.f32 %v4915, %v4761
        %v4917 = vadd.f32 %v4916, %v4771
        %v4918 = vrot.slane %v4917, 4
        %v4919 = vadd.f32 %v4917, %v4918
        %v4920 = vrot.slane %v4919, 2
        %v4921 = vadd.f32 %v4919, %v4920
        %v4922 = vrot.slane %v4921, 1
        %v4923 = vadd.f32 %v4921, %v4922
        %v4924 = vadd.f32 %v4702, %v4712
        %v4925 = vadd.f32 %v4924, %v4722
        %v4926 = vadd.f32 %v4925, %v4732
        %v4927 = vadd.f32 %v4926, %v4742
        %v4928 = vadd.f32 %v4927, %v4752
        %v4929 = vadd.f32 %v4928, %v4762
        %v4930 = vadd.f32 %v4929, %v4772
        %v4931 = vrot.slane %v4930, 4
        %v4932 = vadd.f32 %v4930, %v4931
        %v4933 = vrot.slane %v4932, 2
        %v4934 = vadd.f32 %v4932, %v4933
        %v4935 = vrot.slane %v4934, 1
        %v4936 = vadd.f32 %v4934, %v4935
        %v4937 = vadd.f32 %v4703, %v4713
        %v4938 = vadd.f32 %v4937, %v4723
        %v4939 = vadd.f32 %v4938, %v4733
        %v4940 = vadd.f32 %v4939, %v4743
        %v4941 = vadd.f32 %v4940, %v4753
        %v4942 = vadd.f32 %v4941, %v4763
        %v4943 = vadd.f32 %v4942, %v4773
        %v4944 = vrot.slane %v4943, 4
        %v4945 = vadd.f32 %v4943, %v4944
        %v4946 = vrot.slane %v4945, 2
        %v4947 = vadd.f32 %v4945, %v4946
        %v4948 = vrot.slane %v4947, 1
        %v4949 = vadd.f32 %v4947, %v4948
        %v4950 = vadd.f32 %v4704, %v4714
        %v4951 = vadd.f32 %v4950, %v4724
        %v4952 = vadd.f32 %v4951, %v4734
        %v4953 = vadd.f32 %v4952, %v4744
        %v4954 = vadd.f32 %v4953, %v4754
        %v4955 = vadd.f32 %v4954, %v4764
        %v4956 = vadd.f32 %v4955, %v4774
        %v4957 = vrot.slane %v4956, 4
        %v4958 = vadd.f32 %v4956, %v4957
        %v4959 = vrot.slane %v4958, 2
        %v4960 = vadd.f32 %v4958, %v4959
        %v4961 = vrot.slane %v4960, 1
        %v4962 = vadd.f32 %v4960, %v4961
        %v4963 = vadd.f32 %v4705, %v4715
        %v4964 = vadd.f32 %v4963, %v4725
        %v4965 = vadd.f32 %v4964, %v4735
        %v4966 = vadd.f32 %v4965, %v4745
        %v4967 = vadd.f32 %v4966, %v4755
        %v4968 = vadd.f32 %v4967, %v4765
        %v4969 = vadd.f32 %v4968, %v4775
        %v4970 = vrot.slane %v4969, 4
        %v4971 = vadd.f32 %v4969, %v4970
        %v4972 = vrot.slane %v4971, 2
        %v4973 = vadd.f32 %v4971, %v4972
        %v4974 = vrot.slane %v4973, 1
        %v4975 = vadd.f32 %v4973, %v4974
        %v4976 = vadd.f32 %v4706, %v4716
        %v4977 = vadd.f32 %v4976, %v4726
        %v4978 = vadd.f32 %v4977, %v4736
        %v4979 = vadd.f32 %v4978, %v4746
        %v4980 = vadd.f32 %v4979, %v4756
        %v4981 = vadd.f32 %v4980, %v4766
        %v4982 = vadd.f32 %v4981, %v4776
        %v4983 = vrot.slane %v4982, 4
        %v4984 = vadd.f32 %v4982, %v4983
        %v4985 = vrot.slane %v4984, 2
        %v4986 = vadd.f32 %v4984, %v4985
        %v4987 = vrot.slane %v4986, 1
        %v4988 = vadd.f32 %v4986, %v4987
        %v4989 = vadd.f32 %v4707, %v4717
        %v4990 = vadd.f32 %v4989, %v4727
        %v4991 = vadd.f32 %v4990, %v4737
        %v4992 = vadd.f32 %v4991, %v4747
        %v4993 = vadd.f32 %v4992, %v4757
        %v4994 = vadd.f32 %v4993, %v4767
        %v4995 = vadd.f32 %v4994, %v4777
        %v4996 = vrot.slane %v4995, 4
        %v4997 = vadd.f32 %v4995, %v4996
        %v4998 = vrot.slane %v4997, 2
        %v4999 = vadd.f32 %v4997, %v4998
        %v5000 = vrot.slane %v4999, 1
        %v5001 = vadd.f32 %v4999, %v5000
        %v5002 = vadd.f32 %v4708, %v4718
        %v5003 = vadd.f32 %v5002, %v4728
        %v5004 = vadd.f32 %v5003, %v4738
        %v5005 = vadd.f32 %v5004, %v4748
        %v5006 = vadd.f32 %v5005, %v4758
        %v5007 = vadd.f32 %v5006, %v4768
        %v5008 = vadd.f32 %v5007, %v4778
        %v5009 = vrot.slane %v5008, 4
        %v5010 = vadd.f32 %v5008, %v5009
        %v5011 = vrot.slane %v5010, 2
        %v5012 = vadd.f32 %v5010, %v5011
        %v5013 = vrot.slane %v5012, 1
        %v5014 = vadd.f32 %v5012, %v5013
        %v5015 = vadd.f32 %v4709, %v4719
        %v5016 = vadd.f32 %v5015, %v4729
        %v5017 = vadd.f32 %v5016, %v4739
        %v5018 = vadd.f32 %v5017, %v4749
        %v5019 = vadd.f32 %v5018, %v4759
        %v5020 = vadd.f32 %v5019, %v4769
        %v5021 = vadd.f32 %v5020, %v4779
        %v5022 = vrot.slane %v5021, 4
        %v5023 = vadd.f32 %v5021, %v5022
        %v5024 = vrot.slane %v5023, 2
        %v5025 = vadd.f32 %v5023, %v5024
        %v5026 = vrot.slane %v5025, 1
        %v5027 = vadd.f32 %v5025, %v5026
        %v5028 = vadd.f32 %v4710, %v4720
        %v5029 = vadd.f32 %v5028, %v4730
        %v5030 = vadd.f32 %v5029, %v4740
        %v5031 = vadd.f32 %v5030, %v4750
        %v5032 = vadd.f32 %v5031, %v4760
        %v5033 = vadd.f32 %v5032, %v4770
        %v5034 = vadd.f32 %v5033, %v4780
        %v5035 = vrot.slane %v5034, 4
        %v5036 = vadd.f32 %v5034, %v5035
        %v5037 = vrot.slane %v5036, 2
        %v5038 = vadd.f32 %v5036, %v5037
        %v5039 = vrot.slane %v5038, 1
        %v5040 = vadd.f32 %v5038, %v5039
        %v5041 = vpack.c.bf16 %v4793, %v4793
        %v5042 = vpack.c.bf16 %v4806, %v4806
        %v5043 = vpack.c.bf16 %v4819, %v4819
        %v5044 = vpack.c.bf16 %v4832, %v4832
        %v5045 = vpack.c.bf16 %v4845, %v4845
        %v5046 = vpack.c.bf16 %v4858, %v4858
        %v5047 = vpack.c.bf16 %v4871, %v4871
        %v5048 = vpack.c.bf16 %v4884, %v4884
        %v5049 = vpack.c.bf16 %v4897, %v4897
        %v5050 = vpack.c.bf16 %v4910, %v4910
        %v5051 = vpack.c.bf16 %v4923, %v4923
        %v5052 = vpack.c.bf16 %v4936, %v4936
        %v5053 = vpack.c.bf16 %v4949, %v4949
        %v5054 = vpack.c.bf16 %v4962, %v4962
        %v5055 = vpack.c.bf16 %v4975, %v4975
        %v5056 = vpack.c.bf16 %v4988, %v4988
        %v5057 = vpack.c.bf16 %v5001, %v5001
        %v5058 = vpack.c.bf16 %v5014, %v5014
        %v5059 = vpack.c.bf16 %v5027, %v5027
        %v5060 = vpack.c.bf16 %v5040, %v5040
        %v5061 = vld [vmem:[%s315] sm:$0xf]
        %v5062 = vld [vmem:[%s315 + $0x4] sm:$0xf]
        %v5063 = vld [vmem:[%s315 + $0x8] sm:$0xf]
        %v5064 = vld [vmem:[%s315 + $0xc] sm:$0xf]
        %v5065 = vld [vmem:[%s315 + $0x10] sm:$0xf]
        %v5066 = vld [vmem:[%s315 + $0x14] sm:$0xf]
        %v5067 = vld [vmem:[%s315 + $0x18] sm:$0xf]
        %v5068 = vld [vmem:[%s315 + $0x1c] sm:$0xf]
        %v5069 = vld [vmem:[%s315 + $0x20] sm:$0xf]
        %v5070 = vld [vmem:[%s315 + $0x24] sm:$0xf]
        %v5071 = vld [vmem:[%s315 + $0x28] sm:$0xf]
        %v5072 = vld [vmem:[%s315 + $0x2c] sm:$0xf]
        %v5073 = vld [vmem:[%s315 + $0x30] sm:$0xf]
        %v5074 = vld [vmem:[%s315 + $0x34] sm:$0xf]
        %v5075 = vld [vmem:[%s315 + $0x38] sm:$0xf]
        %v5076 = vld [vmem:[%s315 + $0x3c] sm:$0xf]
        %v5077 = vld [vmem:[%s315 + $0x40] sm:$0xf]
        %v5078 = vld [vmem:[%s315 + $0x44] sm:$0xf]
        %v5079 = vld [vmem:[%s315 + $0x48] sm:$0xf]
        %v5080 = vld [vmem:[%s315 + $0x4c] sm:$0xf]
        %v5081 = vld [vmem:[%s315 + $0x50] sm:$0xf]
        %v5082 = vld [vmem:[%s315 + $0x54] sm:$0xf]
        %v5083 = vld [vmem:[%s315 + $0x58] sm:$0xf]
        %v5084 = vld [vmem:[%s315 + $0x5c] sm:$0xf]
        %v5085 = vld [vmem:[%s315 + $0x60] sm:$0xf]
        %v5086 = vld [vmem:[%s315 + $0x64] sm:$0xf]
        %v5087 = vld [vmem:[%s315 + $0x68] sm:$0xf]
        %v5088 = vld [vmem:[%s315 + $0x6c] sm:$0xf]
        %v5089 = vld [vmem:[%s315 + $0x70] sm:$0xf]
        %v5090 = vld [vmem:[%s315 + $0x74] sm:$0xf]
        %v5091 = vld [vmem:[%s315 + $0x78] sm:$0xf]
        %v5092 = vld [vmem:[%s315 + $0x7c] sm:$0xf]
        %v5093 = vld [vmem:[%s315 + $0x80] sm:$0xf]
        %v5094 = vld [vmem:[%s315 + $0x84] sm:$0xf]
        %v5095 = vld [vmem:[%s315 + $0x88] sm:$0xf]
        %v5096 = vld [vmem:[%s315 + $0x8c] sm:$0xf]
        %v5097 = vld [vmem:[%s315 + $0x90] sm:$0xf]
        %v5098 = vld [vmem:[%s315 + $0x94] sm:$0xf]
        %v5099 = vld [vmem:[%s315 + $0x98] sm:$0xf]
        %v5100 = vld [vmem:[%s315 + $0x9c] sm:$0xf]
        %v5101 = vld [vmem:[%s315 + $0xa0] sm:$0xf]
        %v5102 = vld [vmem:[%s315 + $0xa4] sm:$0xf]
        %v5103 = vld [vmem:[%s315 + $0xa8] sm:$0xf]
        %v5104 = vld [vmem:[%s315 + $0xac] sm:$0xf]
        %v5105 = vld [vmem:[%s315 + $0xb0] sm:$0xf]
        %v5106 = vld [vmem:[%s315 + $0xb4] sm:$0xf]
        %v5107 = vld [vmem:[%s315 + $0xb8] sm:$0xf]
        %v5108 = vld [vmem:[%s315 + $0xbc] sm:$0xf]
        %v5109 = vld [vmem:[%s315 + $0xc0] sm:$0xf]
        %v5110 = vld [vmem:[%s315 + $0xc4] sm:$0xf]
        %v5111 = vld [vmem:[%s315 + $0xc8] sm:$0xf]
        %v5112 = vld [vmem:[%s315 + $0xcc] sm:$0xf]
        %v5113 = vld [vmem:[%s315 + $0xd0] sm:$0xf]
        %v5114 = vld [vmem:[%s315 + $0xd4] sm:$0xf]
        %v5115 = vld [vmem:[%s315 + $0xd8] sm:$0xf]
        %v5116 = vld [vmem:[%s315 + $0xdc] sm:$0xf]
        %v5117 = vld [vmem:[%s315 + $0xe0] sm:$0xf]
        %v5118 = vld [vmem:[%s315 + $0xe4] sm:$0xf]
        %v5119 = vld [vmem:[%s315 + $0xe8] sm:$0xf]
        %v5120 = vld [vmem:[%s315 + $0xec] sm:$0xf]
        %v5121 = vld [vmem:[%s315 + $0xf0] sm:$0xf]
        %v5122 = vld [vmem:[%s315 + $0xf4] sm:$0xf]
        %v5123 = vld [vmem:[%s315 + $0xf8] sm:$0xf]
        %v5124 = vld [vmem:[%s315 + $0xfc] sm:$0xf]
        %v5125 = vld [vmem:[%s315 + $0x100] sm:$0xf]
        %v5126 = vld [vmem:[%s315 + $0x104] sm:$0xf]
        %v5127 = vld [vmem:[%s315 + $0x108] sm:$0xf]
        %v5128 = vld [vmem:[%s315 + $0x10c] sm:$0xf]
        %v5129 = vld [vmem:[%s315 + $0x110] sm:$0xf]
        %v5130 = vld [vmem:[%s315 + $0x114] sm:$0xf]
        %v5131 = vld [vmem:[%s315 + $0x118] sm:$0xf]
        %v5132 = vld [vmem:[%s315 + $0x11c] sm:$0xf]
        %v5133 = vld [vmem:[%s315 + $0x120] sm:$0xf]
        %v5134 = vld [vmem:[%s315 + $0x124] sm:$0xf]
        %v5135 = vld [vmem:[%s315 + $0x128] sm:$0xf]
        %v5136 = vld [vmem:[%s315 + $0x12c] sm:$0xf]
        %v5137 = vld [vmem:[%s315 + $0x130] sm:$0xf]
        %v5138 = vld [vmem:[%s315 + $0x134] sm:$0xf]
        %v5139 = vld [vmem:[%s315 + $0x138] sm:$0xf]
        %v5140 = vld [vmem:[%s315 + $0x13c] sm:$0xf]
        %v5141 = vld [vmem:[%s315 + $0x140] sm:$0xf]
        %v5142 = vld [vmem:[%s315 + $0x144] sm:$0xf]
        %v5143 = vld [vmem:[%s315 + $0x148] sm:$0xf]
        %v5144 = vld [vmem:[%s315 + $0x14c] sm:$0xf]
        %v5145 = vld [vmem:[%s315 + $0x150] sm:$0xf]
        %v5146 = vld [vmem:[%s315 + $0x154] sm:$0xf]
        %v5147 = vld [vmem:[%s315 + $0x158] sm:$0xf]
        %v5148 = vld [vmem:[%s315 + $0x15c] sm:$0xf]
        %v5149 = vld [vmem:[%s315 + $0x160] sm:$0xf]
        %v5150 = vld [vmem:[%s315 + $0x164] sm:$0xf]
        %v5151 = vld [vmem:[%s315 + $0x168] sm:$0xf]
        %v5152 = vld [vmem:[%s315 + $0x16c] sm:$0xf]
        %v5153 = vld [vmem:[%s315 + $0x170] sm:$0xf]
        %v5154 = vld [vmem:[%s315 + $0x174] sm:$0xf]
        %v5155 = vld [vmem:[%s315 + $0x178] sm:$0xf]
        %v5156 = vld [vmem:[%s315 + $0x17c] sm:$0xf]
        %v5157 = vld [vmem:[%s315 + $0x180] sm:$0xf]
        %v5158 = vld [vmem:[%s315 + $0x184] sm:$0xf]
        %v5159 = vld [vmem:[%s315 + $0x188] sm:$0xf]
        %v5160 = vld [vmem:[%s315 + $0x18c] sm:$0xf]
        %v5161 = vld [vmem:[%s315 + $0x190] sm:$0xf]
        %v5162 = vld [vmem:[%s315 + $0x194] sm:$0xf]
        %v5163 = vld [vmem:[%s315 + $0x198] sm:$0xf]
        %v5164 = vld [vmem:[%s315 + $0x19c] sm:$0xf]
        %v5165 = vld [vmem:[%s315 + $0x1a0] sm:$0xf]
        %v5166 = vld [vmem:[%s315 + $0x1a4] sm:$0xf]
        %v5167 = vld [vmem:[%s315 + $0x1a8] sm:$0xf]
        %v5168 = vld [vmem:[%s315 + $0x1ac] sm:$0xf]
        %v5169 = vld [vmem:[%s315 + $0x1b0] sm:$0xf]
        %v5170 = vld [vmem:[%s315 + $0x1b4] sm:$0xf]
        %v5171 = vld [vmem:[%s315 + $0x1b8] sm:$0xf]
        %v5172 = vld [vmem:[%s315 + $0x1bc] sm:$0xf]
        %v5173 = vld [vmem:[%s315 + $0x1c0] sm:$0xf]
        %v5174 = vld [vmem:[%s315 + $0x1c4] sm:$0xf]
        %v5175 = vld [vmem:[%s315 + $0x1c8] sm:$0xf]
        %v5176 = vld [vmem:[%s315 + $0x1cc] sm:$0xf]
        %v5177 = vld [vmem:[%s315 + $0x1d0] sm:$0xf]
        %v5178 = vld [vmem:[%s315 + $0x1d4] sm:$0xf]
        %v5179 = vld [vmem:[%s315 + $0x1d8] sm:$0xf]
        %v5180 = vld [vmem:[%s315 + $0x1dc] sm:$0xf]
        %v5181 = vld [vmem:[%s315 + $0x1e0] sm:$0xf]
        %v5182 = vld [vmem:[%s315 + $0x1e4] sm:$0xf]
        %v5183 = vld [vmem:[%s315 + $0x1e8] sm:$0xf]
        %v5184 = vld [vmem:[%s315 + $0x1ec] sm:$0xf]
        %v5185 = vld [vmem:[%s315 + $0x1f0] sm:$0xf]
        %v5186 = vld [vmem:[%s315 + $0x1f4] sm:$0xf]
        %v5187 = vld [vmem:[%s315 + $0x1f8] sm:$0xf]
        %v5188 = vld [vmem:[%s315 + $0x1fc] sm:$0xf]
        %v5189 = vld [vmem:[%s315 + $0x200] sm:$0xf]
        %v5190 = vld [vmem:[%s315 + $0x204] sm:$0xf]
        %v5191 = vld [vmem:[%s315 + $0x208] sm:$0xf]
        %v5192 = vld [vmem:[%s315 + $0x20c] sm:$0xf]
        %v5193 = vld [vmem:[%s315 + $0x210] sm:$0xf]
        %v5194 = vld [vmem:[%s315 + $0x214] sm:$0xf]
        %v5195 = vld [vmem:[%s315 + $0x218] sm:$0xf]
        %v5196 = vld [vmem:[%s315 + $0x21c] sm:$0xf]
        %v5197 = vld [vmem:[%s315 + $0x220] sm:$0xf]
        %v5198 = vld [vmem:[%s315 + $0x224] sm:$0xf]
        %v5199 = vld [vmem:[%s315 + $0x228] sm:$0xf]
        %v5200 = vld [vmem:[%s315 + $0x22c] sm:$0xf]
        %v5201 = vld [vmem:[%s315 + $0x230] sm:$0xf]
        %v5202 = vld [vmem:[%s315 + $0x234] sm:$0xf]
        %v5203 = vld [vmem:[%s315 + $0x238] sm:$0xf]
        %v5204 = vld [vmem:[%s315 + $0x23c] sm:$0xf]
        %v5205 = vld [vmem:[%s315 + $0x240] sm:$0xf]
        %v5206 = vld [vmem:[%s315 + $0x244] sm:$0xf]
        %v5207 = vld [vmem:[%s315 + $0x248] sm:$0xf]
        %v5208 = vld [vmem:[%s315 + $0x24c] sm:$0xf]
        %v5209 = vld [vmem:[%s315 + $0x250] sm:$0xf]
        %v5210 = vld [vmem:[%s315 + $0x254] sm:$0xf]
        %v5211 = vld [vmem:[%s315 + $0x258] sm:$0xf]
        %v5212 = vld [vmem:[%s315 + $0x25c] sm:$0xf]
        %v5213 = vld [vmem:[%s315 + $0x260] sm:$0xf]
        %v5214 = vld [vmem:[%s315 + $0x264] sm:$0xf]
        %v5215 = vld [vmem:[%s315 + $0x268] sm:$0xf]
        %v5216 = vld [vmem:[%s315 + $0x26c] sm:$0xf]
        %v5217 = vld [vmem:[%s315 + $0x270] sm:$0xf]
        %v5218 = vld [vmem:[%s315 + $0x274] sm:$0xf]
        %v5219 = vld [vmem:[%s315 + $0x278] sm:$0xf]
        %v5220 = vld [vmem:[%s315 + $0x27c] sm:$0xf]
        %v5221 = vld [vmem:[%s323] sm:$0x1]
        %v5223 = vlaneseq
        %v5224 = vshrl.u32 %v5223, 7
        %v5225 = vsub.s32 0, %v5224
        %v5226 = vrot.slane %v5221, %v5225
        %v5248 = vunpack.c.l.b16 %v5041
        %v5249 = vunpack.c.l.b16 %v5042
        %v5250 = vunpack.c.l.b16 %v5043
        %v5251 = vunpack.c.l.b16 %v5044
        %v5252 = vunpack.c.l.b16 %v5045
        %v5253 = vunpack.c.l.b16 %v5046
        %v5254 = vunpack.c.l.b16 %v5047
        %v5255 = vunpack.c.l.b16 %v5048
        %v5256 = vunpack.c.l.b16 %v5049
        %v5257 = vunpack.c.l.b16 %v5050
        %v5258 = vunpack.c.l.b16 %v5051
        %v5259 = vunpack.c.l.b16 %v5052
        %v5260 = vunpack.c.l.b16 %v5053
        %v5261 = vunpack.c.l.b16 %v5054
        %v5262 = vunpack.c.l.b16 %v5055
        %v5263 = vunpack.c.l.b16 %v5056
        %v5264 = vunpack.c.l.b16 %v5057
        %v5265 = vunpack.c.l.b16 %v5058
        %v5266 = vunpack.c.l.b16 %v5059
        %v5267 = vunpack.c.l.b16 %v5060
        %vm5268 = vcmask 1041409
        %v5269 = vsel %vm5268, %v5258, %v5248
        %v5270 = vsel %vm5268, %v5259, %v5249
        %v5271 = vsel %vm5268, %v5260, %v5250
        %v5272 = vsel %vm5268, %v5261, %v5251
        %v5273 = vsel %vm5268, %v5262, %v5252
        %v5274 = vsel %vm5268, %v5263, %v5253
        %v5275 = vsel %vm5268, %v5264, %v5254
        %v5276 = vsel %vm5268, %v5265, %v5255
        %v5277 = vsel %vm5268, %v5266, %v5256
        %v5278 = vsel %vm5268, %v5267, %v5257
        %v5279 = vpack.c.b16 %v5269, %v5269
        %v5280 = vpack.c.b16 %v5270, %v5270
        %v5281 = vpack.c.b16 %v5271, %v5271
        %v5282 = vpack.c.b16 %v5272, %v5272
        %v5283 = vpack.c.b16 %v5273, %v5273
        %v5284 = vpack.c.b16 %v5274, %v5274
        %v5285 = vpack.c.b16 %v5275, %v5275
        %v5286 = vpack.c.b16 %v5276, %v5276
        %v5287 = vpack.c.b16 %v5277, %v5277
        %v5288 = vpack.c.b16 %v5278, %v5278
        %v5459 = vunpack.c.l.b16 %v5061
        %v5460 = vunpack.c.l.b16 %v5062
        %v5461 = vunpack.c.l.b16 %v5063
        %v5462 = vunpack.c.l.b16 %v5064
        %v5463 = vunpack.c.l.b16 %v5065
        %v5464 = vunpack.c.l.b16 %v5066
        %v5465 = vunpack.c.l.b16 %v5067
        %v5466 = vunpack.c.l.b16 %v5068
        %v5467 = vunpack.c.l.b16 %v5069
        %v5468 = vunpack.c.l.b16 %v5070
        %v5469 = vunpack.c.l.b16 %v5071
        %v5470 = vunpack.c.l.b16 %v5072
        %v5471 = vunpack.c.l.b16 %v5073
        %v5472 = vunpack.c.l.b16 %v5074
        %v5473 = vunpack.c.l.b16 %v5075
        %v5474 = vunpack.c.l.b16 %v5076
        %v5475 = vunpack.c.l.b16 %v5077
        %v5476 = vunpack.c.l.b16 %v5078
        %v5477 = vunpack.c.l.b16 %v5079
        %v5478 = vunpack.c.l.b16 %v5080
        %v5479 = vunpack.c.l.b16 %v5081
        %v5480 = vunpack.c.l.b16 %v5082
        %v5481 = vunpack.c.l.b16 %v5083
        %v5482 = vunpack.c.l.b16 %v5084
        %v5483 = vunpack.c.l.b16 %v5085
        %v5484 = vunpack.c.l.b16 %v5086
        %v5485 = vunpack.c.l.b16 %v5087
        %v5486 = vunpack.c.l.b16 %v5088
        %v5487 = vunpack.c.l.b16 %v5089
        %v5488 = vunpack.c.l.b16 %v5090
        %v5489 = vunpack.c.l.b16 %v5091
        %v5490 = vunpack.c.l.b16 %v5092
        %v5491 = vunpack.c.l.b16 %v5093
        %v5492 = vunpack.c.l.b16 %v5094
        %v5493 = vunpack.c.l.b16 %v5095
        %v5494 = vunpack.c.l.b16 %v5096
        %v5495 = vunpack.c.l.b16 %v5097
        %v5496 = vunpack.c.l.b16 %v5098
        %v5497 = vunpack.c.l.b16 %v5099
        %v5498 = vunpack.c.l.b16 %v5100
        %v5499 = vunpack.c.l.b16 %v5101
        %v5500 = vunpack.c.l.b16 %v5102
        %v5501 = vunpack.c.l.b16 %v5103
        %v5502 = vunpack.c.l.b16 %v5104
        %v5503 = vunpack.c.l.b16 %v5105
        %v5504 = vunpack.c.l.b16 %v5106
        %v5505 = vunpack.c.l.b16 %v5107
        %v5506 = vunpack.c.l.b16 %v5108
        %v5507 = vunpack.c.l.b16 %v5109
        %v5508 = vunpack.c.l.b16 %v5110
        %v5509 = vunpack.c.l.b16 %v5111
        %v5510 = vunpack.c.l.b16 %v5112
        %v5511 = vunpack.c.l.b16 %v5113
        %v5512 = vunpack.c.l.b16 %v5114
        %v5513 = vunpack.c.l.b16 %v5115
        %v5514 = vunpack.c.l.b16 %v5116
        %v5515 = vunpack.c.l.b16 %v5117
        %v5516 = vunpack.c.l.b16 %v5118
        %v5517 = vunpack.c.l.b16 %v5119
        %v5518 = vunpack.c.l.b16 %v5120
        %v5519 = vunpack.c.l.b16 %v5121
        %v5520 = vunpack.c.l.b16 %v5122
        %v5521 = vunpack.c.l.b16 %v5123
        %v5522 = vunpack.c.l.b16 %v5124
        %v5523 = vunpack.c.l.b16 %v5125
        %v5524 = vunpack.c.l.b16 %v5126
        %v5525 = vunpack.c.l.b16 %v5127
        %v5526 = vunpack.c.l.b16 %v5128
        %v5527 = vunpack.c.l.b16 %v5129
        %v5528 = vunpack.c.l.b16 %v5130
        %v5529 = vunpack.c.l.b16 %v5131
        %v5530 = vunpack.c.l.b16 %v5132
        %v5531 = vunpack.c.l.b16 %v5133
        %v5532 = vunpack.c.l.b16 %v5134
        %v5533 = vunpack.c.l.b16 %v5135
        %v5534 = vunpack.c.l.b16 %v5136
        %v5535 = vunpack.c.l.b16 %v5137
        %v5536 = vunpack.c.l.b16 %v5138
        %v5537 = vunpack.c.l.b16 %v5139
        %v5538 = vunpack.c.l.b16 %v5140
        %v5539 = vunpack.c.l.b16 %v5141
        %v5540 = vunpack.c.l.b16 %v5142
        %v5541 = vunpack.c.l.b16 %v5143
        %v5542 = vunpack.c.l.b16 %v5144
        %v5543 = vunpack.c.l.b16 %v5145
        %v5544 = vunpack.c.l.b16 %v5146
        %v5545 = vunpack.c.l.b16 %v5147
        %v5546 = vunpack.c.l.b16 %v5148
        %v5547 = vunpack.c.l.b16 %v5149
        %v5548 = vunpack.c.l.b16 %v5150
        %v5549 = vunpack.c.l.b16 %v5151
        %v5550 = vunpack.c.l.b16 %v5152
        %v5551 = vunpack.c.l.b16 %v5153
        %v5552 = vunpack.c.l.b16 %v5154
        %v5553 = vunpack.c.l.b16 %v5155
        %v5554 = vunpack.c.l.b16 %v5156
        %v5555 = vunpack.c.l.b16 %v5157
        %v5556 = vunpack.c.l.b16 %v5158
        %v5557 = vunpack.c.l.b16 %v5159
        %v5558 = vunpack.c.l.b16 %v5160
        %v5559 = vunpack.c.l.b16 %v5161
        %v5560 = vunpack.c.l.b16 %v5162
        %v5561 = vunpack.c.l.b16 %v5163
        %v5562 = vunpack.c.l.b16 %v5164
        %v5563 = vunpack.c.l.b16 %v5165
        %v5564 = vunpack.c.l.b16 %v5166
        %v5565 = vunpack.c.l.b16 %v5167
        %v5566 = vunpack.c.l.b16 %v5168
        %v5567 = vunpack.c.l.b16 %v5169
        %v5568 = vunpack.c.l.b16 %v5170
        %v5569 = vunpack.c.l.b16 %v5171
        %v5570 = vunpack.c.l.b16 %v5172
        %v5571 = vunpack.c.l.b16 %v5173
        %v5572 = vunpack.c.l.b16 %v5174
        %v5573 = vunpack.c.l.b16 %v5175
        %v5574 = vunpack.c.l.b16 %v5176
        %v5575 = vunpack.c.l.b16 %v5177
        %v5576 = vunpack.c.l.b16 %v5178
        %v5577 = vunpack.c.l.b16 %v5179
        %v5578 = vunpack.c.l.b16 %v5180
        %v5579 = vunpack.c.l.b16 %v5181
        %v5580 = vunpack.c.l.b16 %v5182
        %v5581 = vunpack.c.l.b16 %v5183
        %v5582 = vunpack.c.l.b16 %v5184
        %v5583 = vunpack.c.l.b16 %v5185
        %v5584 = vunpack.c.l.b16 %v5186
        %v5585 = vunpack.c.l.b16 %v5187
        %v5586 = vunpack.c.l.b16 %v5188
        %v5587 = vunpack.c.l.b16 %v5189
        %v5588 = vunpack.c.l.b16 %v5190
        %v5589 = vunpack.c.l.b16 %v5191
        %v5590 = vunpack.c.l.b16 %v5192
        %v5591 = vunpack.c.l.b16 %v5193
        %v5592 = vunpack.c.l.b16 %v5194
        %v5593 = vunpack.c.l.b16 %v5195
        %v5594 = vunpack.c.l.b16 %v5196
        %v5595 = vunpack.c.l.b16 %v5197
        %v5596 = vunpack.c.l.b16 %v5198
        %v5597 = vunpack.c.l.b16 %v5199
        %v5598 = vunpack.c.l.b16 %v5200
        %v5599 = vunpack.c.l.b16 %v5201
        %v5600 = vunpack.c.l.b16 %v5202
        %v5601 = vunpack.c.l.b16 %v5203
        %v5602 = vunpack.c.l.b16 %v5204
        %v5603 = vunpack.c.l.b16 %v5205
        %v5604 = vunpack.c.l.b16 %v5206
        %v5605 = vunpack.c.l.b16 %v5207
        %v5606 = vunpack.c.l.b16 %v5208
        %v5607 = vunpack.c.l.b16 %v5209
        %v5608 = vunpack.c.l.b16 %v5210
        %v5609 = vunpack.c.l.b16 %v5211
        %v5610 = vunpack.c.l.b16 %v5212
        %v5611 = vunpack.c.l.b16 %v5213
        %v5612 = vunpack.c.l.b16 %v5214
        %v5613 = vunpack.c.l.b16 %v5215
        %v5614 = vunpack.c.l.b16 %v5216
        %v5615 = vunpack.c.l.b16 %v5217
        %v5616 = vunpack.c.l.b16 %v5218
        %v5617 = vunpack.c.l.b16 %v5219
        %v5618 = vunpack.c.l.b16 %v5220
        %v5619 = vpack.c.b16 %v5460, %v5459
        %v5620 = vpack.c.b16 %v5462, %v5461
        %v5621 = vpack.c.b16 %v5464, %v5463
        %v5622 = vpack.c.b16 %v5466, %v5465
        %v5623 = vpack.c.b16 %v5468, %v5467
        %v5624 = vpack.c.b16 %v5470, %v5469
        %v5625 = vpack.c.b16 %v5472, %v5471
        %v5626 = vpack.c.b16 %v5474, %v5473
        %v5627 = vpack.c.b16 %v5476, %v5475
        %v5628 = vpack.c.b16 %v5478, %v5477
        %v5629 = vpack.c.b16 %v5480, %v5479
        %v5630 = vpack.c.b16 %v5482, %v5481
        %v5631 = vpack.c.b16 %v5484, %v5483
        %v5632 = vpack.c.b16 %v5486, %v5485
        %v5633 = vpack.c.b16 %v5488, %v5487
        %v5634 = vpack.c.b16 %v5490, %v5489
        %v5635 = vpack.c.b16 %v5492, %v5491
        %v5636 = vpack.c.b16 %v5494, %v5493
        %v5637 = vpack.c.b16 %v5496, %v5495
        %v5638 = vpack.c.b16 %v5498, %v5497
        %v5639 = vpack.c.b16 %v5500, %v5499
        %v5640 = vpack.c.b16 %v5502, %v5501
        %v5641 = vpack.c.b16 %v5504, %v5503
        %v5642 = vpack.c.b16 %v5506, %v5505
        %v5643 = vpack.c.b16 %v5508, %v5507
        %v5644 = vpack.c.b16 %v5510, %v5509
        %v5645 = vpack.c.b16 %v5512, %v5511
        %v5646 = vpack.c.b16 %v5514, %v5513
        %v5647 = vpack.c.b16 %v5516, %v5515
        %v5648 = vpack.c.b16 %v5518, %v5517
        %v5649 = vpack.c.b16 %v5520, %v5519
        %v5650 = vpack.c.b16 %v5522, %v5521
        %v5651 = vpack.c.b16 %v5524, %v5523
        %v5652 = vpack.c.b16 %v5526, %v5525
        %v5653 = vpack.c.b16 %v5528, %v5527
        %v5654 = vpack.c.b16 %v5530, %v5529
        %v5655 = vpack.c.b16 %v5532, %v5531
        %v5656 = vpack.c.b16 %v5534, %v5533
        %v5657 = vpack.c.b16 %v5536, %v5535
        %v5658 = vpack.c.b16 %v5538, %v5537
        %v5659 = vpack.c.b16 %v5540, %v5539
        %v5660 = vpack.c.b16 %v5542, %v5541
        %v5661 = vpack.c.b16 %v5544, %v5543
        %v5662 = vpack.c.b16 %v5546, %v5545
        %v5663 = vpack.c.b16 %v5548, %v5547
        %v5664 = vpack.c.b16 %v5550, %v5549
        %v5665 = vpack.c.b16 %v5552, %v5551
        %v5666 = vpack.c.b16 %v5554, %v5553
        %v5667 = vpack.c.b16 %v5556, %v5555
        %v5668 = vpack.c.b16 %v5558, %v5557
        %v5669 = vpack.c.b16 %v5560, %v5559
        %v5670 = vpack.c.b16 %v5562, %v5561
        %v5671 = vpack.c.b16 %v5564, %v5563
        %v5672 = vpack.c.b16 %v5566, %v5565
        %v5673 = vpack.c.b16 %v5568, %v5567
        %v5674 = vpack.c.b16 %v5570, %v5569
        %v5675 = vpack.c.b16 %v5572, %v5571
        %v5676 = vpack.c.b16 %v5574, %v5573
        %v5677 = vpack.c.b16 %v5576, %v5575
        %v5678 = vpack.c.b16 %v5578, %v5577
        %v5679 = vpack.c.b16 %v5580, %v5579
        %v5680 = vpack.c.b16 %v5582, %v5581
        %v5681 = vpack.c.b16 %v5584, %v5583
        %v5682 = vpack.c.b16 %v5586, %v5585
        %v5683 = vpack.c.b16 %v5588, %v5587
        %v5684 = vpack.c.b16 %v5590, %v5589
        %v5685 = vpack.c.b16 %v5592, %v5591
        %v5686 = vpack.c.b16 %v5594, %v5593
        %v5687 = vpack.c.b16 %v5596, %v5595
        %v5688 = vpack.c.b16 %v5598, %v5597
        %v5689 = vpack.c.b16 %v5600, %v5599
        %v5690 = vpack.c.b16 %v5602, %v5601
        %v5691 = vpack.c.b16 %v5604, %v5603
        %v5692 = vpack.c.b16 %v5606, %v5605
        %v5693 = vpack.c.b16 %v5608, %v5607
        %v5694 = vpack.c.b16 %v5610, %v5609
        %v5695 = vpack.c.b16 %v5612, %v5611
        %v5696 = vpack.c.b16 %v5614, %v5613
        %v5697 = vpack.c.b16 %v5616, %v5615
        %v5698 = vpack.c.b16 %v5618, %v5617
        %5779 = vmatprep.subr.bf16.mxu0 0
        %5780 = vmatpush1.bf16.msra.mxu0 %v5626
        %5781 = vmatprep.subr.bf16.mxu0 0
        %5782 = vmatpush1.bf16.msra.mxu0 %v5625
        %5783 = vmatprep.subr.bf16.mxu0 0
        %5784 = vmatpush1.bf16.msra.mxu0 %v5624
        %5785 = vmatprep.subr.bf16.mxu0 0
        %5786 = vmatpush1.bf16.msra.mxu0 %v5623
        %5787 = vmatprep.subr.bf16.mxu0 0
        %5788 = vmatpush1.bf16.msra.mxu0 %v5622
        %5789 = vmatprep.subr.bf16.mxu0 0
        %5790 = vmatpush1.bf16.msra.mxu0 %v5621
        %5791 = vmatprep.subr.bf16.mxu0 0
        %5792 = vmatpush1.bf16.msra.mxu0 %v5620
        %5793 = vmatprep.subr.bf16.mxu0 0
        %5794 = vmatpush1.bf16.msra.mxu0 %v5619
        %5795 = vmatprep.subr.bf16.mxu0 0
        %5796 = vmatpush2.bf16.msra.mxu0 %v5634
        %5797 = vmatprep.subr.bf16.mxu0 0
        %5798 = vmatpush2.bf16.msra.mxu0 %v5633
        %5799 = vmatprep.subr.bf16.mxu0 0
        %5800 = vmatpush2.bf16.msra.mxu0 %v5632
        %5801 = vmatprep.subr.bf16.mxu0 0
        %5802 = vmatpush2.bf16.msra.mxu0 %v5631
        %5803 = vmatprep.subr.bf16.mxu0 0
        %5804 = vmatpush2.bf16.msra.mxu0 %v5630
        %5805 = vmatprep.subr.bf16.mxu0 0
        %5806 = vmatpush2.bf16.msra.mxu0 %v5629
        %5807 = vmatprep.subr.bf16.mxu0 0
        %5808 = vmatpush2.bf16.msra.mxu0 %v5628
        %5809 = vmatprep.subr.bf16.mxu0 0
        %5810 = vmatpush2.bf16.msra.mxu0 %v5627
        %5811 = vmatprep.mubr.bf16.mxu0 %v5280
        %5812 = vmatmul.mubr.bf16.gmra.mxu0 %v5279
        %v5813 = vpop.f32.mrf.mxu0
        %v5814 = vadd.f32 %v5226, %v5813
        %v5815 = vpop.f32.mrf.mxu0
        %v5816 = vpop.f32.mrf.mxu0
        %v5817 = vpop.f32.mrf.mxu0
        %5818 = vdwg.mxu0
        %5819 = vmatprep.subr.bf16.mxu0 0
        %5820 = vmatpush1.bf16.msra.mxu0 %v5642
        %5821 = vmatprep.subr.bf16.mxu0 0
        %5822 = vmatpush1.bf16.msra.mxu0 %v5641
        %5823 = vmatprep.subr.bf16.mxu0 0
        %5824 = vmatpush1.bf16.msra.mxu0 %v5640
        %5825 = vmatprep.subr.bf16.mxu0 0
        %5826 = vmatpush1.bf16.msra.mxu0 %v5639
        %5827 = vmatprep.subr.bf16.mxu0 0
        %5828 = vmatpush1.bf16.msra.mxu0 %v5638
        %5829 = vmatprep.subr.bf16.mxu0 0
        %5830 = vmatpush1.bf16.msra.mxu0 %v5637
        %5831 = vmatprep.subr.bf16.mxu0 0
        %5832 = vmatpush1.bf16.msra.mxu0 %v5636
        %5833 = vmatprep.subr.bf16.mxu0 0
        %5834 = vmatpush1.bf16.msra.mxu0 %v5635
        %5835 = vmatprep.subr.bf16.mxu0 0
        %5836 = vmatpush2.bf16.msra.mxu0 %v5650
        %5837 = vmatprep.subr.bf16.mxu0 0
        %5838 = vmatpush2.bf16.msra.mxu0 %v5649
        %5839 = vmatprep.subr.bf16.mxu0 0
        %5840 = vmatpush2.bf16.msra.mxu0 %v5648
        %5841 = vmatprep.subr.bf16.mxu0 0
        %5842 = vmatpush2.bf16.msra.mxu0 %v5647
        %5843 = vmatprep.subr.bf16.mxu0 0
        %5844 = vmatpush2.bf16.msra.mxu0 %v5646
        %5845 = vmatprep.subr.bf16.mxu0 0
        %5846 = vmatpush2.bf16.msra.mxu0 %v5645
        %5847 = vmatprep.subr.bf16.mxu0 0
        %5848 = vmatpush2.bf16.msra.mxu0 %v5644
        %5849 = vmatprep.subr.bf16.mxu0 0
        %5850 = vmatpush2.bf16.msra.mxu0 %v5643
        %5851 = vmatprep.mubr.bf16.mxu0 %v5282
        %5852 = vmatmul.mubr.bf16.gmra.mxu0 %v5281
        %v5853 = vpop.f32.mrf.mxu0
        %v5854 = vadd.f32 %v5814, %v5853
        %v5855 = vpop.f32.mrf.mxu0
        %v5856 = vpop.f32.mrf.mxu0
        %v5857 = vpop.f32.mrf.mxu0
        %5858 = vdwg.mxu0
        %5859 = vmatprep.subr.bf16.mxu0 0
        %5860 = vmatpush1.bf16.msra.mxu0 %v5658
        %5861 = vmatprep.subr.bf16.mxu0 0
        %5862 = vmatpush1.bf16.msra.mxu0 %v5657
        %5863 = vmatprep.subr.bf16.mxu0 0
        %5864 = vmatpush1.bf16.msra.mxu0 %v5656
        %5865 = vmatprep.subr.bf16.mxu0 0
        %5866 = vmatpush1.bf16.msra.mxu0 %v5655
        %5867 = vmatprep.subr.bf16.mxu0 0
        %5868 = vmatpush1.bf16.msra.mxu0 %v5654
        %5869 = vmatprep.subr.bf16.mxu0 0
        %5870 = vmatpush1.bf16.msra.mxu0 %v5653
        %5871 = vmatprep.subr.bf16.mxu0 0
        %5872 = vmatpush1.bf16.msra.mxu0 %v5652
        %5873 = vmatprep.subr.bf16.mxu0 0
        %5874 = vmatpush1.bf16.msra.mxu0 %v5651
        %5875 = vmatprep.subr.bf16.mxu0 0
        %5876 = vmatpush2.bf16.msra.mxu0 %v5666
        %5877 = vmatprep.subr.bf16.mxu0 0
        %5878 = vmatpush2.bf16.msra.mxu0 %v5665
        %5879 = vmatprep.subr.bf16.mxu0 0
        %5880 = vmatpush2.bf16.msra.mxu0 %v5664
        %5881 = vmatprep.subr.bf16.mxu0 0
        %5882 = vmatpush2.bf16.msra.mxu0 %v5663
        %5883 = vmatprep.subr.bf16.mxu0 0
        %5884 = vmatpush2.bf16.msra.mxu0 %v5662
        %5885 = vmatprep.subr.bf16.mxu0 0
        %5886 = vmatpush2.bf16.msra.mxu0 %v5661
        %5887 = vmatprep.subr.bf16.mxu0 0
        %5888 = vmatpush2.bf16.msra.mxu0 %v5660
        %5889 = vmatprep.subr.bf16.mxu0 0
        %5890 = vmatpush2.bf16.msra.mxu0 %v5659
        %5891 = vmatprep.mubr.bf16.mxu0 %v5284
        %5892 = vmatmul.mubr.bf16.gmra.mxu0 %v5283
        %v5893 = vpop.f32.mrf.mxu0
        %v5894 = vadd.f32 %v5854, %v5893
        %v5895 = vpop.f32.mrf.mxu0
        %v5896 = vpop.f32.mrf.mxu0
        %v5897 = vpop.f32.mrf.mxu0
        %5898 = vdwg.mxu0
        %5899 = vmatprep.subr.bf16.mxu0 0
        %5900 = vmatpush1.bf16.msra.mxu0 %v5674
        %5901 = vmatprep.subr.bf16.mxu0 0
        %5902 = vmatpush1.bf16.msra.mxu0 %v5673
        %5903 = vmatprep.subr.bf16.mxu0 0
        %5904 = vmatpush1.bf16.msra.mxu0 %v5672
        %5905 = vmatprep.subr.bf16.mxu0 0
        %5906 = vmatpush1.bf16.msra.mxu0 %v5671
        %5907 = vmatprep.subr.bf16.mxu0 0
        %5908 = vmatpush1.bf16.msra.mxu0 %v5670
        %5909 = vmatprep.subr.bf16.mxu0 0
        %5910 = vmatpush1.bf16.msra.mxu0 %v5669
        %5911 = vmatprep.subr.bf16.mxu0 0
        %5912 = vmatpush1.bf16.msra.mxu0 %v5668
        %5913 = vmatprep.subr.bf16.mxu0 0
        %5914 = vmatpush1.bf16.msra.mxu0 %v5667
        %5915 = vmatprep.subr.bf16.mxu0 0
        %5916 = vmatpush2.bf16.msra.mxu0 %v5682
        %5917 = vmatprep.subr.bf16.mxu0 0
        %5918 = vmatpush2.bf16.msra.mxu0 %v5681
        %5919 = vmatprep.subr.bf16.mxu0 0
        %5920 = vmatpush2.bf16.msra.mxu0 %v5680
        %5921 = vmatprep.subr.bf16.mxu0 0
        %5922 = vmatpush2.bf16.msra.mxu0 %v5679
        %5923 = vmatprep.subr.bf16.mxu0 0
        %5924 = vmatpush2.bf16.msra.mxu0 %v5678
        %5925 = vmatprep.subr.bf16.mxu0 0
        %5926 = vmatpush2.bf16.msra.mxu0 %v5677
        %5927 = vmatprep.subr.bf16.mxu0 0
        %5928 = vmatpush2.bf16.msra.mxu0 %v5676
        %5929 = vmatprep.subr.bf16.mxu0 0
        %5930 = vmatpush2.bf16.msra.mxu0 %v5675
        %5931 = vmatprep.mubr.bf16.mxu0 %v5286
        %5932 = vmatmul.mubr.bf16.gmra.mxu0 %v5285
        %v5933 = vpop.f32.mrf.mxu0
        %v5934 = vadd.f32 %v5894, %v5933
        %v5935 = vpop.f32.mrf.mxu0
        %v5936 = vpop.f32.mrf.mxu0
        %v5937 = vpop.f32.mrf.mxu0
        %5938 = vdwg.mxu0
        %5939 = vmatprep.subr.bf16.mxu0 0
        %5940 = vmatpush1.bf16.msra.mxu0 %v5690
        %5941 = vmatprep.subr.bf16.mxu0 0
        %5942 = vmatpush1.bf16.msra.mxu0 %v5689
        %5943 = vmatprep.subr.bf16.mxu0 0
        %5944 = vmatpush1.bf16.msra.mxu0 %v5688
        %5945 = vmatprep.subr.bf16.mxu0 0
        %5946 = vmatpush1.bf16.msra.mxu0 %v5687
        %5947 = vmatprep.subr.bf16.mxu0 0
        %5948 = vmatpush1.bf16.msra.mxu0 %v5686
        %5949 = vmatprep.subr.bf16.mxu0 0
        %5950 = vmatpush1.bf16.msra.mxu0 %v5685
        %5951 = vmatprep.subr.bf16.mxu0 0
        %5952 = vmatpush1.bf16.msra.mxu0 %v5684
        %5953 = vmatprep.subr.bf16.mxu0 0
        %5954 = vmatpush1.bf16.msra.mxu0 %v5683
        %5955 = vmatprep.subr.bf16.mxu0 0
        %5956 = vmatpush2.bf16.msra.mxu0 %v5698
        %5957 = vmatprep.subr.bf16.mxu0 0
        %5958 = vmatpush2.bf16.msra.mxu0 %v5697
        %5959 = vmatprep.subr.bf16.mxu0 0
        %5960 = vmatpush2.bf16.msra.mxu0 %v5696
        %5961 = vmatprep.subr.bf16.mxu0 0
        %5962 = vmatpush2.bf16.msra.mxu0 %v5695
        %5963 = vmatprep.subr.bf16.mxu0 0
        %5964 = vmatpush2.bf16.msra.mxu0 %v5694
        %5965 = vmatprep.subr.bf16.mxu0 0
        %5966 = vmatpush2.bf16.msra.mxu0 %v5693
        %5967 = vmatprep.subr.bf16.mxu0 0
        %5968 = vmatpush2.bf16.msra.mxu0 %v5692
        %5969 = vmatprep.subr.bf16.mxu0 0
        %5970 = vmatpush2.bf16.msra.mxu0 %v5691
        %5971 = vmatprep.mubr.bf16.mxu0 %v5288
        %5972 = vmatmul.mubr.bf16.gmra.mxu0 %v5287
        %v5973 = vpop.f32.mrf.mxu0
        %v5974 = vadd.f32 %v5934, %v5973
        %v5975 = vpop.f32.mrf.mxu0
        %v5976 = vpop.f32.mrf.mxu0
        %v5977 = vpop.f32.mrf.mxu0
        %5978 = vdwg.mxu0
        %vm5979 = vcmask 1041408
        %v5980 = vsel %vm5979, %v5974, -inf
        %5981 = vmax.xlane.f32.xlu0 %v5980
        %v5982 = vpop.xlane.xlu0 %5981
        %v5983 = vsub.f32 %v5974, %v5982
        %v5984 = vmul.f32 %v5983, 1.442695
        %v5985 = vpow.pop %v5984
        %v5986 = vsel %vm5979, %v5985, 0.0
        %5987 = vadd.xlane.f32.xlu0 %v5986
        %v5988 = vpop.xlane.xlu0 %5987
        %v5989 = vrcp.pop %v5988
        %v5990 = vmul.f32 %v5985, %v5989
        %5991 = vst [vmem:[%s363] sm:$0x3] %v5990
        %s5992 = sand.u32 %s159, 1
        %s5993 = scalar_lea.sflag [#allocation4], %s5992
        %s5994 = sand.u32 %s159, 1
        %s5995 = smul.addr %s5994, 2
        %s5996 = scalar_lea.vmem [#allocation11], %s5995
        // Predicated region
        $region61: #{tpu_custom_call.1} parent=39 // pred_check
          %p5997 = pneg %p169
        $region62: #{tpu_custom_call.1} parent=39 // pred_check_branch
          %5999 = sbr.rel (%p5997) target = $region64
        $region63: #{tpu_custom_call.1} parent=39 // pred_region
          %s6001 = ssub.s32 32, 32
          %6002 = vsyncadd %s5993, %s6001
          %s6003 = smul.addr %s26, 32
          %s6004 = scalar_lea.hbm %s5, %s6003
          %s6006 = sshll.u32 %s5996, 4
          %s6007 = int_to_ptr.vmem [resolvable:$true] %s6006
          %6009 = dma.vmem_to_hbm [thread:$0]  %s6007, 32, %s6004, %s5993
        $region64: #{tpu_custom_call.1} parent=39 // pred_fallthru
          _
      $region40: #{tpu_custom_call.1} parent=5 // pred_fallthru
        _
      %p6010 = scmp.le.s32.totalorder 2, %s21
      // Predicated region
      $region65: #{tpu_custom_call.1} parent=5 // pred_check
        %p6011 = pneg %p6010
      $region66: #{tpu_custom_call.1} parent=5 // pred_check_branch
        %6013 = sbr.rel (%p6011) target = $region68
      $region67: #{tpu_custom_call.1} parent=5 // pred_region
        %s6014 = ssub.s32 %s21, 2
        // Predicated region
        $region69: #{tpu_custom_call.1} parent=67 // pred_check
          %p6015 = pneg %p175
        $region70: #{tpu_custom_call.1} parent=67 // pred_check_branch
          %6017 = sbr.rel (%p6015) target = $region72
        $region71: #{tpu_custom_call.1} parent=67 // pred_region
          %s6018 = sand.u32 %s160, 1
          %s6019 = scalar_lea.sflag [#allocation4], %s6018
          %s6020 = sand.u32 %s160, 1
          %s6021 = smul.addr %s6020, 2
          %s6022 = scalar_lea.vmem [#allocation11], %s6021
          %6023 = dma.done %s6019, 32
        $region72: #{tpu_custom_call.1} parent=67 // pred_fallthru
          _
      $region68: #{tpu_custom_call.1} parent=5 // pred_fallthru
        _
    $region6: #{tpu_custom_call.1} parent=1 // loop_footer
      %s25 = sadd.s32 1, %s21
    $region7: #{tpu_custom_call.1} parent=1 // loop_footer_branch
      %20 = sbr.rel target = $region3
    $region8: #{tpu_custom_call.1} parent=1 // loop_exit
      _
    %6024 = vsyncpa [#allocation3], 1
    %s6025 = scalar_lea.sflag [#allocation3], 1
    %6026 = vsyncpa %s6025, 1
    %6027 = vsyncpa [#allocation6], 1
    %s6028 = scalar_lea.sflag [#allocation6], 1
    %6029 = vsyncpa %s6028, 1
    %6030 = vsyncpa [#allocation9], 1
    %s6031 = scalar_lea.sflag [#allocation9], 1
    %6032 = vsyncpa %s6031, 1
    %6033 = vsyncpa [#allocation4], 1
    %s6034 = scalar_lea.sflag [#allocation4], 1
    %6035 = vsyncpa %s6034, 1

</llo_original>
